<compile_context>
chip_gen: v7x
topology: tpu7x:2x2x1
jax: 0.10.0
libtpu: 0.0.40
codegen_flags: <defaults>
</compile_context>

<pallas_src>
import functools

import jax
import jax.numpy as jnp
from jax import lax
from jax.experimental import pallas as pl
from jax.experimental.pallas import tpu as pltpu

LANES = 128          # TPU lane width; all matmul N dims are zero-padded to this.
C2_IN = 6            # LeNet-5 geometry (fixed by the module).
C2_OUT = 16
POOL2_HW = 5         # conv2 pooled spatial size -> 25 positions feed fc1.
K1_PAD = 128         # conv1 contraction dim (1*6*6 = 36) padded for alignment.
K2_PAD = 256         # conv2 contraction dim (6*6*6 = 216) padded for alignment.


def _vmem():
    return pl.BlockSpec(memory_space=pltpu.MemorySpace.VMEM)


def _round_up(n, m):
    return (n + m - 1) // m * m


def _pad_cols(a, n):
    return jnp.pad(a, ((0, 0), (0, n - a.shape[-1])))


# ---------------- Pallas kernels ----------------

def conv_pool_kernel(p_ref, w_ref, b_ref, o_ref):
    """Fused conv + bias + ReLU + 2x2 max-pool (single N=512 dot).

    p_ref: (M, K)    6x6 stride-2 patches, one row per *pooled* output pixel.
    w_ref: (K, 512)  5x5 conv weights scattered into the 6x6 window, one
                     128-lane slab per pool offset (di,dj) in {0,1}^2,
                     concatenated along N; out-channels zero-padded to 128.
    b_ref: (1, 128)  bias (f32, zero padded).
    o_ref: (M, 128)  pooled activations (bf16); lanes >= real out-ch are 0.
    """
    s = jnp.dot(p_ref[...], w_ref[...], preferred_element_type=jnp.float32)
    # Lane-aligned 4-way max over the pool offsets (pure VPU, no XLU).
    m = jnp.maximum(jnp.maximum(s[:, 0:128], s[:, 128:256]),
                    jnp.maximum(s[:, 256:384], s[:, 384:512]))
    # relu(max_q(conv_q) + b) == maxpool(relu(conv + b)): the bias is per
    # output channel (constant across pool offsets) and ReLU is monotone.
    o_ref[...] = jnp.maximum(m + b_ref[...], 0.0).astype(o_ref.dtype)


def conv2_fc_kernel(p_ref, w2_ref, b2_ref, bf_ref, w23_ref, wf1_hbm,
                    o_ref, wf1_vmem, dma_sem):
    """conv2+bias+ReLU+pool fused with fc1 -> ReLU -> fc2 -> ReLU -> fc3.

    p_ref:   (M2, 256)      conv2 patches, rows ordered (position r, batch b),
                            zero padded in K (216->256) and M (to mult. of 8).
    w2_ref:  (256, 512)     conv2 weights (4 pool offsets concatenated along N).
    b2_ref:  (1, 128)       conv2 bias.
    bf_ref:  (3, 128)       fc1 / fc2 / fc3 biases (coalesced).
    w23_ref: (2, 128, 128)  fc2 / fc3 weights (transposed, padded, coalesced).
    wf1_hbm: (25, 128, 128) fc1 weight, one (chan, hidden) panel per pooled
                            spatial position; stays in HBM (pl.ANY).
    o_ref:   (B, 128)       logits (f32; lanes >= num_classes are exactly 0).
    """
    # Kick off the fc1 weight DMA immediately so it overlaps conv2 compute.
    wf1_copy = pltpu.make_async_copy(wf1_hbm, wf1_vmem, dma_sem)
    wf1_copy.start()

    # conv2 + bias + ReLU + 2x2 max-pool (pool offsets are the 4 N slabs).
    s = jnp.dot(p_ref[...], w2_ref[...], preferred_element_type=jnp.float32)
    a = jnp.maximum(jnp.maximum(s[:, 0:128], s[:, 128:256]),
                    jnp.maximum(s[:, 256:384], s[:, 384:512]))
    a = jnp.maximum(a + b2_ref[...], 0.0)                    # (M2, 128) f32

    wf1_copy.wait()

    # fc1 as an accumulation over the 25 pooled positions: rows r*B:(r+1)*B of
    # `a` hold position r for all batch elements, so no reshape is needed and
    # the pooled activations never leave VMEM.
    b = o_ref.shape[0]
    n_pos = wf1_vmem.shape[0]
    h = jnp.zeros((b, LANES), jnp.float32)
    for r in range(n_pos):                                   # unrolled, 25 dots
        h += jnp.dot(a[r * b:(r + 1) * b, :].astype(jnp.bfloat16), wf1_vmem[r],
                     preferred_element_type=jnp.float32)
    h = jnp.maximum(h + bf_ref[0:1, :], 0.0)
    h = jnp.dot(h.astype(jnp.bfloat16), w23_ref[0], preferred_element_type=jnp.float32)
    h = jnp.maximum(h + bf_ref[1:2, :], 0.0)
    h = jnp.dot(h.astype(jnp.bfloat16), w23_ref[1], preferred_element_type=jnp.float32)
    o_ref[...] = h + bf_ref[2:3, :]


# ---------------- pallas_call wrappers ----------------

def conv1_pool(patches, wcat, bias):
    m = patches.shape[0]
    return pl.pallas_call(
        conv_pool_kernel,
        out_shape=jax.ShapeDtypeStruct((m, LANES), jnp.bfloat16),
        in_specs=[_vmem(), _vmem(), _vmem()],
        out_specs=_vmem(),
    )(patches, wcat, bias)


def conv2_fc(p2, w2cat, b2, bf, w23, wf1, batch):
    return pl.pallas_call(
        conv2_fc_kernel,
        out_shape=jax.ShapeDtypeStruct((batch, LANES), jnp.float32),
        in_specs=[_vmem(), _vmem(), _vmem(), _vmem(), _vmem(),
                  pl.BlockSpec(memory_space=pl.ANY)],
        out_specs=_vmem(),
        scratch_shapes=[pltpu.VMEM(wf1.shape, wf1.dtype),
                        pltpu.SemaphoreType.DMA],
    )(p2, w2cat, b2, bf, w23, wf1)


# ---------------- one-time parameter re-layout (free at run time) ----------------

def _prep_conv_stage(w, b, k_pad):
    """torch conv weight (O, C, 5, 5) -> (k_pad, 4*128) bf16 fused conv+pool weight."""
    o_ch, c_ch, kh, kw = w.shape
    assert (kh, kw) == (5, 5) and c_ch * 36 <= k_pad and o_ch <= LANES
    mats = []
    for di in (0, 1):
        for dj in (0, 1):
            # Scatter the 5x5 kernel into a 6x6 window at pool offset (di, dj).
            wp = jnp.pad(w, ((0, 0), (0, 0), (di, 1 - di), (dj, 1 - dj)))  # (O,C,6,6)
            wp = wp.transpose(1, 2, 3, 0).reshape(c_ch * 36, o_ch)         # rows: (c,a,b)
            wp = jnp.pad(wp, ((0, k_pad - c_ch * 36), (0, LANES - o_ch)))
            mats.append(wp)
    wcat = jnp.concatenate(mats, axis=1).astype(jnp.bfloat16)              # (k_pad, 512)
    b128 = _pad_cols(b.reshape(1, o_ch), LANES).astype(jnp.float32)
    return wcat, b128


def prepare_params(params, num_classes):
    """Re-layout torch-layout params into TPU/Pallas-friendly padded form."""
    assert num_classes <= LANES
    w1cat, b1 = _prep_conv_stage(params["w1"], params["b1"], K1_PAD)
    w2cat, b2 = _prep_conv_stage(params["w2"], params["b2"], K2_PAD)

    h1, in1 = params["wf1"].shape                    # (120, 400)
    h2 = params["wf2"].shape[0]                      # 84
    n_pos = POOL2_HW * POOL2_HW                      # 25
    assert in1 == C2_OUT * n_pos and h1 <= LANES and h2 <= LANES

    # fc1 consumes the pooled conv2 activations position-by-position (one
    # (B,128) row block per spatial position r = ii*5+jj, channels in lanes
    # [0:16), rest exactly zero); permute torch's (c, h, w) flatten order into
    # one (chan, hidden) panel per position.
    wf1 = jnp.zeros((n_pos, LANES, LANES), jnp.float32)
    wf1 = wf1.at[:, :C2_OUT, :h1].set(
        params["wf1"].reshape(h1, C2_OUT, POOL2_HW, POOL2_HW)
        .transpose(2, 3, 1, 0).reshape(n_pos, C2_OUT, h1))
    wf1 = wf1.astype(jnp.bfloat16)                                          # (25,128,128)

    w2fc = jnp.zeros((LANES, LANES), jnp.float32).at[:h1, :h2].set(params["wf2"].T)
    w3fc = jnp.zeros((LANES, LANES), jnp.float32).at[:h2, :num_classes].set(params["wf3"].T)
    w23 = jnp.stack([w2fc, w3fc]).astype(jnp.bfloat16)                      # (2,128,128)

    bf = jnp.stack([_pad_cols(params["bf1"].reshape(1, -1), LANES)[0],
                    _pad_cols(params["bf2"].reshape(1, -1), LANES)[0],
                    _pad_cols(params["bf3"].reshape(1, -1), LANES)[0]]
                   ).astype(jnp.float32)                                    # (3,128)

    return {"w1cat": w1cat, "b1": b1, "w2cat": w2cat, "b2": b2,
            "wf1": wf1, "w23": w23, "bf": bf}


# ---------------- forward pass ----------------

def lenet5_forward(x, fp, num_classes):
    """x: (B, C, 28, 28) NCHW float32 (PyTorch convention)."""
    B = x.shape[0]
    assert x.shape[2:] == (28, 28), "LeNet-5 geometry requires 28x28 input"
    x = jnp.transpose(x, (0, 2, 3, 1)).astype(jnp.bfloat16)            # NHWC, bf16

    # conv1 stage: 6x6 stride-2 patches over the pad-2 image (one row per
    # pooled pixel), contraction dim zero-padded to K1_PAD for aligned loads.
    p1 = lax.conv_general_dilated_patches(
        x, (6, 6), (2, 2), ((2, 2), (2, 2)),
        dimension_numbers=("NHWC", "HWIO", "NHWC"))                     # (B,14,14,C*36)
    p1 = _pad_cols(p1.reshape(B * 14 * 14, p1.shape[-1]), K1_PAD)
    a1 = conv1_pool(p1, fp["w1cat"], fp["b1"])                          # (B*196,128) bf16
    a1 = a1.reshape(B, 14, 14, LANES)[..., :C2_IN]                      # (B,14,14,6)

    # conv2 patches: rows reordered to (position r, batch b) so the fused
    # kernel feeds fc1 position-by-position with no reshape; K padded 216->256
    # and M padded to a multiple of 8 (padded rows are zeros, never consumed).
    p2 = lax.conv_general_dilated_patches(
        a1, (6, 6), (2, 2), "VALID",
        dimension_numbers=("NHWC", "HWIO", "NHWC"))                     # (B,5,5,216)
    n_pos = POOL2_HW * POOL2_HW
    p2 = jnp.transpose(p2, (1, 2, 0, 3)).reshape(n_pos * B, p2.shape[-1])
    m2 = _round_up(n_pos * B, 8)
    p2 = jnp.pad(p2, ((0, m2 - n_pos * B), (0, K2_PAD - p2.shape[-1])))

    logits = conv2_fc(p2, fp["w2cat"], fp["b2"], fp["bf"], fp["w23"],
                      fp["wf1"], batch=B)                               # (B,128) f32
    return logits[:, :num_classes]


# ---------------- plain-JAX reference (matches the PyTorch module) ----------------

def lenet5_reference(x, params):
    dn = ("NCHW", "OIHW", "NCHW")
    y = lax.conv_general_dilated(x, params["w1"], (1, 1), ((2, 2), (2, 2)),
                                 dimension_numbers=dn)
    y = jax.nn.relu(y + params["b1"][None, :, None, None])
    y = lax.reduce_window(y, -jnp.inf, lax.max, (1, 1, 2, 2), (1, 1, 2, 2), "VALID")
    y = lax.conv_general_dilated(y, params["w2"], (1, 1), "VALID", dimension_numbers=dn)
    y = jax.nn.relu(y + params["b2"][None, :, None, None])
    y = lax.reduce_window(y, -jnp.inf, lax.max, (1, 1, 2, 2), (1, 1, 2, 2), "VALID")
    y = y.reshape(y.shape[0], -1)                                       # torch (c,h,w) flatten
    y = jax.nn.relu(y @ params["wf1"].T + params["bf1"])
    y = jax.nn.relu(y @ params["wf2"].T + params["bf2"])
    return y @ params["wf3"].T + params["bf3"]


def init_params(key, num_classes=10, in_channels=1):
    ks = jax.random.split(key, 10)

    def rnd(k, shape, scale=0.05):
        return (scale * jax.random.normal(k, shape)).astype(jnp.float32)

    return {
        "w1": rnd(ks[0], (6, in_channels, 5, 5)),
        "b1": rnd(ks[1], (6,)),
        "w2": rnd(ks[2], (16, 6, 5, 5)),
        "b2": rnd(ks[3], (16,)),
        "wf1": rnd(ks[4], (120, 16 * 5 * 5)),
        "bf1": rnd(ks[5], (120,)),
        "wf2": rnd(ks[6], (84, 120)),
        "bf2": rnd(ks[7], (84,)),
        "wf3": rnd(ks[8], (num_classes, 84)),
        "bf3": rnd(ks[9], (num_classes,)),
    }


if __name__ == "__main__":
    key = jax.random.PRNGKey(0)
    kx, kp = jax.random.split(key)
    num_classes = 10
    batch = 2
    # LeNet-5 geometry requires 1x28x28 input so the flatten equals 16*5*5.
    x = jax.random.normal(kx, (batch, 1, 28, 28), dtype=jnp.float32)    # NCHW

    params = init_params(kp, num_classes=num_classes)                   # torch-layout params
    fast_params = prepare_params(params, num_classes)                   # one-time TPU re-layout

    fwd = jax.jit(functools.partial(lenet5_forward, num_classes=num_classes))
    out = jax.block_until_ready(fwd(x, fast_params))
    assert out.shape == (batch, num_classes), out.shape

    # Correctness check against a plain-JAX/XLA LeNet-5 with torch semantics
    # (bf16 MXU path -> loose tolerance; fine for inference).
    ref = jax.block_until_ready(jax.jit(lenet5_reference)(x, params))
    max_err = float(jnp.max(jnp.abs(out - ref)))
    assert jnp.allclose(out, ref, atol=5e-2, rtol=5e-2), f"max_abs_err={max_err}"
    print("KERNEL_OK")
</pallas_src>

<mosaic_0001>
module attributes {stable_mosaic.version = 11 : i64} {
  func.func @conv_pool_kernel(%arg0: memref<392x128xbf16, #tpu.memory_space<vmem>>, %arg1: memref<128x512xbf16, #tpu.memory_space<vmem>>, %arg2: memref<1x128xf32, #tpu.memory_space<vmem>>, %arg3: memref<392x128xbf16, #tpu.memory_space<vmem>>) attributes {dimension_semantics = [], scalar_prefetch = 0 : i64, scratch_operands = 0 : i64, tpu.core_type = #tpu.core_type<tc>} {
    %c0 = arith.constant 0 : index
    %c0_0 = arith.constant 0 : index
    %0 = vector.load %arg0[%c0, %c0_0] : memref<392x128xbf16, #tpu.memory_space<vmem>>, vector<392x128xbf16>
    %c0_1 = arith.constant 0 : index
    %c0_2 = arith.constant 0 : index
    %1 = vector.load %arg1[%c0_1, %c0_2] : memref<128x512xbf16, #tpu.memory_space<vmem>>, vector<128x512xbf16>
    %cst = arith.constant dense<0.000000e+00> : vector<392x512xf32>
    %2 = tpu.matmul %0, %1, %cst {dimension_numbers = #tpu.dot_dimension_numbers<[1], [0], [0], [1], [0, 0, 1, 1], [], []>} : vector<392x128xbf16>, vector<128x512xbf16>, vector<392x512xf32> -> vector<392x512xf32>
    %3 = vector.extract_strided_slice %2 {offsets = [0, 0], sizes = [392, 128], strides = [1, 1]} : vector<392x512xf32> to vector<392x128xf32>
    %4 = vector.extract_strided_slice %2 {offsets = [0, 128], sizes = [392, 128], strides = [1, 1]} : vector<392x512xf32> to vector<392x128xf32>
    %5 = arith.maximumf %3, %4 : vector<392x128xf32>
    %6 = vector.extract_strided_slice %2 {offsets = [0, 256], sizes = [392, 128], strides = [1, 1]} : vector<392x512xf32> to vector<392x128xf32>
    %7 = vector.extract_strided_slice %2 {offsets = [0, 384], sizes = [392, 128], strides = [1, 1]} : vector<392x512xf32> to vector<392x128xf32>
    %8 = arith.maximumf %6, %7 : vector<392x128xf32>
    %9 = arith.maximumf %5, %8 : vector<392x128xf32>
    %c0_3 = arith.constant 0 : index
    %c0_4 = arith.constant 0 : index
    %10 = vector.load %arg2[%c0_3, %c0_4] : memref<1x128xf32, #tpu.memory_space<vmem>>, vector<1x128xf32>
    %11 = vector.broadcast %10 : vector<1x128xf32> to vector<392x128xf32>
    %12 = arith.addf %9, %11 : vector<392x128xf32>
    %cst_5 = arith.constant 0.000000e+00 : f32
    %13 = vector.broadcast %cst_5 : f32 to vector<392x128xf32>
    %14 = arith.maximumf %12, %13 : vector<392x128xf32>
    %15 = arith.truncf %14 : vector<392x128xf32> to vector<392x128xbf16>
    %c0_6 = arith.constant 0 : index
    %c0_7 = arith.constant 0 : index
    %16 = vector.load %arg3[%c0_6, %c0_7] : memref<392x128xbf16, #tpu.memory_space<vmem>>, vector<392x128xbf16>
    tpu.vector_store %arg3[%c0_6, %c0_7], %15 {strides = array<i32>} : memref<392x128xbf16, #tpu.memory_space<vmem>>, vector<392x128xbf16>,
    return
  }
}

module attributes {stable_mosaic.version = 11 : i64} {
  func.func @conv2_fc_kernel(%arg0: memref<56x256xbf16, #tpu.memory_space<vmem>>, %arg1: memref<256x512xbf16, #tpu.memory_space<vmem>>, %arg2: memref<1x128xf32, #tpu.memory_space<vmem>>, %arg3: memref<3x128xf32, #tpu.memory_space<vmem>>, %arg4: memref<2x128x128xbf16, #tpu.memory_space<vmem>>, %arg5: memref<25x128x128xbf16, #tpu.memory_space<any>>, %arg6: memref<2x128xf32, #tpu.memory_space<vmem>>, %arg7: memref<25x128x128xbf16, #tpu.memory_space<vmem>>, %arg8: memref<!tpu.dma_semaphore, #tpu.memory_space<semaphore_mem>>) attributes {dimension_semantics = [], scalar_prefetch = 0 : i64, scratch_operands = 2 : i64, tpu.core_type = #tpu.core_type<tc>} {
    tpu.enqueue_dma source(%arg5 : memref<25x128x128xbf16, #tpu.memory_space<any>>) target(%arg7 : memref<25x128x128xbf16, #tpu.memory_space<vmem>>) target_semaphore(%arg8 : memref<!tpu.dma_semaphore, #tpu.memory_space<semaphore_mem>>)
    %c0 = arith.constant 0 : index
    %c0_0 = arith.constant 0 : index
    %0 = vector.load %arg0[%c0, %c0_0] : memref<56x256xbf16, #tpu.memory_space<vmem>>, vector<56x256xbf16>
    %c0_1 = arith.constant 0 : index
    %c0_2 = arith.constant 0 : index
    %1 = vector.load %arg1[%c0_1, %c0_2] : memref<256x512xbf16, #tpu.memory_space<vmem>>, vector<256x512xbf16>
    %cst = arith.constant dense<0.000000e+00> : vector<56x512xf32>
    %2 = tpu.matmul %0, %1, %cst {dimension_numbers = #tpu.dot_dimension_numbers<[1], [0], [0], [1], [0, 0, 1, 1], [], []>} : vector<56x256xbf16>, vector<256x512xbf16>, vector<56x512xf32> -> vector<56x512xf32>
    %3 = vector.extract_strided_slice %2 {offsets = [0, 0], sizes = [56, 128], strides = [1, 1]} : vector<56x512xf32> to vector<56x128xf32>
    %4 = vector.extract_strided_slice %2 {offsets = [0, 128], sizes = [56, 128], strides = [1, 1]} : vector<56x512xf32> to vector<56x128xf32>
    %5 = arith.maximumf %3, %4 : vector<56x128xf32>
    %6 = vector.extract_strided_slice %2 {offsets = [0, 256], sizes = [56, 128], strides = [1, 1]} : vector<56x512xf32> to vector<56x128xf32>
    %7 = vector.extract_strided_slice %2 {offsets = [0, 384], sizes = [56, 128], strides = [1, 1]} : vector<56x512xf32> to vector<56x128xf32>
    %8 = arith.maximumf %6, %7 : vector<56x128xf32>
    %9 = arith.maximumf %5, %8 : vector<56x128xf32>
    %c0_3 = arith.constant 0 : index
    %c0_4 = arith.constant 0 : index
    %10 = vector.load %arg2[%c0_3, %c0_4] : memref<1x128xf32, #tpu.memory_space<vmem>>, vector<1x128xf32>
    %11 = vector.broadcast %10 : vector<1x128xf32> to vector<56x128xf32>
    %12 = arith.addf %9, %11 : vector<56x128xf32>
    %cst_5 = arith.constant 0.000000e+00 : f32
    %13 = vector.broadcast %cst_5 : f32 to vector<56x128xf32>
    %14 = arith.maximumf %12, %13 : vector<56x128xf32>
    tpu.wait_dma2 semaphore(%arg8 : memref<!tpu.dma_semaphore, #tpu.memory_space<semaphore_mem>>) src(%arg5 : memref<25x128x128xbf16, #tpu.memory_space<any>>) dst(%arg7 : memref<25x128x128xbf16, #tpu.memory_space<vmem>>)
    %cst_6 = arith.constant 0.000000e+00 : f32
    %15 = vector.broadcast %cst_6 : f32 to vector<2x128xf32>
    %16 = vector.extract_strided_slice %14 {offsets = [0, 0], sizes = [2, 128], strides = [1, 1]} : vector<56x128xf32> to vector<2x128xf32>
    %17 = arith.truncf %16 : vector<2x128xf32> to vector<2x128xbf16>
    %c0_7 = arith.constant 0 : index
    %c0_8 = arith.constant 0 : index
    %c0_9 = arith.constant 0 : index
    %18 = vector.load %arg7[%c0_7, %c0_8, %c0_9] : memref<25x128x128xbf16, #tpu.memory_space<vmem>>, vector<1x128x128xbf16>
    %19 = vector.shape_cast %18 : vector<1x128x128xbf16> to vector<128x128xbf16>
    %cst_10 = arith.constant dense<0.000000e+00> : vector<2x128xf32>
    %20 = tpu.matmul %17, %19, %cst_10 {dimension_numbers = #tpu.dot_dimension_numbers<[1], [0], [0], [1], [0, 0, 1, 1], [], []>} : vector<2x128xbf16>, vector<128x128xbf16>, vector<2x128xf32> -> vector<2x128xf32>
    %21 = arith.addf %15, %20 : vector<2x128xf32>
    %22 = vector.extract_strided_slice %14 {offsets = [2, 0], sizes = [2, 128], strides = [1, 1]} : vector<56x128xf32> to vector<2x128xf32>
    %23 = arith.truncf %22 : vector<2x128xf32> to vector<2x128xbf16>
    %c1 = arith.constant 1 : index
    %c0_11 = arith.constant 0 : index
    %c0_12 = arith.constant 0 : index
    %24 = vector.load %arg7[%c1, %c0_11, %c0_12] : memref<25x128x128xbf16, #tpu.memory_space<vmem>>, vector<1x128x128xbf16>
    %25 = vector.shape_cast %24 : vector<1x128x128xbf16> to vector<128x128xbf16>
    %cst_13 = arith.constant dense<0.000000e+00> : vector<2x128xf32>
    %26 = tpu.matmul %23, %25, %cst_13 {dimension_numbers = #tpu.dot_dimension_numbers<[1], [0], [0], [1], [0, 0, 1, 1], [], []>} : vector<2x128xbf16>, vector<128x128xbf16>, vector<2x128xf32> -> vector<2x128xf32>
    %27 = arith.addf %21, %26 : vector<2x128xf32>
    %28 = vector.extract_strided_slice %14 {offsets = [4, 0], sizes = [2, 128], strides = [1, 1]} : vector<56x128xf32> to vector<2x128xf32>
    %29 = arith.truncf %28 : vector<2x128xf32> to vector<2x128xbf16>
    %c2 = arith.constant 2 : index
    %c0_14 = arith.constant 0 : index
    %c0_15 = arith.constant 0 : index
    %30 = vector.load %arg7[%c2, %c0_14, %c0_15] : memref<25x128x128xbf16, #tpu.memory_space<vmem>>, vector<1x128x128xbf16>
    %31 = vector.shape_cast %30 : vector<1x128x128xbf16> to vector<128x128xbf16>
    %cst_16 = arith.constant dense<0.000000e+00> : vector<2x128xf32>
    %32 = tpu.matmul %29, %31, %cst_16 {dimension_numbers = #tpu.dot_dimension_numbers<[1], [0], [0], [1], [0, 0, 1, 1], [], []>} : vector<2x128xbf16>, vector<128x128xbf16>, vector<2x128xf32> -> vector<2x128xf32>
    %33 = arith.addf %27, %32 : vector<2x128xf32>
    %34 = vector.extract_strided_slice %14 {offsets = [6, 0], sizes = [2, 128], strides = [1, 1]} : vector<56x128xf32> to vector<2x128xf32>
    %35 = arith.truncf %34 : vector<2x128xf32> to vector<2x128xbf16>
    %c3 = arith.constant 3 : index
    %c0_17 = arith.constant 0 : index
    %c0_18 = arith.constant 0 : index
    %36 = vector.load %arg7[%c3, %c0_17, %c0_18] : memref<25x128x128xbf16, #tpu.memory_space<vmem>>, vector<1x128x128xbf16>
    %37 = vector.shape_cast %36 : vector<1x128x128xbf16> to vector<128x128xbf16>
    %cst_19 = arith.constant dense<0.000000e+00> : vector<2x128xf32>
    %38 = tpu.matmul %35, %37, %cst_19 {dimension_numbers = #tpu.dot_dimension_numbers<[1], [0], [0], [1], [0, 0, 1, 1], [], []>} : vector<2x128xbf16>, vector<128x128xbf16>, vector<2x128xf32> -> vector<2x128xf32>
    %39 = arith.addf %33, %38 : vector<2x128xf32>
    %40 = vector.extract_strided_slice %14 {offsets = [8, 0], sizes = [2, 128], strides = [1, 1]} : vector<56x128xf32> to vector<2x128xf32>
    %41 = arith.truncf %40 : vector<2x128xf32> to vector<2x128xbf16>
    %c4 = arith.constant 4 : index
    %c0_20 = arith.constant 0 : index
    %c0_21 = arith.constant 0 : index
    %42 = vector.load %arg7[%c4, %c0_20, %c0_21] : memref<25x128x128xbf16, #tpu.memory_space<vmem>>, vector<1x128x128xbf16>
    %43 = vector.shape_cast %42 : vector<1x128x128xbf16> to vector<128x128xbf16>
    %cst_22 = arith.constant dense<0.000000e+00> : vector<2x128xf32>
    %44 = tpu.matmul %41, %43, %cst_22 {dimension_numbers = #tpu.dot_dimension_numbers<[1], [0], [0], [1], [0, 0, 1, 1], [], []>} : vector<2x128xbf16>, vector<128x128xbf16>, vector<2x128xf32> -> vector<2x128xf32>
    %45 = arith.addf %39, %44 : vector<2x128xf32>
    %46 = vector.extract_strided_slice %14 {offsets = [10, 0], sizes = [2, 128], strides = [1, 1]} : vector<56x128xf32> to vector<2x128xf32>
    %47 = arith.truncf %46 : vector<2x128xf32> to vector<2x128xbf16>
    %c5 = arith.constant 5 : index
    %c0_23 = arith.constant 0 : index
    %c0_24 = arith.constant 0 : index
    %48 = vector.load %arg7[%c5, %c0_23, %c0_24] : memref<25x128x128xbf16, #tpu.memory_space<vmem>>, vector<1x128x128xbf16>
    %49 = vector.shape_cast %48 : vector<1x128x128xbf16> to vector<128x128xbf16>
    %cst_25 = arith.constant dense<0.000000e+00> : vector<2x128xf32>
    %50 = tpu.matmul %47, %49, %cst_25 {dimension_numbers = #tpu.dot_dimension_numbers<[1], [0], [0], [1], [0, 0, 1, 1], [], []>} : vector<2x128xbf16>, vector<128x128xbf16>, vector<2x128xf32> -> vector<2x128xf32>
    %51 = arith.addf %45, %50 : vector<2x128xf32>
    %52 = vector.extract_strided_slice %14 {offsets = [12, 0], sizes = [2, 128], strides = [1, 1]} : vector<56x128xf32> to vector<2x128xf32>
    %53 = arith.truncf %52 : vector<2x128xf32> to vector<2x128xbf16>
    %c6 = arith.constant 6 : index
    %c0_26 = arith.constant 0 : index
    %c0_27 = arith.constant 0 : index
    %54 = vector.load %arg7[%c6, %c0_26, %c0_27] : memref<25x128x128xbf16, #tpu.memory_space<vmem>>, vector<1x128x128xbf16>
    %55 = vector.shape_cast %54 : vector<1x128x128xbf16> to vector<128x128xbf16>
    %cst_28 = arith.constant dense<0.000000e+00> : vector<2x128xf32>
    %56 = tpu.matmul %53, %55, %cst_28 {dimension_numbers = #tpu.dot_dimension_numbers<[1], [0], [0], [1], [0, 0, 1, 1], [], []>} : vector<2x128xbf16>, vector<128x128xbf16>, vector<2x128xf32> -> vector<2x128xf32>
    %57 = arith.addf %51, %56 : vector<2x128xf32>
    %58 = vector.extract_strided_slice %14 {offsets = [14, 0], sizes = [2, 128], strides = [1, 1]} : vector<56x128xf32> to vector<2x128xf32>
    %59 = arith.truncf %58 : vector<2x128xf32> to vector<2x128xbf16>
    %c7 = arith.constant 7 : index
    %c0_29 = arith.constant 0 : index
    %c0_30 = arith.constant 0 : index
    %60 = vector.load %arg7[%c7, %c0_29, %c0_30] : memref<25x128x128xbf16, #tpu.memory_space<vmem>>, vector<1x128x128xbf16>
    %61 = vector.shape_cast %60 : vector<1x128x128xbf16> to vector<128x128xbf16>
    %cst_31 = arith.constant dense<0.000000e+00> : vector<2x128xf32>
    %62 = tpu.matmul %59, %61, %cst_31 {dimension_numbers = #tpu.dot_dimension_numbers<[1], [0], [0], [1], [0, 0, 1, 1], [], []>} : vector<2x128xbf16>, vector<128x128xbf16>, vector<2x128xf32> -> vector<2x128xf32>
    %63 = arith.addf %57, %62 : vector<2x128xf32>
    %64 = vector.extract_strided_slice %14 {offsets = [16, 0], sizes = [2, 128], strides = [1, 1]} : vector<56x128xf32> to vector<2x128xf32>
    %65 = arith.truncf %64 : vector<2x128xf32> to vector<2x128xbf16>
    %c8 = arith.constant 8 : index
    %c0_32 = arith.constant 0 : index
    %c0_33 = arith.constant 0 : index
    %66 = vector.load %arg7[%c8, %c0_32, %c0_33] : memref<25x128x128xbf16, #tpu.memory_space<vmem>>, vector<1x128x128xbf16>
    %67 = vector.shape_cast %66 : vector<1x128x128xbf16> to vector<128x128xbf16>
    %cst_34 = arith.constant dense<0.000000e+00> : vector<2x128xf32>
    %68 = tpu.matmul %65, %67, %cst_34 {dimension_numbers = #tpu.dot_dimension_numbers<[1], [0], [0], [1], [0, 0, 1, 1], [], []>} : vector<2x128xbf16>, vector<128x128xbf16>, vector<2x128xf32> -> vector<2x128xf32>
    %69 = arith.addf %63, %68 : vector<2x128xf32>
    %70 = vector.extract_strided_slice %14 {offsets = [18, 0], sizes = [2, 128], strides = [1, 1]} : vector<56x128xf32> to vector<2x128xf32>
    %71 = arith.truncf %70 : vector<2x128xf32> to vector<2x128xbf16>
    %c9 = arith.constant 9 : index
    %c0_35 = arith.constant 0 : index
    %c0_36 = arith.constant 0 : index
    %72 = vector.load %arg7[%c9, %c0_35, %c0_36] : memref<25x128x128xbf16, #tpu.memory_space<vmem>>, vector<1x128x128xbf16>
    %73 = vector.shape_cast %72 : vector<1x128x128xbf16> to vector<128x128xbf16>
    %cst_37 = arith.constant dense<0.000000e+00> : vector<2x128xf32>
    %74 = tpu.matmul %71, %73, %cst_37 {dimension_numbers = #tpu.dot_dimension_numbers<[1], [0], [0], [1], [0, 0, 1, 1], [], []>} : vector<2x128xbf16>, vector<128x128xbf16>, vector<2x128xf32> -> vector<2x128xf32>
    %75 = arith.addf %69, %74 : vector<2x128xf32>
    %76 = vector.extract_strided_slice %14 {offsets = [20, 0], sizes = [2, 128], strides = [1, 1]} : vector<56x128xf32> to vector<2x128xf32>
    %77 = arith.truncf %76 : vector<2x128xf32> to vector<2x128xbf16>
    %c10 = arith.constant 10 : index
    %c0_38 = arith.constant 0 : index
    %c0_39 = arith.constant 0 : index
    %78 = vector.load %arg7[%c10, %c0_38, %c0_39] : memref<25x128x128xbf16, #tpu.memory_space<vmem>>, vector<1x128x128xbf16>
    %79 = vector.shape_cast %78 : vector<1x128x128xbf16> to vector<128x128xbf16>
    %cst_40 = arith.constant dense<0.000000e+00> : vector<2x128xf32>
    %80 = tpu.matmul %77, %79, %cst_40 {dimension_numbers = #tpu.dot_dimension_numbers<[1], [0], [0], [1], [0, 0, 1, 1], [], []>} : vector<2x128xbf16>, vector<128x128xbf16>, vector<2x128xf32> -> vector<2x128xf32>
    %81 = arith.addf %75, %80 : vector<2x128xf32>
    %82 = vector.extract_strided_slice %14 {offsets = [22, 0], sizes = [2, 128], strides = [1, 1]} : vector<56x128xf32> to vector<2x128xf32>
    %83 = arith.truncf %82 : vector<2x128xf32> to vector<2x128xbf16>
    %c11 = arith.constant 11 : index
    %c0_41 = arith.constant 0 : index
    %c0_42 = arith.constant 0 : index
    %84 = vector.load %arg7[%c11, %c0_41, %c0_42] : memref<25x128x128xbf16, #tpu.memory_space<vmem>>, vector<1x128x128xbf16>
    %85 = vector.shape_cast %84 : vector<1x128x128xbf16> to vector<128x128xbf16>
    %cst_43 = arith.constant dense<0.000000e+00> : vector<2x128xf32>
    %86 = tpu.matmul %83, %85, %cst_43 {dimension_numbers = #tpu.dot_dimension_numbers<[1], [0], [0], [1], [0, 0, 1, 1], [], []>} : vector<2x128xbf16>, vector<128x128xbf16>, vector<2x128xf32> -> vector<2x128xf32>
    %87 = arith.addf %81, %86 : vector<2x128xf32>
    %88 = vector.extract_strided_slice %14 {offsets = [24, 0], sizes = [2, 128], strides = [1, 1]} : vector<56x128xf32> to vector<2x128xf32>
    %89 = arith.truncf %88 : vector<2x128xf32> to vector<2x128xbf16>
    %c12 = arith.constant 12 : index
    %c0_44 = arith.constant 0 : index
    %c0_45 = arith.constant 0 : index
    %90 = vector.load %arg7[%c12, %c0_44, %c0_45] : memref<25x128x128xbf16, #tpu.memory_space<vmem>>, vector<1x128x128xbf16>
    %91 = vector.shape_cast %90 : vector<1x128x128xbf16> to vector<128x128xbf16>
    %cst_46 = arith.constant dense<0.000000e+00> : vector<2x128xf32>
    %92 = tpu.matmul %89, %91, %cst_46 {dimension_numbers = #tpu.dot_dimension_numbers<[1], [0], [0], [1], [0, 0, 1, 1], [], []>} : vector<2x128xbf16>, vector<128x128xbf16>, vector<2x128xf32> -> vector<2x128xf32>
    %93 = arith.addf %87, %92 : vector<2x128xf32>
    %94 = vector.extract_strided_slice %14 {offsets = [26, 0], sizes = [2, 128], strides = [1, 1]} : vector<56x128xf32> to vector<2x128xf32>
    %95 = arith.truncf %94 : vector<2x128xf32> to vector<2x128xbf16>
    %c13 = arith.constant 13 : index
    %c0_47 = arith.constant 0 : index
    %c0_48 = arith.constant 0 : index
    %96 = vector.load %arg7[%c13, %c0_47, %c0_48] : memref<25x128x128xbf16, #tpu.memory_space<vmem>>, vector<1x128x128xbf16>
    %97 = vector.shape_cast %96 : vector<1x128x128xbf16> to vector<128x128xbf16>
    %cst_49 = arith.constant dense<0.000000e+00> : vector<2x128xf32>
    %98 = tpu.matmul %95, %97, %cst_49 {dimension_numbers = #tpu.dot_dimension_numbers<[1], [0], [0], [1], [0, 0, 1, 1], [], []>} : vector<2x128xbf16>, vector<128x128xbf16>, vector<2x128xf32> -> vector<2x128xf32>
    %99 = arith.addf %93, %98 : vector<2x128xf32>
    %100 = vector.extract_strided_slice %14 {offsets = [28, 0], sizes = [2, 128], strides = [1, 1]} : vector<56x128xf32> to vector<2x128xf32>
    %101 = arith.truncf %100 : vector<2x128xf32> to vector<2x128xbf16>
    %c14 = arith.constant 14 : index
    %c0_50 = arith.constant 0 : index
    %c0_51 = arith.constant 0 : index
    %102 = vector.load %arg7[%c14, %c0_50, %c0_51] : memref<25x128x128xbf16, #tpu.memory_space<vmem>>, vector<1x128x128xbf16>
    %103 = vector.shape_cast %102 : vector<1x128x128xbf16> to vector<128x128xbf16>
    %cst_52 = arith.constant dense<0.000000e+00> : vector<2x128xf32>
    %104 = tpu.matmul %101, %103, %cst_52 {dimension_numbers = #tpu.dot_dimension_numbers<[1], [0], [0], [1], [0, 0, 1, 1], [], []>} : vector<2x128xbf16>, vector<128x128xbf16>, vector<2x128xf32> -> vector<2x128xf32>
    %105 = arith.addf %99, %104 : vector<2x128xf32>
    %106 = vector.extract_strided_slice %14 {offsets = [30, 0], sizes = [2, 128], strides = [1, 1]} : vector<56x128xf32> to vector<2x128xf32>
    %107 = arith.truncf %106 : vector<2x128xf32> to vector<2x128xbf16>
    %c15 = arith.constant 15 : index
    %c0_53 = arith.constant 0 : index
    %c0_54 = arith.constant 0 : index
    %108 = vector.load %arg7[%c15, %c0_53, %c0_54] : memref<25x128x128xbf16, #tpu.memory_space<vmem>>, vector<1x128x128xbf16>
    %109 = vector.shape_cast %108 : vector<1x128x128xbf16> to vector<128x128xbf16>
    %cst_55 = arith.constant dense<0.000000e+00> : vector<2x128xf32>
    %110 = tpu.matmul %107, %109, %cst_55 {dimension_numbers = #tpu.dot_dimension_numbers<[1], [0], [0], [1], [0, 0, 1, 1], [], []>} : vector<2x128xbf16>, vector<128x128xbf16>, vector<2x128xf32> -> vector<2x128xf32>
    %111 = arith.addf %105, %110 : vector<2x128xf32>
    %112 = vector.extract_strided_slice %14 {offsets = [32, 0], sizes = [2, 128], strides = [1, 1]} : vector<56x128xf32> to vector<2x128xf32>
    %113 = arith.truncf %112 : vector<2x128xf32> to vector<2x128xbf16>
    %c16 = arith.constant 16 : index
    %c0_56 = arith.constant 0 : index
    %c0_57 = arith.constant 0 : index
    %114 = vector.load %arg7[%c16, %c0_56, %c0_57] : memref<25x128x128xbf16, #tpu.memory_space<vmem>>, vector<1x128x128xbf16>
    %115 = vector.shape_cast %114 : vector<1x128x128xbf16> to vector<128x128xbf16>
    %cst_58 = arith.constant dense<0.000000e+00> : vector<2x128xf32>
    %116 = tpu.matmul %113, %115, %cst_58 {dimension_numbers = #tpu.dot_dimension_numbers<[1], [0], [0], [1], [0, 0, 1, 1], [], []>} : vector<2x128xbf16>, vector<128x128xbf16>, vector<2x128xf32> -> vector<2x128xf32>
    %117 = arith.addf %111, %116 : vector<2x128xf32>
    %118 = vector.extract_strided_slice %14 {offsets = [34, 0], sizes = [2, 128], strides = [1, 1]} : vector<56x128xf32> to vector<2x128xf32>
    %119 = arith.truncf %118 : vector<2x128xf32> to vector<2x128xbf16>
    %c17 = arith.constant 17 : index
    %c0_59 = arith.constant 0 : index
    %c0_60 = arith.constant 0 : index
    %120 = vector.load %arg7[%c17, %c0_59, %c0_60] : memref<25x128x128xbf16, #tpu.memory_space<vmem>>, vector<1x128x128xbf16>
    %121 = vector.shape_cast %120 : vector<1x128x128xbf16> to vector<128x128xbf16>
    %cst_61 = arith.constant dense<0.000000e+00> : vector<2x128xf32>
    %122 = tpu.matmul %119, %121, %cst_61 {dimension_numbers = #tpu.dot_dimension_numbers<[1], [0], [0], [1], [0, 0, 1, 1], [], []>} : vector<2x128xbf16>, vector<128x128xbf16>, vector<2x128xf32> -> vector<2x128xf32>
    %123 = arith.addf %117, %122 : vector<2x128xf32>
    %124 = vector.extract_strided_slice %14 {offsets = [36, 0], sizes = [2, 128], strides = [1, 1]} : vector<56x128xf32> to vector<2x128xf32>
    %125 = arith.truncf %124 : vector<2x128xf32> to vector<2x128xbf16>
    %c18 = arith.constant 18 : index
    %c0_62 = arith.constant 0 : index
    %c0_63 = arith.constant 0 : index
    %126 = vector.load %arg7[%c18, %c0_62, %c0_63] : memref<25x128x128xbf16, #tpu.memory_space<vmem>>, vector<1x128x128xbf16>
    %127 = vector.shape_cast %126 : vector<1x128x128xbf16> to vector<128x128xbf16>
    %cst_64 = arith.constant dense<0.000000e+00> : vector<2x128xf32>
    %128 = tpu.matmul %125, %127, %cst_64 {dimension_numbers = #tpu.dot_dimension_numbers<[1], [0], [0], [1], [0, 0, 1, 1], [], []>} : vector<2x128xbf16>, vector<128x128xbf16>, vector<2x128xf32> -> vector<2x128xf32>
    %129 = arith.addf %123, %128 : vector<2x128xf32>
    %130 = vector.extract_strided_slice %14 {offsets = [38, 0], sizes = [2, 128], strides = [1, 1]} : vector<56x128xf32> to vector<2x128xf32>
    %131 = arith.truncf %130 : vector<2x128xf32> to vector<2x128xbf16>
    %c19 = arith.constant 19 : index
    %c0_65 = arith.constant 0 : index
    %c0_66 = arith.constant 0 : index
    %132 = vector.load %arg7[%c19, %c0_65, %c0_66] : memref<25x128x128xbf16, #tpu.memory_space<vmem>>, vector<1x128x128xbf16>
    %133 = vector.shape_cast %132 : vector<1x128x128xbf16> to vector<128x128xbf16>
    %cst_67 = arith.constant dense<0.000000e+00> : vector<2x128xf32>
    %134 = tpu.matmul %131, %133, %cst_67 {dimension_numbers = #tpu.dot_dimension_numbers<[1], [0], [0], [1], [0, 0, 1, 1], [], []>} : vector<2x128xbf16>, vector<128x128xbf16>, vector<2x128xf32> -> vector<2x128xf32>
    %135 = arith.addf %129, %134 : vector<2x128xf32>
    %136 = vector.extract_strided_slice %14 {offsets = [40, 0], sizes = [2, 128], strides = [1, 1]} : vector<56x128xf32> to vector<2x128xf32>
    %137 = arith.truncf %136 : vector<2x128xf32> to vector<2x128xbf16>
    %c20 = arith.constant 20 : index
    %c0_68 = arith.constant 0 : index
    %c0_69 = arith.constant 0 : index
    %138 = vector.load %arg7[%c20, %c0_68, %c0_69] : memref<25x128x128xbf16, #tpu.memory_space<vmem>>, vector<1x128x128xbf16>
    %139 = vector.shape_cast %138 : vector<1x128x128xbf16> to vector<128x128xbf16>
    %cst_70 = arith.constant dense<0.000000e+00> : vector<2x128xf32>
    %140 = tpu.matmul %137, %139, %cst_70 {dimension_numbers = #tpu.dot_dimension_numbers<[1], [0], [0], [1], [0, 0, 1, 1], [], []>} : vector<2x128xbf16>, vector<128x128xbf16>, vector<2x128xf32> -> vector<2x128xf32>
    %141 = arith.addf %135, %140 : vector<2x128xf32>
    %142 = vector.extract_strided_slice %14 {offsets = [42, 0], sizes = [2, 128], strides = [1, 1]} : vector<56x128xf32> to vector<2x128xf32>
    %143 = arith.truncf %142 : vector<2x128xf32> to vector<2x128xbf16>
    %c21 = arith.constant 21 : index
    %c0_71 = arith.constant 0 : index
    %c0_72 = arith.constant 0 : index
    %144 = vector.load %arg7[%c21, %c0_71, %c0_72] : memref<25x128x128xbf16, #tpu.memory_space<vmem>>, vector<1x128x128xbf16>
    %145 = vector.shape_cast %144 : vector<1x128x128xbf16> to vector<128x128xbf16>
    %cst_73 = arith.constant dense<0.000000e+00> : vector<2x128xf32>
    %146 = tpu.matmul %143, %145, %cst_73 {dimension_numbers = #tpu.dot_dimension_numbers<[1], [0], [0], [1], [0, 0, 1, 1], [], []>} : vector<2x128xbf16>, vector<128x128xbf16>, vector<2x128xf32> -> vector<2x128xf32>
    %147 = arith.addf %141, %146 : vector<2x128xf32>
    %148 = vector.extract_strided_slice %14 {offsets = [44, 0], sizes = [2, 128], strides = [1, 1]} : vector<56x128xf32> to vector<2x128xf32>
    %149 = arith.truncf %148 : vector<2x128xf32> to vector<2x128xbf16>
    %c22 = arith.constant 22 : index
    %c0_74 = arith.constant 0 : index
    %c0_75 = arith.constant 0 : index
    %150 = vector.load %arg7[%c22, %c0_74, %c0_75] : memref<25x128x128xbf16, #tpu.memory_space<vmem>>, vector<1x128x128xbf16>
    %151 = vector.shape_cast %150 : vector<1x128x128xbf16> to vector<128x128xbf16>
    %cst_76 = arith.constant dense<0.000000e+00> : vector<2x128xf32>
    %152 = tpu.matmul %149, %151, %cst_76 {dimension_numbers = #tpu.dot_dimension_numbers<[1], [0], [0], [1], [0, 0, 1, 1], [], []>} : vector<2x128xbf16>, vector<128x128xbf16>, vector<2x128xf32> -> vector<2x128xf32>
    %153 = arith.addf %147, %152 : vector<2x128xf32>
    %154 = vector.extract_strided_slice %14 {offsets = [46, 0], sizes = [2, 128], strides = [1, 1]} : vector<56x128xf32> to vector<2x128xf32>
    %155 = arith.truncf %154 : vector<2x128xf32> to vector<2x128xbf16>
    %c23 = arith.constant 23 : index
    %c0_77 = arith.constant 0 : index
    %c0_78 = arith.constant 0 : index
    %156 = vector.load %arg7[%c23, %c0_77, %c0_78] : memref<25x128x128xbf16, #tpu.memory_space<vmem>>, vector<1x128x128xbf16>
    %157 = vector.shape_cast %156 : vector<1x128x128xbf16> to vector<128x128xbf16>
    %cst_79 = arith.constant dense<0.000000e+00> : vector<2x128xf32>
    %158 = tpu.matmul %155, %157, %cst_79 {dimension_numbers = #tpu.dot_dimension_numbers<[1], [0], [0], [1], [0, 0, 1, 1], [], []>} : vector<2x128xbf16>, vector<128x128xbf16>, vector<2x128xf32> -> vector<2x128xf32>
    %159 = arith.addf %153, %158 : vector<2x128xf32>
    %160 = vector.extract_strided_slice %14 {offsets = [48, 0], sizes = [2, 128], strides = [1, 1]} : vector<56x128xf32> to vector<2x128xf32>
    %161 = arith.truncf %160 : vector<2x128xf32> to vector<2x128xbf16>
    %c24 = arith.constant 24 : index
    %c0_80 = arith.constant 0 : index
    %c0_81 = arith.constant 0 : index
    %162 = vector.load %arg7[%c24, %c0_80, %c0_81] : memref<25x128x128xbf16, #tpu.memory_space<vmem>>, vector<1x128x128xbf16>
    %163 = vector.shape_cast %162 : vector<1x128x128xbf16> to vector<128x128xbf16>
    %cst_82 = arith.constant dense<0.000000e+00> : vector<2x128xf32>
    %164 = tpu.matmul %161, %163, %cst_82 {dimension_numbers = #tpu.dot_dimension_numbers<[1], [0], [0], [1], [0, 0, 1, 1], [], []>} : vector<2x128xbf16>, vector<128x128xbf16>, vector<2x128xf32> -> vector<2x128xf32>
    %165 = arith.addf %159, %164 : vector<2x128xf32>
    %c0_83 = arith.constant 0 : index
    %c0_84 = arith.constant 0 : index
    %166 = vector.load %arg3[%c0_83, %c0_84] : memref<3x128xf32, #tpu.memory_space<vmem>>, vector<1x128xf32>
    %167 = vector.broadcast %166 : vector<1x128xf32> to vector<2x128xf32>
    %168 = arith.addf %165, %167 : vector<2x128xf32>
    %cst_85 = arith.constant 0.000000e+00 : f32
    %169 = vector.broadcast %cst_85 : f32 to vector<2x128xf32>
    %170 = arith.maximumf %168, %169 : vector<2x128xf32>
    %171 = arith.truncf %170 : vector<2x128xf32> to vector<2x128xbf16>
    %c0_86 = arith.constant 0 : index
    %c0_87 = arith.constant 0 : index
    %c0_88 = arith.constant 0 : index
    %172 = vector.load %arg4[%c0_86, %c0_87, %c0_88] : memref<2x128x128xbf16, #tpu.memory_space<vmem>>, vector<1x128x128xbf16>
    %173 = vector.shape_cast %172 : vector<1x128x128xbf16> to vector<128x128xbf16>
    %cst_89 = arith.constant dense<0.000000e+00> : vector<2x128xf32>
    %174 = tpu.matmul %171, %173, %cst_89 {dimension_numbers = #tpu.dot_dimension_numbers<[1], [0], [0], [1], [0, 0, 1, 1], [], []>} : vector<2x128xbf16>, vector<128x128xbf16>, vector<2x128xf32> -> vector<2x128xf32>
    %c1_90 = arith.constant 1 : index
    %c0_91 = arith.constant 0 : index
    %175 = vector.load %arg3[%c1_90, %c0_91] : memref<3x128xf32, #tpu.memory_space<vmem>>, vector<1x128xf32>
    %176 = vector.broadcast %175 : vector<1x128xf32> to vector<2x128xf32>
    %177 = arith.addf %174, %176 : vector<2x128xf32>
    %cst_92 = arith.constant 0.000000e+00 : f32
    %178 = vector.broadcast %cst_92 : f32 to vector<2x128xf32>
    %179 = arith.maximumf %177, %178 : vector<2x128xf32>
    %180 = arith.truncf %179 : vector<2x128xf32> to vector<2x128xbf16>
    %c1_93 = arith.constant 1 : index
    %c0_94 = arith.constant 0 : index
    %c0_95 = arith.constant 0 : index
    %181 = vector.load %arg4[%c1_93, %c0_94, %c0_95] : memref<2x128x128xbf16, #tpu.memory_space<vmem>>, vector<1x128x128xbf16>
    %182 = vector.shape_cast %181 : vector<1x128x128xbf16> to vector<128x128xbf16>
    %cst_96 = arith.constant dense<0.000000e+00> : vector<2x128xf32>
    %183 = tpu.matmul %180, %182, %cst_96 {dimension_numbers = #tpu.dot_dimension_numbers<[1], [0], [0], [1], [0, 0, 1, 1], [], []>} : vector<2x128xbf16>, vector<128x128xbf16>, vector<2x128xf32> -> vector<2x128xf32>
    %c2_97 = arith.constant 2 : index
    %c0_98 = arith.constant 0 : index
    %184 = vector.load %arg3[%c2_97, %c0_98] : memref<3x128xf32, #tpu.memory_space<vmem>>, vector<1x128xf32>
    %185 = vector.broadcast %184 : vector<1x128xf32> to vector<2x128xf32>
    %186 = arith.addf %183, %185 : vector<2x128xf32>
    %c0_99 = arith.constant 0 : index
    %c0_100 = arith.constant 0 : index
    %187 = vector.load %arg6[%c0_99, %c0_100] : memref<2x128xf32, #tpu.memory_space<vmem>>, vector<2x128xf32>
    tpu.vector_store %arg6[%c0_99, %c0_100], %186 {strides = array<i32>} : memref<2x128xf32, #tpu.memory_space<vmem>>, vector<2x128xf32>,
    return
  }
}

</mosaic_0001>

<llo_original>
// kernel: lenet5_forward.2
$region0: #{lenet5_forward.2}
  #allocation0 [shape = 'u32[]', space=smem, size = 0x4, offset = 0x4, fixed_abs, tag = 'smem constant byte address 0x4 - core index']
  #allocation1 [shape = 'u32[144,128]{1,0:T(1,128)}', space=vmem, size = 0x12000, scoped, tag = 'internal scratch']
  %s0 = inlined_call_operand.vmem [shape: bf16[392,128], index: 0, kind: input, shape index: {}]
  %s1 = inlined_call_operand.vmem [shape: bf16[128,512], index: 1, kind: input, shape index: {}]
  %s2 = inlined_call_operand.vmem [shape: f32[1,128], index: 2, kind: input, shape index: {}]
  %s3 = inlined_call_operand.vmem [shape: bf16[392,128], index: 3, kind: output, shape index: {}]
  %s4 = sld [smem:[#allocation0]]
  $region22: #{lenet5_forward.2} parent=0
    _
  %s6 = ssub.s32 1, %s4
  %s7 = scalar_select 0, %s6, %s4
  // Predicated region
  $region2: #{lenet5_forward.2} parent=0 // pred_check
    _
  $region3: #{lenet5_forward.2} parent=0 // pred_check_branch
    %9 = sbr.rel (0) target = $region5
  $region4: #{lenet5_forward.2} parent=0 // pred_region
    _
  $region5: #{lenet5_forward.2} parent=0 // pred_fallthru
    _
  // Predicated region
  $region6: #{lenet5_forward.2} parent=0 // pred_check
    _
  $region7: #{lenet5_forward.2} parent=0 // pred_check_branch
    %11 = sbr.rel (0) target = $region9
  $region8: #{lenet5_forward.2} parent=0 // pred_region
    _
  $region9: #{lenet5_forward.2} parent=0 // pred_fallthru
    _
  // Predicated region
  $region10: #{lenet5_forward.2} parent=0 // pred_check
    _
  $region11: #{lenet5_forward.2} parent=0 // pred_check_branch
    %13 = sbr.rel (0) target = $region13
  $region12: #{lenet5_forward.2} parent=0 // pred_region
    _
  $region13: #{lenet5_forward.2} parent=0 // pred_fallthru
    _
  %v15 = vld [vmem:[%s0] sm:$0xf]
  %v16 = vld [vmem:[%s0 + $0x4] sm:$0xf]
  %v17 = vld [vmem:[%s0 + $0x8] sm:$0xf]
  %v18 = vld [vmem:[%s0 + $0xc] sm:$0xf]
  %v19 = vld [vmem:[%s0 + $0x10] sm:$0xf]
  %v20 = vld [vmem:[%s0 + $0x14] sm:$0xf]
  %v21 = vld [vmem:[%s0 + $0x18] sm:$0xf]
  %v22 = vld [vmem:[%s0 + $0x1c] sm:$0xf]
  %v23 = vld [vmem:[%s0 + $0x20] sm:$0xf]
  %v24 = vld [vmem:[%s0 + $0x24] sm:$0xf]
  %v25 = vld [vmem:[%s0 + $0x28] sm:$0xf]
  %v26 = vld [vmem:[%s0 + $0x2c] sm:$0xf]
  %v27 = vld [vmem:[%s0 + $0x30] sm:$0xf]
  %v28 = vld [vmem:[%s0 + $0x34] sm:$0xf]
  %v29 = vld [vmem:[%s0 + $0x38] sm:$0xf]
  %v30 = vld [vmem:[%s0 + $0x3c] sm:$0xf]
  %v31 = vld [vmem:[%s0 + $0x40] sm:$0xf]
  %v32 = vld [vmem:[%s0 + $0x44] sm:$0xf]
  %v33 = vld [vmem:[%s0 + $0x48] sm:$0xf]
  %v34 = vld [vmem:[%s0 + $0x4c] sm:$0xf]
  %v35 = vld [vmem:[%s0 + $0x50] sm:$0xf]
  %v36 = vld [vmem:[%s0 + $0x54] sm:$0xf]
  %v37 = vld [vmem:[%s0 + $0x58] sm:$0xf]
  %v38 = vld [vmem:[%s0 + $0x5c] sm:$0xf]
  %v39 = vld [vmem:[%s0 + $0x60] sm:$0xf]
  %v40 = vld [vmem:[%s0 + $0x64] sm:$0xf]
  %v41 = vld [vmem:[%s0 + $0x68] sm:$0xf]
  %v42 = vld [vmem:[%s0 + $0x6c] sm:$0xf]
  %v43 = vld [vmem:[%s0 + $0x70] sm:$0xf]
  %v44 = vld [vmem:[%s0 + $0x74] sm:$0xf]
  %v45 = vld [vmem:[%s0 + $0x78] sm:$0xf]
  %v46 = vld [vmem:[%s0 + $0x7c] sm:$0xf]
  %v47 = vld [vmem:[%s0 + $0x80] sm:$0xf]
  %v48 = vld [vmem:[%s0 + $0x84] sm:$0xf]
  %v49 = vld [vmem:[%s0 + $0x88] sm:$0xf]
  %v50 = vld [vmem:[%s0 + $0x8c] sm:$0xf]
  %v51 = vld [vmem:[%s0 + $0x90] sm:$0xf]
  %v52 = vld [vmem:[%s0 + $0x94] sm:$0xf]
  %v53 = vld [vmem:[%s0 + $0x98] sm:$0xf]
  %v54 = vld [vmem:[%s0 + $0x9c] sm:$0xf]
  %v55 = vld [vmem:[%s0 + $0xa0] sm:$0xf]
  %v56 = vld [vmem:[%s0 + $0xa4] sm:$0xf]
  %v57 = vld [vmem:[%s0 + $0xa8] sm:$0xf]
  %v58 = vld [vmem:[%s0 + $0xac] sm:$0xf]
  %v59 = vld [vmem:[%s0 + $0xb0] sm:$0xf]
  %v60 = vld [vmem:[%s0 + $0xb4] sm:$0xf]
  %v61 = vld [vmem:[%s0 + $0xb8] sm:$0xf]
  %v62 = vld [vmem:[%s0 + $0xbc] sm:$0xf]
  %v63 = vld [vmem:[%s0 + $0xc0] sm:$0xf]
  %v64 = vld [vmem:[%s1] sm:$0xff]
  %v65 = vld [vmem:[%s1 + $0x8] sm:$0xff]
  %v66 = vld [vmem:[%s1 + $0x10] sm:$0xff]
  %v67 = vld [vmem:[%s1 + $0x18] sm:$0xff]
  %v68 = vld [vmem:[%s1 + $0x20] sm:$0xff]
  %v69 = vld [vmem:[%s1 + $0x28] sm:$0xff]
  %v70 = vld [vmem:[%s1 + $0x30] sm:$0xff]
  %v71 = vld [vmem:[%s1 + $0x38] sm:$0xff]
  %v72 = vld [vmem:[%s1 + $0x40] sm:$0xff]
  %v73 = vld [vmem:[%s1 + $0x48] sm:$0xff]
  %v74 = vld [vmem:[%s1 + $0x50] sm:$0xff]
  %v75 = vld [vmem:[%s1 + $0x58] sm:$0xff]
  %v76 = vld [vmem:[%s1 + $0x60] sm:$0xff]
  %v77 = vld [vmem:[%s1 + $0x68] sm:$0xff]
  %v78 = vld [vmem:[%s1 + $0x70] sm:$0xff]
  %v79 = vld [vmem:[%s1 + $0x78] sm:$0xff]
  %v80 = vld [vmem:[%s1 + $0x80] sm:$0xff]
  %v81 = vld [vmem:[%s1 + $0x88] sm:$0xff]
  %v82 = vld [vmem:[%s1 + $0x90] sm:$0xff]
  %v83 = vld [vmem:[%s1 + $0x98] sm:$0xff]
  %v84 = vld [vmem:[%s1 + $0xa0] sm:$0xff]
  %v85 = vld [vmem:[%s1 + $0xa8] sm:$0xff]
  %v86 = vld [vmem:[%s1 + $0xb0] sm:$0xff]
  %v87 = vld [vmem:[%s1 + $0xb8] sm:$0xff]
  %v88 = vld [vmem:[%s1 + $0xc0] sm:$0xff]
  %v89 = vld [vmem:[%s1 + $0xc8] sm:$0xff]
  %v90 = vld [vmem:[%s1 + $0xd0] sm:$0xff]
  %v91 = vld [vmem:[%s1 + $0xd8] sm:$0xff]
  %v92 = vld [vmem:[%s1 + $0xe0] sm:$0xff]
  %v93 = vld [vmem:[%s1 + $0xe8] sm:$0xff]
  %v94 = vld [vmem:[%s1 + $0xf0] sm:$0xff]
  %v95 = vld [vmem:[%s1 + $0xf8] sm:$0xff]
  %v145 = vunpack.c.l.b16 %v15
  %v146 = vunpack.c.l.b16 %v16
  %v147 = vunpack.c.l.b16 %v17
  %v148 = vunpack.c.l.b16 %v18
  %v149 = vunpack.c.l.b16 %v19
  %v150 = vunpack.c.l.b16 %v20
  %v151 = vunpack.c.l.b16 %v21
  %v152 = vunpack.c.l.b16 %v22
  %v153 = vunpack.c.l.b16 %v23
  %v154 = vunpack.c.l.b16 %v24
  %v155 = vunpack.c.l.b16 %v25
  %v156 = vunpack.c.l.b16 %v26
  %v157 = vunpack.c.l.b16 %v27
  %v158 = vunpack.c.l.b16 %v28
  %v159 = vunpack.c.l.b16 %v29
  %v160 = vunpack.c.l.b16 %v30
  %v161 = vunpack.c.l.b16 %v31
  %v162 = vunpack.c.l.b16 %v32
  %v163 = vunpack.c.l.b16 %v33
  %v164 = vunpack.c.l.b16 %v34
  %v165 = vunpack.c.l.b16 %v35
  %v166 = vunpack.c.l.b16 %v36
  %v167 = vunpack.c.l.b16 %v37
  %v168 = vunpack.c.l.b16 %v38
  %v169 = vunpack.c.l.b16 %v39
  %v170 = vunpack.c.l.b16 %v40
  %v171 = vunpack.c.l.b16 %v41
  %v172 = vunpack.c.l.b16 %v42
  %v173 = vunpack.c.l.b16 %v43
  %v174 = vunpack.c.l.b16 %v44
  %v175 = vunpack.c.l.b16 %v45
  %v176 = vunpack.c.l.b16 %v46
  %v177 = vunpack.c.l.b16 %v47
  %v178 = vunpack.c.l.b16 %v48
  %v179 = vunpack.c.l.b16 %v49
  %v180 = vunpack.c.l.b16 %v50
  %v181 = vunpack.c.l.b16 %v51
  %v182 = vunpack.c.l.b16 %v52
  %v183 = vunpack.c.l.b16 %v53
  %v184 = vunpack.c.l.b16 %v54
  %v185 = vunpack.c.l.b16 %v55
  %v186 = vunpack.c.l.b16 %v56
  %v187 = vunpack.c.l.b16 %v57
  %v188 = vunpack.c.l.b16 %v58
  %v189 = vunpack.c.l.b16 %v59
  %v190 = vunpack.c.l.b16 %v60
  %v191 = vunpack.c.l.b16 %v61
  %v192 = vunpack.c.l.b16 %v62
  %v193 = vunpack.c.l.b16 %v63
  %v194 = vpack.c.b16 %v146, %v145
  %v195 = vpack.c.b16 %v148, %v147
  %v196 = vpack.c.b16 %v150, %v149
  %v197 = vpack.c.b16 %v152, %v151
  %v198 = vpack.c.b16 %v154, %v153
  %v199 = vpack.c.b16 %v156, %v155
  %v200 = vpack.c.b16 %v158, %v157
  %v201 = vpack.c.b16 %v160, %v159
  %v202 = vpack.c.b16 %v162, %v161
  %v203 = vpack.c.b16 %v164, %v163
  %v204 = vpack.c.b16 %v166, %v165
  %v205 = vpack.c.b16 %v168, %v167
  %v206 = vpack.c.b16 %v170, %v169
  %v207 = vpack.c.b16 %v172, %v171
  %v208 = vpack.c.b16 %v174, %v173
  %v209 = vpack.c.b16 %v176, %v175
  %v210 = vpack.c.b16 %v178, %v177
  %v211 = vpack.c.b16 %v180, %v179
  %v212 = vpack.c.b16 %v182, %v181
  %v213 = vpack.c.b16 %v184, %v183
  %v214 = vpack.c.b16 %v186, %v185
  %v215 = vpack.c.b16 %v188, %v187
  %v216 = vpack.c.b16 %v190, %v189
  %v217 = vpack.c.b16 %v192, %v191
  %v218 = vpack.c.b16 %v193, %v193
  %v276 = vunpack.c.l.b16 %v64
  %v277 = vunpack.c.h.b16 %v64
  %v278 = vunpack.c.l.b16 %v65
  %v279 = vunpack.c.h.b16 %v65
  %v280 = vunpack.c.l.b16 %v66
  %v281 = vunpack.c.h.b16 %v66
  %v282 = vunpack.c.l.b16 %v67
  %v283 = vunpack.c.h.b16 %v67
  %v284 = vunpack.c.l.b16 %v68
  %v285 = vunpack.c.h.b16 %v68
  %v286 = vunpack.c.l.b16 %v69
  %v287 = vunpack.c.h.b16 %v69
  %v288 = vunpack.c.l.b16 %v70
  %v289 = vunpack.c.h.b16 %v70
  %v290 = vunpack.c.l.b16 %v71
  %v291 = vunpack.c.h.b16 %v71
  %v292 = vunpack.c.l.b16 %v72
  %v293 = vunpack.c.h.b16 %v72
  %v294 = vunpack.c.l.b16 %v73
  %v295 = vunpack.c.h.b16 %v73
  %v296 = vunpack.c.l.b16 %v74
  %v297 = vunpack.c.h.b16 %v74
  %v298 = vunpack.c.l.b16 %v75
  %v299 = vunpack.c.h.b16 %v75
  %v300 = vunpack.c.l.b16 %v76
  %v301 = vunpack.c.h.b16 %v76
  %v302 = vunpack.c.l.b16 %v77
  %v303 = vunpack.c.h.b16 %v77
  %v304 = vunpack.c.l.b16 %v78
  %v305 = vunpack.c.h.b16 %v78
  %v306 = vunpack.c.l.b16 %v79
  %v307 = vunpack.c.h.b16 %v79
  %v308 = vunpack.c.l.b16 %v80
  %v309 = vunpack.c.h.b16 %v80
  %v310 = vunpack.c.l.b16 %v81
  %v311 = vunpack.c.h.b16 %v81
  %v312 = vunpack.c.l.b16 %v82
  %v313 = vunpack.c.h.b16 %v82
  %v314 = vunpack.c.l.b16 %v83
  %v315 = vunpack.c.h.b16 %v83
  %v316 = vunpack.c.l.b16 %v84
  %v317 = vunpack.c.h.b16 %v84
  %v318 = vunpack.c.l.b16 %v85
  %v319 = vunpack.c.h.b16 %v85
  %v320 = vunpack.c.l.b16 %v86
  %v321 = vunpack.c.h.b16 %v86
  %v322 = vunpack.c.l.b16 %v87
  %v323 = vunpack.c.h.b16 %v87
  %v324 = vunpack.c.l.b16 %v88
  %v325 = vunpack.c.h.b16 %v88
  %v326 = vunpack.c.l.b16 %v89
  %v327 = vunpack.c.h.b16 %v89
  %v328 = vunpack.c.l.b16 %v90
  %v329 = vunpack.c.h.b16 %v90
  %v330 = vunpack.c.l.b16 %v91
  %v331 = vunpack.c.h.b16 %v91
  %v332 = vunpack.c.l.b16 %v92
  %v333 = vunpack.c.h.b16 %v92
  %v334 = vunpack.c.l.b16 %v93
  %v335 = vunpack.c.h.b16 %v93
  %v336 = vunpack.c.l.b16 %v94
  %v337 = vunpack.c.h.b16 %v94
  %v338 = vunpack.c.l.b16 %v95
  %v339 = vunpack.c.h.b16 %v95
  %v340 = vpack.c.b16 %v280, %v276
  %v341 = vpack.c.b16 %v281, %v277
  %v342 = vpack.c.b16 %v282, %v278
  %v343 = vpack.c.b16 %v283, %v279
  %v344 = vpack.c.b16 %v288, %v284
  %v345 = vpack.c.b16 %v289, %v285
  %v346 = vpack.c.b16 %v290, %v286
  %v347 = vpack.c.b16 %v291, %v287
  %v348 = vpack.c.b16 %v296, %v292
  %v349 = vpack.c.b16 %v297, %v293
  %v350 = vpack.c.b16 %v298, %v294
  %v351 = vpack.c.b16 %v299, %v295
  %v352 = vpack.c.b16 %v304, %v300
  %v353 = vpack.c.b16 %v305, %v301
  %v354 = vpack.c.b16 %v306, %v302
  %v355 = vpack.c.b16 %v307, %v303
  %v356 = vpack.c.b16 %v312, %v308
  %v357 = vpack.c.b16 %v313, %v309
  %v358 = vpack.c.b16 %v314, %v310
  %v359 = vpack.c.b16 %v315, %v311
  %v360 = vpack.c.b16 %v320, %v316
  %v361 = vpack.c.b16 %v321, %v317
  %v362 = vpack.c.b16 %v322, %v318
  %v363 = vpack.c.b16 %v323, %v319
  %v364 = vpack.c.b16 %v328, %v324
  %v365 = vpack.c.b16 %v329, %v325
  %v366 = vpack.c.b16 %v330, %v326
  %v367 = vpack.c.b16 %v331, %v327
  %v368 = vpack.c.b16 %v336, %v332
  %v369 = vpack.c.b16 %v337, %v333
  %v370 = vpack.c.b16 %v338, %v334
  %v371 = vpack.c.b16 %v339, %v335
  %404 = vmatprep.subr.bf16.mxu0 %v341
  %405 = vmatpush1.bf16.msra.mxu0 %v340
  %406 = vmatprep.subr.bf16.mxu0 %v345
  %407 = vmatpush1.bf16.msra.mxu0 %v344
  %408 = vmatprep.subr.bf16.mxu0 %v349
  %409 = vmatpush1.bf16.msra.mxu0 %v348
  %410 = vmatprep.subr.bf16.mxu0 %v353
  %411 = vmatpush1.bf16.msra.mxu0 %v352
  %412 = vmatprep.subr.bf16.mxu0 %v357
  %413 = vmatpush1.bf16.msra.mxu0 %v356
  %414 = vmatprep.subr.bf16.mxu0 %v361
  %415 = vmatpush1.bf16.msra.mxu0 %v360
  %416 = vmatprep.subr.bf16.mxu0 %v365
  %417 = vmatpush1.bf16.msra.mxu0 %v364
  %418 = vmatprep.subr.bf16.mxu0 %v369
  %419 = vmatpush1.bf16.msra.mxu0 %v368
  %420 = vmatprep.subr.bf16.mxu0 0
  %421 = vmatpush1.bf16.msra.mxu0 0
  %422 = vmatprep.subr.bf16.mxu0 0
  %423 = vmatpush1.bf16.msra.mxu0 0
  %424 = vmatprep.subr.bf16.mxu0 0
  %425 = vmatpush1.bf16.msra.mxu0 0
  %426 = vmatprep.subr.bf16.mxu0 0
  %427 = vmatpush1.bf16.msra.mxu0 0
  %428 = vmatprep.subr.bf16.mxu0 0
  %429 = vmatpush1.bf16.msra.mxu0 0
  %430 = vmatprep.subr.bf16.mxu0 0
  %431 = vmatpush1.bf16.msra.mxu0 0
  %432 = vmatprep.subr.bf16.mxu0 0
  %433 = vmatpush1.bf16.msra.mxu0 0
  %434 = vmatprep.subr.bf16.mxu0 0
  %435 = vmatpush1.bf16.msra.mxu0 0
  %436 = vmatprep.mubr.bf16.mxu0 0
  %437 = vmatmul.mubr.bf16.gmra.mrb[0].mxu0 %v194
  %v438 = vpop.f32.mrb[0].mxu0
  %v439 = vadd.f32 0.0, %v438
  %v440 = vpop.f32.mrb[0].mxu0
  %v441 = vadd.f32 0.0, %v440
  %v442 = vpop.f32.mrb[0].mxu0
  %v443 = vadd.f32 0.0, %v442
  %v444 = vpop.f32.mrb[0].mxu0
  %v445 = vadd.f32 0.0, %v444
  %446 = vmatprep.mubr.bf16.mxu0 0
  %447 = vmatmul.mubr.bf16.gmra.mrb[0].mxu0 %v195
  %v448 = vpop.f32.mrb[0].mxu0
  %v449 = vadd.f32 0.0, %v448
  %v450 = vpop.f32.mrb[0].mxu0
  %v451 = vadd.f32 0.0, %v450
  %v452 = vpop.f32.mrb[0].mxu0
  %v453 = vadd.f32 0.0, %v452
  %v454 = vpop.f32.mrb[0].mxu0
  %v455 = vadd.f32 0.0, %v454
  %456 = vmatprep.mubr.bf16.mxu0 0
  %457 = vmatmul.mubr.bf16.gmra.mrb[0].mxu0 %v196
  %v458 = vpop.f32.mrb[0].mxu0
  %v459 = vadd.f32 0.0, %v458
  %v460 = vpop.f32.mrb[0].mxu0
  %v461 = vadd.f32 0.0, %v460
  %v462 = vpop.f32.mrb[0].mxu0
  %v463 = vadd.f32 0.0, %v462
  %v464 = vpop.f32.mrb[0].mxu0
  %v465 = vadd.f32 0.0, %v464
  %466 = vmatprep.mubr.bf16.mxu0 0
  %467 = vmatmul.mubr.bf16.gmra.mrb[0].mxu0 %v197
  %v468 = vpop.f32.mrb[0].mxu0
  %v469 = vadd.f32 0.0, %v468
  %v470 = vpop.f32.mrb[0].mxu0
  %v471 = vadd.f32 0.0, %v470
  %v472 = vpop.f32.mrb[0].mxu0
  %v473 = vadd.f32 0.0, %v472
  %v474 = vpop.f32.mrb[0].mxu0
  %v475 = vadd.f32 0.0, %v474
  %476 = vmatprep.mubr.bf16.mxu0 0
  %477 = vmatmul.mubr.bf16.gmra.mrb[0].mxu0 %v198
  %v478 = vpop.f32.mrb[0].mxu0
  %v479 = vadd.f32 0.0, %v478
  %v480 = vpop.f32.mrb[0].mxu0
  %v481 = vadd.f32 0.0, %v480
  %v482 = vpop.f32.mrb[0].mxu0
  %v483 = vadd.f32 0.0, %v482
  %v484 = vpop.f32.mrb[0].mxu0
  %v485 = vadd.f32 0.0, %v484
  %486 = vmatprep.mubr.bf16.mxu0 0
  %487 = vmatmul.mubr.bf16.gmra.mrb[0].mxu0 %v199
  %v488 = vpop.f32.mrb[0].mxu0
  %v489 = vadd.f32 0.0, %v488
  %v490 = vpop.f32.mrb[0].mxu0
  %v491 = vadd.f32 0.0, %v490
  %v492 = vpop.f32.mrb[0].mxu0
  %v493 = vadd.f32 0.0, %v492
  %v494 = vpop.f32.mrb[0].mxu0
  %v495 = vadd.f32 0.0, %v494
  %496 = vmatprep.mubr.bf16.mxu0 0
  %497 = vmatmul.mubr.bf16.gmra.mrb[0].mxu0 %v200
  %v498 = vpop.f32.mrb[0].mxu0
  %v499 = vadd.f32 0.0, %v498
  %v500 = vpop.f32.mrb[0].mxu0
  %v501 = vadd.f32 0.0, %v500
  %v502 = vpop.f32.mrb[0].mxu0
  %v503 = vadd.f32 0.0, %v502
  %v504 = vpop.f32.mrb[0].mxu0
  %v505 = vadd.f32 0.0, %v504
  %506 = vmatprep.mubr.bf16.mxu0 0
  %507 = vmatmul.mubr.bf16.gmra.mrb[0].mxu0 %v201
  %v508 = vpop.f32.mrb[0].mxu0
  %v509 = vadd.f32 0.0, %v508
  %v510 = vpop.f32.mrb[0].mxu0
  %v511 = vadd.f32 0.0, %v510
  %v512 = vpop.f32.mrb[0].mxu0
  %v513 = vadd.f32 0.0, %v512
  %v514 = vpop.f32.mrb[0].mxu0
  %v515 = vadd.f32 0.0, %v514
  %516 = vmatprep.mubr.bf16.mxu0 0
  %517 = vmatmul.mubr.bf16.gmra.mrb[0].mxu0 %v202
  %v518 = vpop.f32.mrb[0].mxu0
  %v519 = vadd.f32 0.0, %v518
  %v520 = vpop.f32.mrb[0].mxu0
  %v521 = vadd.f32 0.0, %v520
  %v522 = vpop.f32.mrb[0].mxu0
  %v523 = vadd.f32 0.0, %v522
  %v524 = vpop.f32.mrb[0].mxu0
  %v525 = vadd.f32 0.0, %v524
  %526 = vmatprep.mubr.bf16.mxu0 0
  %527 = vmatmul.mubr.bf16.gmra.mrb[0].mxu0 %v203
  %v528 = vpop.f32.mrb[0].mxu0
  %v529 = vadd.f32 0.0, %v528
  %v530 = vpop.f32.mrb[0].mxu0
  %v531 = vadd.f32 0.0, %v530
  %v532 = vpop.f32.mrb[0].mxu0
  %v533 = vadd.f32 0.0, %v532
  %v534 = vpop.f32.mrb[0].mxu0
  %v535 = vadd.f32 0.0, %v534
  %536 = vmatprep.mubr.bf16.mxu0 0
  %537 = vmatmul.mubr.bf16.gmra.mrb[0].mxu0 %v204
  %v538 = vpop.f32.mrb[0].mxu0
  %v539 = vadd.f32 0.0, %v538
  %v540 = vpop.f32.mrb[0].mxu0
  %v541 = vadd.f32 0.0, %v540
  %v542 = vpop.f32.mrb[0].mxu0
  %v543 = vadd.f32 0.0, %v542
  %v544 = vpop.f32.mrb[0].mxu0
  %v545 = vadd.f32 0.0, %v544
  %546 = vmatprep.mubr.bf16.mxu0 0
  %547 = vmatmul.mubr.bf16.gmra.mrb[0].mxu0 %v205
  %v548 = vpop.f32.mrb[0].mxu0
  %v549 = vadd.f32 0.0, %v548
  %v550 = vpop.f32.mrb[0].mxu0
  %v551 = vadd.f32 0.0, %v550
  %v552 = vpop.f32.mrb[0].mxu0
  %v553 = vadd.f32 0.0, %v552
  %v554 = vpop.f32.mrb[0].mxu0
  %v555 = vadd.f32 0.0, %v554
  %556 = vmatprep.mubr.bf16.mxu0 0
  %557 = vmatmul.mubr.bf16.gmra.mrb[0].mxu0 %v206
  %v558 = vpop.f32.mrb[0].mxu0
  %v559 = vadd.f32 0.0, %v558
  %v560 = vpop.f32.mrb[0].mxu0
  %v561 = vadd.f32 0.0, %v560
  %v562 = vpop.f32.mrb[0].mxu0
  %v563 = vadd.f32 0.0, %v562
  %v564 = vpop.f32.mrb[0].mxu0
  %v565 = vadd.f32 0.0, %v564
  %566 = vmatprep.mubr.bf16.mxu0 0
  %567 = vmatmul.mubr.bf16.gmra.mrb[0].mxu0 %v207
  %v568 = vpop.f32.mrb[0].mxu0
  %v569 = vadd.f32 0.0, %v568
  %v570 = vpop.f32.mrb[0].mxu0
  %v571 = vadd.f32 0.0, %v570
  %v572 = vpop.f32.mrb[0].mxu0
  %v573 = vadd.f32 0.0, %v572
  %v574 = vpop.f32.mrb[0].mxu0
  %v575 = vadd.f32 0.0, %v574
  %576 = vmatprep.mubr.bf16.mxu0 0
  %577 = vmatmul.mubr.bf16.gmra.mrb[0].mxu0 %v208
  %v578 = vpop.f32.mrb[0].mxu0
  %v579 = vadd.f32 0.0, %v578
  %v580 = vpop.f32.mrb[0].mxu0
  %v581 = vadd.f32 0.0, %v580
  %v582 = vpop.f32.mrb[0].mxu0
  %v583 = vadd.f32 0.0, %v582
  %v584 = vpop.f32.mrb[0].mxu0
  %v585 = vadd.f32 0.0, %v584
  %586 = vmatprep.mubr.bf16.mxu0 0
  %587 = vmatmul.mubr.bf16.gmra.mrb[0].mxu0 %v209
  %v588 = vpop.f32.mrb[0].mxu0
  %v589 = vadd.f32 0.0, %v588
  %v590 = vpop.f32.mrb[0].mxu0
  %v591 = vadd.f32 0.0, %v590
  %v592 = vpop.f32.mrb[0].mxu0
  %v593 = vadd.f32 0.0, %v592
  %v594 = vpop.f32.mrb[0].mxu0
  %v595 = vadd.f32 0.0, %v594
  %596 = vmatprep.mubr.bf16.mxu0 0
  %597 = vmatmul.mubr.bf16.gmra.mrb[0].mxu0 %v210
  %v598 = vpop.f32.mrb[0].mxu0
  %v599 = vadd.f32 0.0, %v598
  %v600 = vpop.f32.mrb[0].mxu0
  %v601 = vadd.f32 0.0, %v600
  %v602 = vpop.f32.mrb[0].mxu0
  %v603 = vadd.f32 0.0, %v602
  %v604 = vpop.f32.mrb[0].mxu0
  %v605 = vadd.f32 0.0, %v604
  %606 = vmatprep.mubr.bf16.mxu0 0
  %607 = vmatmul.mubr.bf16.gmra.mrb[0].mxu0 %v211
  %v608 = vpop.f32.mrb[0].mxu0
  %v609 = vadd.f32 0.0, %v608
  %v610 = vpop.f32.mrb[0].mxu0
  %v611 = vadd.f32 0.0, %v610
  %v612 = vpop.f32.mrb[0].mxu0
  %v613 = vadd.f32 0.0, %v612
  %v614 = vpop.f32.mrb[0].mxu0
  %v615 = vadd.f32 0.0, %v614
  %616 = vmatprep.mubr.bf16.mxu0 0
  %617 = vmatmul.mubr.bf16.gmra.mrb[0].mxu0 %v212
  %v618 = vpop.f32.mrb[0].mxu0
  %v619 = vadd.f32 0.0, %v618
  %v620 = vpop.f32.mrb[0].mxu0
  %v621 = vadd.f32 0.0, %v620
  %v622 = vpop.f32.mrb[0].mxu0
  %v623 = vadd.f32 0.0, %v622
  %v624 = vpop.f32.mrb[0].mxu0
  %v625 = vadd.f32 0.0, %v624
  %626 = vmatprep.mubr.bf16.mxu0 0
  %627 = vmatmul.mubr.bf16.gmra.mrb[0].mxu0 %v213
  %v628 = vpop.f32.mrb[0].mxu0
  %v629 = vadd.f32 0.0, %v628
  %v630 = vpop.f32.mrb[0].mxu0
  %v631 = vadd.f32 0.0, %v630
  %v632 = vpop.f32.mrb[0].mxu0
  %v633 = vadd.f32 0.0, %v632
  %v634 = vpop.f32.mrb[0].mxu0
  %v635 = vadd.f32 0.0, %v634
  %636 = vmatprep.mubr.bf16.mxu0 0
  %637 = vmatmul.mubr.bf16.gmra.mrb[0].mxu0 %v214
  %v638 = vpop.f32.mrb[0].mxu0
  %v639 = vadd.f32 0.0, %v638
  %v640 = vpop.f32.mrb[0].mxu0
  %v641 = vadd.f32 0.0, %v640
  %v642 = vpop.f32.mrb[0].mxu0
  %v643 = vadd.f32 0.0, %v642
  %v644 = vpop.f32.mrb[0].mxu0
  %v645 = vadd.f32 0.0, %v644
  %646 = vmatprep.mubr.bf16.mxu0 0
  %647 = vmatmul.mubr.bf16.gmra.mrb[0].mxu0 %v215
  %v648 = vpop.f32.mrb[0].mxu0
  %v649 = vadd.f32 0.0, %v648
  %v650 = vpop.f32.mrb[0].mxu0
  %v651 = vadd.f32 0.0, %v650
  %v652 = vpop.f32.mrb[0].mxu0
  %v653 = vadd.f32 0.0, %v652
  %v654 = vpop.f32.mrb[0].mxu0
  %v655 = vadd.f32 0.0, %v654
  %656 = vmatprep.mubr.bf16.mxu0 0
  %657 = vmatmul.mubr.bf16.gmra.mrb[0].mxu0 %v216
  %v658 = vpop.f32.mrb[0].mxu0
  %v659 = vadd.f32 0.0, %v658
  %v660 = vpop.f32.mrb[0].mxu0
  %v661 = vadd.f32 0.0, %v660
  %v662 = vpop.f32.mrb[0].mxu0
  %v663 = vadd.f32 0.0, %v662
  %v664 = vpop.f32.mrb[0].mxu0
  %v665 = vadd.f32 0.0, %v664
  %666 = vmatprep.mubr.bf16.mxu0 0
  %667 = vmatmul.mubr.bf16.gmra.mrb[0].mxu0 %v217
  %v668 = vpop.f32.mrb[0].mxu0
  %v669 = vadd.f32 0.0, %v668
  %v670 = vpop.f32.mrb[0].mxu0
  %v671 = vadd.f32 0.0, %v670
  %v672 = vpop.f32.mrb[0].mxu0
  %v673 = vadd.f32 0.0, %v672
  %v674 = vpop.f32.mrb[0].mxu0
  %v675 = vadd.f32 0.0, %v674
  %676 = vmatprep.mubr.bf16.mxu0 0
  %677 = vmatmul.mubr.bf16.gmra.mrb[0].mxu0 %v218
  %v678 = vpop.f32.mrb[0].mxu0
  %v679 = vadd.f32 0.0, %v678
  %v680 = vpop.f32.mrb[0].mxu0
  %v681 = vadd.f32 0.0, %v680
  %v682 = vpop.f32.mrb[0].mxu0
  %v683 = vpop.f32.mrb[0].mxu0
  %684 = vdwg.mxu0
  %685 = vmatprep.subr.bf16.mxu0 %v343
  %686 = vmatpush1.bf16.msra.mxu0 %v342
  %687 = vmatprep.subr.bf16.mxu0 %v347
  %688 = vmatpush1.bf16.msra.mxu0 %v346
  %689 = vmatprep.subr.bf16.mxu0 %v351
  %690 = vmatpush1.bf16.msra.mxu0 %v350
  %691 = vmatprep.subr.bf16.mxu0 %v355
  %692 = vmatpush1.bf16.msra.mxu0 %v354
  %693 = vmatprep.subr.bf16.mxu0 %v359
  %694 = vmatpush1.bf16.msra.mxu0 %v358
  %695 = vmatprep.subr.bf16.mxu0 %v363
  %696 = vmatpush1.bf16.msra.mxu0 %v362
  %697 = vmatprep.subr.bf16.mxu0 %v367
  %698 = vmatpush1.bf16.msra.mxu0 %v366
  %699 = vmatprep.subr.bf16.mxu0 %v371
  %700 = vmatpush1.bf16.msra.mxu0 %v370
  %701 = vmatprep.subr.bf16.mxu0 0
  %702 = vmatpush1.bf16.msra.mxu0 0
  %703 = vmatprep.subr.bf16.mxu0 0
  %704 = vmatpush1.bf16.msra.mxu0 0
  %705 = vmatprep.subr.bf16.mxu0 0
  %706 = vmatpush1.bf16.msra.mxu0 0
  %707 = vmatprep.subr.bf16.mxu0 0
  %708 = vmatpush1.bf16.msra.mxu0 0
  %709 = vmatprep.subr.bf16.mxu0 0
  %710 = vmatpush1.bf16.msra.mxu0 0
  %711 = vmatprep.subr.bf16.mxu0 0
  %712 = vmatpush1.bf16.msra.mxu0 0
  %713 = vmatprep.subr.bf16.mxu0 0
  %714 = vmatpush1.bf16.msra.mxu0 0
  %715 = vmatprep.subr.bf16.mxu0 0
  %716 = vmatpush1.bf16.msra.mxu0 0
  %717 = vmatprep.mubr.bf16.mxu0 0
  %718 = vmatmul.mubr.bf16.gmra.mrb[0].mxu0 %v194
  %v719 = vpop.f32.mrb[0].mxu0
  %v720 = vadd.f32 0.0, %v719
  %v721 = vpop.f32.mrb[0].mxu0
  %v722 = vadd.f32 0.0, %v721
  %v723 = vpop.f32.mrb[0].mxu0
  %v724 = vadd.f32 0.0, %v723
  %v725 = vpop.f32.mrb[0].mxu0
  %v726 = vadd.f32 0.0, %v725
  %727 = vmatprep.mubr.bf16.mxu0 0
  %728 = vmatmul.mubr.bf16.gmra.mrb[0].mxu0 %v195
  %v729 = vpop.f32.mrb[0].mxu0
  %v730 = vadd.f32 0.0, %v729
  %v731 = vpop.f32.mrb[0].mxu0
  %v732 = vadd.f32 0.0, %v731
  %v733 = vpop.f32.mrb[0].mxu0
  %v734 = vadd.f32 0.0, %v733
  %v735 = vpop.f32.mrb[0].mxu0
  %v736 = vadd.f32 0.0, %v735
  %737 = vmatprep.mubr.bf16.mxu0 0
  %738 = vmatmul.mubr.bf16.gmra.mrb[0].mxu0 %v196
  %v739 = vpop.f32.mrb[0].mxu0
  %v740 = vadd.f32 0.0, %v739
  %v741 = vpop.f32.mrb[0].mxu0
  %v742 = vadd.f32 0.0, %v741
  %v743 = vpop.f32.mrb[0].mxu0
  %v744 = vadd.f32 0.0, %v743
  %v745 = vpop.f32.mrb[0].mxu0
  %v746 = vadd.f32 0.0, %v745
  %747 = vmatprep.mubr.bf16.mxu0 0
  %748 = vmatmul.mubr.bf16.gmra.mrb[0].mxu0 %v197
  %v749 = vpop.f32.mrb[0].mxu0
  %v750 = vadd.f32 0.0, %v749
  %v751 = vpop.f32.mrb[0].mxu0
  %v752 = vadd.f32 0.0, %v751
  %v753 = vpop.f32.mrb[0].mxu0
  %v754 = vadd.f32 0.0, %v753
  %v755 = vpop.f32.mrb[0].mxu0
  %v756 = vadd.f32 0.0, %v755
  %757 = vmatprep.mubr.bf16.mxu0 0
  %758 = vmatmul.mubr.bf16.gmra.mrb[0].mxu0 %v198
  %v759 = vpop.f32.mrb[0].mxu0
  %v760 = vadd.f32 0.0, %v759
  %v761 = vpop.f32.mrb[0].mxu0
  %v762 = vadd.f32 0.0, %v761
  %v763 = vpop.f32.mrb[0].mxu0
  %v764 = vadd.f32 0.0, %v763
  %v765 = vpop.f32.mrb[0].mxu0
  %v766 = vadd.f32 0.0, %v765
  %767 = vmatprep.mubr.bf16.mxu0 0
  %768 = vmatmul.mubr.bf16.gmra.mrb[0].mxu0 %v199
  %v769 = vpop.f32.mrb[0].mxu0
  %v770 = vadd.f32 0.0, %v769
  %v771 = vpop.f32.mrb[0].mxu0
  %v772 = vadd.f32 0.0, %v771
  %v773 = vpop.f32.mrb[0].mxu0
  %v774 = vadd.f32 0.0, %v773
  %v775 = vpop.f32.mrb[0].mxu0
  %v776 = vadd.f32 0.0, %v775
  %777 = vmatprep.mubr.bf16.mxu0 0
  %778 = vmatmul.mubr.bf16.gmra.mrb[0].mxu0 %v200
  %v779 = vpop.f32.mrb[0].mxu0
  %v780 = vadd.f32 0.0, %v779
  %v781 = vpop.f32.mrb[0].mxu0
  %v782 = vadd.f32 0.0, %v781
  %v783 = vpop.f32.mrb[0].mxu0
  %v784 = vadd.f32 0.0, %v783
  %v785 = vpop.f32.mrb[0].mxu0
  %v786 = vadd.f32 0.0, %v785
  %787 = vmatprep.mubr.bf16.mxu0 0
  %788 = vmatmul.mubr.bf16.gmra.mrb[0].mxu0 %v201
  %v789 = vpop.f32.mrb[0].mxu0
  %v790 = vadd.f32 0.0, %v789
  %v791 = vpop.f32.mrb[0].mxu0
  %v792 = vadd.f32 0.0, %v791
  %v793 = vpop.f32.mrb[0].mxu0
  %v794 = vadd.f32 0.0, %v793
  %v795 = vpop.f32.mrb[0].mxu0
  %v796 = vadd.f32 0.0, %v795
  %797 = vmatprep.mubr.bf16.mxu0 0
  %798 = vmatmul.mubr.bf16.gmra.mrb[0].mxu0 %v202
  %v799 = vpop.f32.mrb[0].mxu0
  %v800 = vadd.f32 0.0, %v799
  %v801 = vpop.f32.mrb[0].mxu0
  %v802 = vadd.f32 0.0, %v801
  %v803 = vpop.f32.mrb[0].mxu0
  %v804 = vadd.f32 0.0, %v803
  %v805 = vpop.f32.mrb[0].mxu0
  %v806 = vadd.f32 0.0, %v805
  %807 = vmatprep.mubr.bf16.mxu0 0
  %808 = vmatmul.mubr.bf16.gmra.mrb[0].mxu0 %v203
  %v809 = vpop.f32.mrb[0].mxu0
  %v810 = vadd.f32 0.0, %v809
  %v811 = vpop.f32.mrb[0].mxu0
  %v812 = vadd.f32 0.0, %v811
  %v813 = vpop.f32.mrb[0].mxu0
  %v814 = vadd.f32 0.0, %v813
  %v815 = vpop.f32.mrb[0].mxu0
  %v816 = vadd.f32 0.0, %v815
  %817 = vmatprep.mubr.bf16.mxu0 0
  %818 = vmatmul.mubr.bf16.gmra.mrb[0].mxu0 %v204
  %v819 = vpop.f32.mrb[0].mxu0
  %v820 = vadd.f32 0.0, %v819
  %v821 = vpop.f32.mrb[0].mxu0
  %v822 = vadd.f32 0.0, %v821
  %v823 = vpop.f32.mrb[0].mxu0
  %v824 = vadd.f32 0.0, %v823
  %v825 = vpop.f32.mrb[0].mxu0
  %v826 = vadd.f32 0.0, %v825
  %827 = vmatprep.mubr.bf16.mxu0 0
  %828 = vmatmul.mubr.bf16.gmra.mrb[0].mxu0 %v205
  %v829 = vpop.f32.mrb[0].mxu0
  %v830 = vadd.f32 0.0, %v829
  %v831 = vpop.f32.mrb[0].mxu0
  %v832 = vadd.f32 0.0, %v831
  %v833 = vpop.f32.mrb[0].mxu0
  %v834 = vadd.f32 0.0, %v833
  %v835 = vpop.f32.mrb[0].mxu0
  %v836 = vadd.f32 0.0, %v835
  %837 = vmatprep.mubr.bf16.mxu0 0
  %838 = vmatmul.mubr.bf16.gmra.mrb[0].mxu0 %v206
  %v839 = vpop.f32.mrb[0].mxu0
  %v840 = vadd.f32 0.0, %v839
  %v841 = vpop.f32.mrb[0].mxu0
  %v842 = vadd.f32 0.0, %v841
  %v843 = vpop.f32.mrb[0].mxu0
  %v844 = vadd.f32 0.0, %v843
  %v845 = vpop.f32.mrb[0].mxu0
  %v846 = vadd.f32 0.0, %v845
  %847 = vmatprep.mubr.bf16.mxu0 0
  %848 = vmatmul.mubr.bf16.gmra.mrb[0].mxu0 %v207
  %v849 = vpop.f32.mrb[0].mxu0
  %v850 = vadd.f32 0.0, %v849
  %v851 = vpop.f32.mrb[0].mxu0
  %v852 = vadd.f32 0.0, %v851
  %v853 = vpop.f32.mrb[0].mxu0
  %v854 = vadd.f32 0.0, %v853
  %v855 = vpop.f32.mrb[0].mxu0
  %v856 = vadd.f32 0.0, %v855
  %857 = vmatprep.mubr.bf16.mxu0 0
  %858 = vmatmul.mubr.bf16.gmra.mrb[0].mxu0 %v208
  %v859 = vpop.f32.mrb[0].mxu0
  %v860 = vadd.f32 0.0, %v859
  %v861 = vpop.f32.mrb[0].mxu0
  %v862 = vadd.f32 0.0, %v861
  %v863 = vpop.f32.mrb[0].mxu0
  %v864 = vadd.f32 0.0, %v863
  %v865 = vpop.f32.mrb[0].mxu0
  %v866 = vadd.f32 0.0, %v865
  %867 = vmatprep.mubr.bf16.mxu0 0
  %868 = vmatmul.mubr.bf16.gmra.mrb[0].mxu0 %v209
  %v869 = vpop.f32.mrb[0].mxu0
  %v870 = vadd.f32 0.0, %v869
  %v871 = vpop.f32.mrb[0].mxu0
  %v872 = vadd.f32 0.0, %v871
  %v873 = vpop.f32.mrb[0].mxu0
  %v874 = vadd.f32 0.0, %v873
  %v875 = vpop.f32.mrb[0].mxu0
  %v876 = vadd.f32 0.0, %v875
  %877 = vmatprep.mubr.bf16.mxu0 0
  %878 = vmatmul.mubr.bf16.gmra.mrb[0].mxu0 %v210
  %v879 = vpop.f32.mrb[0].mxu0
  %v880 = vadd.f32 0.0, %v879
  %v881 = vpop.f32.mrb[0].mxu0
  %v882 = vadd.f32 0.0, %v881
  %v883 = vpop.f32.mrb[0].mxu0
  %v884 = vadd.f32 0.0, %v883
  %v885 = vpop.f32.mrb[0].mxu0
  %v886 = vadd.f32 0.0, %v885
  %887 = vmatprep.mubr.bf16.mxu0 0
  %888 = vmatmul.mubr.bf16.gmra.mrb[0].mxu0 %v211
  %v889 = vpop.f32.mrb[0].mxu0
  %v890 = vadd.f32 0.0, %v889
  %v891 = vpop.f32.mrb[0].mxu0
  %v892 = vadd.f32 0.0, %v891
  %v893 = vpop.f32.mrb[0].mxu0
  %v894 = vadd.f32 0.0, %v893
  %v895 = vpop.f32.mrb[0].mxu0
  %v896 = vadd.f32 0.0, %v895
  %897 = vmatprep.mubr.bf16.mxu0 0
  %898 = vmatmul.mubr.bf16.gmra.mrb[0].mxu0 %v212
  %v899 = vpop.f32.mrb[0].mxu0
  %v900 = vadd.f32 0.0, %v899
  %v901 = vpop.f32.mrb[0].mxu0
  %v902 = vadd.f32 0.0, %v901
  %v903 = vpop.f32.mrb[0].mxu0
  %v904 = vadd.f32 0.0, %v903
  %v905 = vpop.f32.mrb[0].mxu0
  %v906 = vadd.f32 0.0, %v905
  %907 = vmatprep.mubr.bf16.mxu0 0
  %908 = vmatmul.mubr.bf16.gmra.mrb[0].mxu0 %v213
  %v909 = vpop.f32.mrb[0].mxu0
  %v910 = vadd.f32 0.0, %v909
  %v911 = vpop.f32.mrb[0].mxu0
  %v912 = vadd.f32 0.0, %v911
  %v913 = vpop.f32.mrb[0].mxu0
  %v914 = vadd.f32 0.0, %v913
  %v915 = vpop.f32.mrb[0].mxu0
  %v916 = vadd.f32 0.0, %v915
  %917 = vmatprep.mubr.bf16.mxu0 0
  %918 = vmatmul.mubr.bf16.gmra.mrb[0].mxu0 %v214
  %v919 = vpop.f32.mrb[0].mxu0
  %v920 = vadd.f32 0.0, %v919
  %v921 = vpop.f32.mrb[0].mxu0
  %v922 = vadd.f32 0.0, %v921
  %v923 = vpop.f32.mrb[0].mxu0
  %v924 = vadd.f32 0.0, %v923
  %v925 = vpop.f32.mrb[0].mxu0
  %v926 = vadd.f32 0.0, %v925
  %927 = vmatprep.mubr.bf16.mxu0 0
  %928 = vmatmul.mubr.bf16.gmra.mrb[0].mxu0 %v215
  %v929 = vpop.f32.mrb[0].mxu0
  %v930 = vadd.f32 0.0, %v929
  %v931 = vpop.f32.mrb[0].mxu0
  %v932 = vadd.f32 0.0, %v931
  %v933 = vpop.f32.mrb[0].mxu0
  %v934 = vadd.f32 0.0, %v933
  %v935 = vpop.f32.mrb[0].mxu0
  %v936 = vadd.f32 0.0, %v935
  %937 = vmatprep.mubr.bf16.mxu0 0
  %938 = vmatmul.mubr.bf16.gmra.mrb[0].mxu0 %v216
  %v939 = vpop.f32.mrb[0].mxu0
  %v940 = vadd.f32 0.0, %v939
  %v941 = vpop.f32.mrb[0].mxu0
  %v942 = vadd.f32 0.0, %v941
  %v943 = vpop.f32.mrb[0].mxu0
  %v944 = vadd.f32 0.0, %v943
  %v945 = vpop.f32.mrb[0].mxu0
  %v946 = vadd.f32 0.0, %v945
  %947 = vmatprep.mubr.bf16.mxu0 0
  %948 = vmatmul.mubr.bf16.gmra.mrb[0].mxu0 %v217
  %v949 = vpop.f32.mrb[0].mxu0
  %v950 = vadd.f32 0.0, %v949
  %v951 = vpop.f32.mrb[0].mxu0
  %v952 = vadd.f32 0.0, %v951
  %v953 = vpop.f32.mrb[0].mxu0
  %v954 = vadd.f32 0.0, %v953
  %v955 = vpop.f32.mrb[0].mxu0
  %v956 = vadd.f32 0.0, %v955
  %957 = vmatprep.mubr.bf16.mxu0 0
  %958 = vmatmul.mubr.bf16.gmra.mrb[0].mxu0 %v218
  %v959 = vpop.f32.mrb[0].mxu0
  %v960 = vadd.f32 0.0, %v959
  %v961 = vpop.f32.mrb[0].mxu0
  %v962 = vadd.f32 0.0, %v961
  %v963 = vpop.f32.mrb[0].mxu0
  %v964 = vpop.f32.mrb[0].mxu0
  %965 = vdwg.mxu0
  %v966 = vmax.f32 %v439, %v441
  %v967 = vmax.f32 %v443, %v445
  %v968 = vmax.f32 %v449, %v451
  %v969 = vmax.f32 %v453, %v455
  %v970 = vmax.f32 %v459, %v461
  %v971 = vmax.f32 %v463, %v465
  %v972 = vmax.f32 %v469, %v471
  %v973 = vmax.f32 %v473, %v475
  %v974 = vmax.f32 %v479, %v481
  %v975 = vmax.f32 %v483, %v485
  %v976 = vmax.f32 %v489, %v491
  %v977 = vmax.f32 %v493, %v495
  %v978 = vmax.f32 %v499, %v501
  %v979 = vmax.f32 %v503, %v505
  %v980 = vmax.f32 %v509, %v511
  %v981 = vmax.f32 %v513, %v515
  %v982 = vmax.f32 %v519, %v521
  %v983 = vmax.f32 %v523, %v525
  %v984 = vmax.f32 %v529, %v531
  %v985 = vmax.f32 %v533, %v535
  %v986 = vmax.f32 %v539, %v541
  %v987 = vmax.f32 %v543, %v545
  %v988 = vmax.f32 %v549, %v551
  %v989 = vmax.f32 %v553, %v555
  %v990 = vmax.f32 %v559, %v561
  %v991 = vmax.f32 %v563, %v565
  %v992 = vmax.f32 %v569, %v571
  %v993 = vmax.f32 %v573, %v575
  %v994 = vmax.f32 %v579, %v581
  %v995 = vmax.f32 %v583, %v585
  %v996 = vmax.f32 %v589, %v591
  %v997 = vmax.f32 %v593, %v595
  %v998 = vmax.f32 %v599, %v601
  %v999 = vmax.f32 %v603, %v605
  %v1000 = vmax.f32 %v609, %v611
  %v1001 = vmax.f32 %v613, %v615
  %v1002 = vmax.f32 %v619, %v621
  %v1003 = vmax.f32 %v623, %v625
  %v1004 = vmax.f32 %v629, %v631
  %v1005 = vmax.f32 %v633, %v635
  %v1006 = vmax.f32 %v639, %v641
  %v1007 = vmax.f32 %v643, %v645
  %v1008 = vmax.f32 %v649, %v651
  %v1009 = vmax.f32 %v653, %v655
  %v1010 = vmax.f32 %v659, %v661
  %v1011 = vmax.f32 %v663, %v665
  %v1012 = vmax.f32 %v669, %v671
  %v1013 = vmax.f32 %v673, %v675
  %v1014 = vmax.f32 %v679, %v681
  %v1015 = vmax.f32 %v720, %v722
  %v1016 = vmax.f32 %v724, %v726
  %v1017 = vmax.f32 %v730, %v732
  %v1018 = vmax.f32 %v734, %v736
  %v1019 = vmax.f32 %v740, %v742
  %v1020 = vmax.f32 %v744, %v746
  %v1021 = vmax.f32 %v750, %v752
  %v1022 = vmax.f32 %v754, %v756
  %v1023 = vmax.f32 %v760, %v762
  %v1024 = vmax.f32 %v764, %v766
  %v1025 = vmax.f32 %v770, %v772
  %v1026 = vmax.f32 %v774, %v776
  %v1027 = vmax.f32 %v780, %v782
  %v1028 = vmax.f32 %v784, %v786
  %v1029 = vmax.f32 %v790, %v792
  %v1030 = vmax.f32 %v794, %v796
  %v1031 = vmax.f32 %v800, %v802
  %v1032 = vmax.f32 %v804, %v806
  %v1033 = vmax.f32 %v810, %v812
  %v1034 = vmax.f32 %v814, %v816
  %v1035 = vmax.f32 %v820, %v822
  %v1036 = vmax.f32 %v824, %v826
  %v1037 = vmax.f32 %v830, %v832
  %v1038 = vmax.f32 %v834, %v836
  %v1039 = vmax.f32 %v840, %v842
  %v1040 = vmax.f32 %v844, %v846
  %v1041 = vmax.f32 %v850, %v852
  %v1042 = vmax.f32 %v854, %v856
  %v1043 = vmax.f32 %v860, %v862
  %v1044 = vmax.f32 %v864, %v866
  %v1045 = vmax.f32 %v870, %v872
  %v1046 = vmax.f32 %v874, %v876
  %v1047 = vmax.f32 %v880, %v882
  %v1048 = vmax.f32 %v884, %v886
  %v1049 = vmax.f32 %v890, %v892
  %v1050 = vmax.f32 %v894, %v896
  %v1051 = vmax.f32 %v900, %v902
  %v1052 = vmax.f32 %v904, %v906
  %v1053 = vmax.f32 %v910, %v912
  %v1054 = vmax.f32 %v914, %v916
  %v1055 = vmax.f32 %v920, %v922
  %v1056 = vmax.f32 %v924, %v926
  %v1057 = vmax.f32 %v930, %v932
  %v1058 = vmax.f32 %v934, %v936
  %v1059 = vmax.f32 %v940, %v942
  %v1060 = vmax.f32 %v944, %v946
  %v1061 = vmax.f32 %v950, %v952
  %v1062 = vmax.f32 %v954, %v956
  %v1063 = vmax.f32 %v960, %v962
  %v1064 = vmax.f32 %v966, %v1015
  %v1065 = vmax.f32 %v967, %v1016
  %v1066 = vmax.f32 %v968, %v1017
  %v1067 = vmax.f32 %v969, %v1018
  %v1068 = vmax.f32 %v970, %v1019
  %v1069 = vmax.f32 %v971, %v1020
  %v1070 = vmax.f32 %v972, %v1021
  %v1071 = vmax.f32 %v973, %v1022
  %v1072 = vmax.f32 %v974, %v1023
  %v1073 = vmax.f32 %v975, %v1024
  %v1074 = vmax.f32 %v976, %v1025
  %v1075 = vmax.f32 %v977, %v1026
  %v1076 = vmax.f32 %v978, %v1027
  %v1077 = vmax.f32 %v979, %v1028
  %v1078 = vmax.f32 %v980, %v1029
  %v1079 = vmax.f32 %v981, %v1030
  %v1080 = vmax.f32 %v982, %v1031
  %v1081 = vmax.f32 %v983, %v1032
  %v1082 = vmax.f32 %v984, %v1033
  %v1083 = vmax.f32 %v985, %v1034
  %v1084 = vmax.f32 %v986, %v1035
  %v1085 = vmax.f32 %v987, %v1036
  %v1086 = vmax.f32 %v988, %v1037
  %v1087 = vmax.f32 %v989, %v1038
  %v1088 = vmax.f32 %v990, %v1039
  %v1089 = vmax.f32 %v991, %v1040
  %v1090 = vmax.f32 %v992, %v1041
  %v1091 = vmax.f32 %v993, %v1042
  %v1092 = vmax.f32 %v994, %v1043
  %v1093 = vmax.f32 %v995, %v1044
  %v1094 = vmax.f32 %v996, %v1045
  %v1095 = vmax.f32 %v997, %v1046
  %v1096 = vmax.f32 %v998, %v1047
  %v1097 = vmax.f32 %v999, %v1048
  %v1098 = vmax.f32 %v1000, %v1049
  %v1099 = vmax.f32 %v1001, %v1050
  %v1100 = vmax.f32 %v1002, %v1051
  %v1101 = vmax.f32 %v1003, %v1052
  %v1102 = vmax.f32 %v1004, %v1053
  %v1103 = vmax.f32 %v1005, %v1054
  %v1104 = vmax.f32 %v1006, %v1055
  %v1105 = vmax.f32 %v1007, %v1056
  %v1106 = vmax.f32 %v1008, %v1057
  %v1107 = vmax.f32 %v1009, %v1058
  %v1108 = vmax.f32 %v1010, %v1059
  %v1109 = vmax.f32 %v1011, %v1060
  %v1110 = vmax.f32 %v1012, %v1061
  %v1111 = vmax.f32 %v1013, %v1062
  %v1112 = vmax.f32 %v1014, %v1063
  %v1113 = vld [vmem:[%s2] sm:$0x1]
  %v1115 = vlaneseq
  %v1116 = vshrl.u32 %v1115, 7
  %v1117 = vsub.s32 0, %v1116
  %v1118 = vrot.slane %v1113, %v1117
  %v1120 = vadd.f32 %v1064, %v1118
  %v1121 = vadd.f32 %v1065, %v1118
  %v1122 = vadd.f32 %v1066, %v1118
  %v1123 = vadd.f32 %v1067, %v1118
  %v1124 = vadd.f32 %v1068, %v1118
  %v1125 = vadd.f32 %v1069, %v1118
  %v1126 = vadd.f32 %v1070, %v1118
  %v1127 = vadd.f32 %v1071, %v1118
  %v1128 = vadd.f32 %v1072, %v1118
  %v1129 = vadd.f32 %v1073, %v1118
  %v1130 = vadd.f32 %v1074, %v1118
  %v1131 = vadd.f32 %v1075, %v1118
  %v1132 = vadd.f32 %v1076, %v1118
  %v1133 = vadd.f32 %v1077, %v1118
  %v1134 = vadd.f32 %v1078, %v1118
  %v1135 = vadd.f32 %v1079, %v1118
  %v1136 = vadd.f32 %v1080, %v1118
  %v1137 = vadd.f32 %v1081, %v1118
  %v1138 = vadd.f32 %v1082, %v1118
  %v1139 = vadd.f32 %v1083, %v1118
  %v1140 = vadd.f32 %v1084, %v1118
  %v1141 = vadd.f32 %v1085, %v1118
  %v1142 = vadd.f32 %v1086, %v1118
  %v1143 = vadd.f32 %v1087, %v1118
  %v1144 = vadd.f32 %v1088, %v1118
  %v1145 = vadd.f32 %v1089, %v1118
  %v1146 = vadd.f32 %v1090, %v1118
  %v1147 = vadd.f32 %v1091, %v1118
  %v1148 = vadd.f32 %v1092, %v1118
  %v1149 = vadd.f32 %v1093, %v1118
  %v1150 = vadd.f32 %v1094, %v1118
  %v1151 = vadd.f32 %v1095, %v1118
  %v1152 = vadd.f32 %v1096, %v1118
  %v1153 = vadd.f32 %v1097, %v1118
  %v1154 = vadd.f32 %v1098, %v1118
  %v1155 = vadd.f32 %v1099, %v1118
  %v1156 = vadd.f32 %v1100, %v1118
  %v1157 = vadd.f32 %v1101, %v1118
  %v1158 = vadd.f32 %v1102, %v1118
  %v1159 = vadd.f32 %v1103, %v1118
  %v1160 = vadd.f32 %v1104, %v1118
  %v1161 = vadd.f32 %v1105, %v1118
  %v1162 = vadd.f32 %v1106, %v1118
  %v1163 = vadd.f32 %v1107, %v1118
  %v1164 = vadd.f32 %v1108, %v1118
  %v1165 = vadd.f32 %v1109, %v1118
  %v1166 = vadd.f32 %v1110, %v1118
  %v1167 = vadd.f32 %v1111, %v1118
  %v1168 = vadd.f32 %v1112, %v1118
  %v1169 = vmax.f32 %v1120, 0.0
  %v1170 = vmax.f32 %v1121, 0.0
  %v1171 = vmax.f32 %v1122, 0.0
  %v1172 = vmax.f32 %v1123, 0.0
  %v1173 = vmax.f32 %v1124, 0.0
  %v1174 = vmax.f32 %v1125, 0.0
  %v1175 = vmax.f32 %v1126, 0.0
  %v1176 = vmax.f32 %v1127, 0.0
  %v1177 = vmax.f32 %v1128, 0.0
  %v1178 = vmax.f32 %v1129, 0.0
  %v1179 = vmax.f32 %v1130, 0.0
  %v1180 = vmax.f32 %v1131, 0.0
  %v1181 = vmax.f32 %v1132, 0.0
  %v1182 = vmax.f32 %v1133, 0.0
  %v1183 = vmax.f32 %v1134, 0.0
  %v1184 = vmax.f32 %v1135, 0.0
  %v1185 = vmax.f32 %v1136, 0.0
  %v1186 = vmax.f32 %v1137, 0.0
  %v1187 = vmax.f32 %v1138, 0.0
  %v1188 = vmax.f32 %v1139, 0.0
  %v1189 = vmax.f32 %v1140, 0.0
  %v1190 = vmax.f32 %v1141, 0.0
  %v1191 = vmax.f32 %v1142, 0.0
  %v1192 = vmax.f32 %v1143, 0.0
  %v1193 = vmax.f32 %v1144, 0.0
  %v1194 = vmax.f32 %v1145, 0.0
  %v1195 = vmax.f32 %v1146, 0.0
  %v1196 = vmax.f32 %v1147, 0.0
  %v1197 = vmax.f32 %v1148, 0.0
  %v1198 = vmax.f32 %v1149, 0.0
  %v1199 = vmax.f32 %v1150, 0.0
  %v1200 = vmax.f32 %v1151, 0.0
  %v1201 = vmax.f32 %v1152, 0.0
  %v1202 = vmax.f32 %v1153, 0.0
  %v1203 = vmax.f32 %v1154, 0.0
  %v1204 = vmax.f32 %v1155, 0.0
  %v1205 = vmax.f32 %v1156, 0.0
  %v1206 = vmax.f32 %v1157, 0.0
  %v1207 = vmax.f32 %v1158, 0.0
  %v1208 = vmax.f32 %v1159, 0.0
  %v1209 = vmax.f32 %v1160, 0.0
  %v1210 = vmax.f32 %v1161, 0.0
  %v1211 = vmax.f32 %v1162, 0.0
  %v1212 = vmax.f32 %v1163, 0.0
  %v1213 = vmax.f32 %v1164, 0.0
  %v1214 = vmax.f32 %v1165, 0.0
  %v1215 = vmax.f32 %v1166, 0.0
  %v1216 = vmax.f32 %v1167, 0.0
  %v1217 = vmax.f32 %v1168, 0.0
  %v1218 = vpack.c.bf16 %v1170, %v1169
  %v1219 = vpack.c.bf16 %v1172, %v1171
  %v1220 = vpack.c.bf16 %v1174, %v1173
  %v1221 = vpack.c.bf16 %v1176, %v1175
  %v1222 = vpack.c.bf16 %v1178, %v1177
  %v1223 = vpack.c.bf16 %v1180, %v1179
  %v1224 = vpack.c.bf16 %v1182, %v1181
  %v1225 = vpack.c.bf16 %v1184, %v1183
  %v1226 = vpack.c.bf16 %v1186, %v1185
  %v1227 = vpack.c.bf16 %v1188, %v1187
  %v1228 = vpack.c.bf16 %v1190, %v1189
  %v1229 = vpack.c.bf16 %v1192, %v1191
  %v1230 = vpack.c.bf16 %v1194, %v1193
  %v1231 = vpack.c.bf16 %v1196, %v1195
  %v1232 = vpack.c.bf16 %v1198, %v1197
  %v1233 = vpack.c.bf16 %v1200, %v1199
  %v1234 = vpack.c.bf16 %v1202, %v1201
  %v1235 = vpack.c.bf16 %v1204, %v1203
  %v1236 = vpack.c.bf16 %v1206, %v1205
  %v1237 = vpack.c.bf16 %v1208, %v1207
  %v1238 = vpack.c.bf16 %v1210, %v1209
  %v1239 = vpack.c.bf16 %v1212, %v1211
  %v1240 = vpack.c.bf16 %v1214, %v1213
  %v1241 = vpack.c.bf16 %v1216, %v1215
  %v1242 = vpack.c.bf16 %v1217, %v1217
  %v1268 = vunpack.c.l.b16 %v1218
  %v1269 = vunpack.c.h.b16 %v1218
  %v1270 = vunpack.c.l.b16 %v1219
  %v1271 = vunpack.c.h.b16 %v1219
  %v1272 = vunpack.c.l.b16 %v1220
  %v1273 = vunpack.c.h.b16 %v1220
  %v1274 = vunpack.c.l.b16 %v1221
  %v1275 = vunpack.c.h.b16 %v1221
  %v1276 = vunpack.c.l.b16 %v1222
  %v1277 = vunpack.c.h.b16 %v1222
  %v1278 = vunpack.c.l.b16 %v1223
  %v1279 = vunpack.c.h.b16 %v1223
  %v1280 = vunpack.c.l.b16 %v1224
  %v1281 = vunpack.c.h.b16 %v1224
  %v1282 = vunpack.c.l.b16 %v1225
  %v1283 = vunpack.c.h.b16 %v1225
  %v1284 = vunpack.c.l.b16 %v1226
  %v1285 = vunpack.c.h.b16 %v1226
  %v1286 = vunpack.c.l.b16 %v1227
  %v1287 = vunpack.c.h.b16 %v1227
  %v1288 = vunpack.c.l.b16 %v1228
  %v1289 = vunpack.c.h.b16 %v1228
  %v1290 = vunpack.c.l.b16 %v1229
  %v1291 = vunpack.c.h.b16 %v1229
  %v1292 = vunpack.c.l.b16 %v1230
  %v1293 = vunpack.c.h.b16 %v1230
  %v1294 = vunpack.c.l.b16 %v1231
  %v1295 = vunpack.c.h.b16 %v1231
  %v1296 = vunpack.c.l.b16 %v1232
  %v1297 = vunpack.c.h.b16 %v1232
  %v1298 = vunpack.c.l.b16 %v1233
  %v1299 = vunpack.c.h.b16 %v1233
  %v1300 = vunpack.c.l.b16 %v1234
  %v1301 = vunpack.c.h.b16 %v1234
  %v1302 = vunpack.c.l.b16 %v1235
  %v1303 = vunpack.c.h.b16 %v1235
  %v1304 = vunpack.c.l.b16 %v1236
  %v1305 = vunpack.c.h.b16 %v1236
  %v1306 = vunpack.c.l.b16 %v1237
  %v1307 = vunpack.c.h.b16 %v1237
  %v1308 = vunpack.c.l.b16 %v1238
  %v1309 = vunpack.c.h.b16 %v1238
  %v1310 = vunpack.c.l.b16 %v1239
  %v1311 = vunpack.c.h.b16 %v1239
  %v1312 = vunpack.c.l.b16 %v1240
  %v1313 = vunpack.c.h.b16 %v1240
  %v1314 = vunpack.c.l.b16 %v1241
  %v1315 = vunpack.c.h.b16 %v1241
  %v1316 = vunpack.c.l.b16 %v1242
  %v1317 = vpack.c.b16 %v1268, %v1268
  %v1318 = vpack.c.b16 %v1269, %v1269
  %v1319 = vpack.c.b16 %v1270, %v1270
  %v1320 = vpack.c.b16 %v1271, %v1271
  %v1321 = vpack.c.b16 %v1272, %v1272
  %v1322 = vpack.c.b16 %v1273, %v1273
  %v1323 = vpack.c.b16 %v1274, %v1274
  %v1324 = vpack.c.b16 %v1275, %v1275
  %v1325 = vpack.c.b16 %v1276, %v1276
  %v1326 = vpack.c.b16 %v1277, %v1277
  %v1327 = vpack.c.b16 %v1278, %v1278
  %v1328 = vpack.c.b16 %v1279, %v1279
  %v1329 = vpack.c.b16 %v1280, %v1280
  %v1330 = vpack.c.b16 %v1281, %v1281
  %v1331 = vpack.c.b16 %v1282, %v1282
  %v1332 = vpack.c.b16 %v1283, %v1283
  %v1333 = vpack.c.b16 %v1284, %v1284
  %v1334 = vpack.c.b16 %v1285, %v1285
  %v1335 = vpack.c.b16 %v1286, %v1286
  %v1336 = vpack.c.b16 %v1287, %v1287
  %v1337 = vpack.c.b16 %v1288, %v1288
  %v1338 = vpack.c.b16 %v1289, %v1289
  %v1339 = vpack.c.b16 %v1290, %v1290
  %v1340 = vpack.c.b16 %v1291, %v1291
  %v1341 = vpack.c.b16 %v1292, %v1292
  %v1342 = vpack.c.b16 %v1293, %v1293
  %v1343 = vpack.c.b16 %v1294, %v1294
  %v1344 = vpack.c.b16 %v1295, %v1295
  %v1345 = vpack.c.b16 %v1296, %v1296
  %v1346 = vpack.c.b16 %v1297, %v1297
  %v1347 = vpack.c.b16 %v1298, %v1298
  %v1348 = vpack.c.b16 %v1299, %v1299
  %v1349 = vpack.c.b16 %v1300, %v1300
  %v1350 = vpack.c.b16 %v1301, %v1301
  %v1351 = vpack.c.b16 %v1302, %v1302
  %v1352 = vpack.c.b16 %v1303, %v1303
  %v1353 = vpack.c.b16 %v1304, %v1304
  %v1354 = vpack.c.b16 %v1305, %v1305
  %v1355 = vpack.c.b16 %v1306, %v1306
  %v1356 = vpack.c.b16 %v1307, %v1307
  %v1357 = vpack.c.b16 %v1308, %v1308
  %v1358 = vpack.c.b16 %v1309, %v1309
  %v1359 = vpack.c.b16 %v1310, %v1310
  %v1360 = vpack.c.b16 %v1311, %v1311
  %v1361 = vpack.c.b16 %v1312, %v1312
  %v1362 = vpack.c.b16 %v1313, %v1313
  %v1363 = vpack.c.b16 %v1314, %v1314
  %v1364 = vpack.c.b16 %v1315, %v1315
  %v1365 = vpack.c.b16 %v1316, %v1316
  %1415 = vst [vmem:[%s3] sm:$0xf] %v1317
  %1416 = vst [vmem:[%s3 + $0x4] sm:$0xf] %v1318
  %1417 = vst [vmem:[%s3 + $0x8] sm:$0xf] %v1319
  %1418 = vst [vmem:[%s3 + $0xc] sm:$0xf] %v1320
  %1419 = vst [vmem:[%s3 + $0x10] sm:$0xf] %v1321
  %1420 = vst [vmem:[%s3 + $0x14] sm:$0xf] %v1322
  %1421 = vst [vmem:[%s3 + $0x18] sm:$0xf] %v1323
  %1422 = vst [vmem:[%s3 + $0x1c] sm:$0xf] %v1324
  %1423 = vst [vmem:[%s3 + $0x20] sm:$0xf] %v1325
  %1424 = vst [vmem:[%s3 + $0x24] sm:$0xf] %v1326
  %1425 = vst [vmem:[%s3 + $0x28] sm:$0xf] %v1327
  %1426 = vst [vmem:[%s3 + $0x2c] sm:$0xf] %v1328
  %1427 = vst [vmem:[%s3 + $0x30] sm:$0xf] %v1329
  %1428 = vst [vmem:[%s3 + $0x34] sm:$0xf] %v1330
  %1429 = vst [vmem:[%s3 + $0x38] sm:$0xf] %v1331
  %1430 = vst [vmem:[%s3 + $0x3c] sm:$0xf] %v1332
  %1431 = vst [vmem:[%s3 + $0x40] sm:$0xf] %v1333
  %1432 = vst [vmem:[%s3 + $0x44] sm:$0xf] %v1334
  %1433 = vst [vmem:[%s3 + $0x48] sm:$0xf] %v1335
  %1434 = vst [vmem:[%s3 + $0x4c] sm:$0xf] %v1336
  %1435 = vst [vmem:[%s3 + $0x50] sm:$0xf] %v1337
  %1436 = vst [vmem:[%s3 + $0x54] sm:$0xf] %v1338
  %1437 = vst [vmem:[%s3 + $0x58] sm:$0xf] %v1339
  %1438 = vst [vmem:[%s3 + $0x5c] sm:$0xf] %v1340
  %1439 = vst [vmem:[%s3 + $0x60] sm:$0xf] %v1341
  %1440 = vst [vmem:[%s3 + $0x64] sm:$0xf] %v1342
  %1441 = vst [vmem:[%s3 + $0x68] sm:$0xf] %v1343
  %1442 = vst [vmem:[%s3 + $0x6c] sm:$0xf] %v1344
  %1443 = vst [vmem:[%s3 + $0x70] sm:$0xf] %v1345
  %1444 = vst [vmem:[%s3 + $0x74] sm:$0xf] %v1346
  %1445 = vst [vmem:[%s3 + $0x78] sm:$0xf] %v1347
  %1446 = vst [vmem:[%s3 + $0x7c] sm:$0xf] %v1348
  %1447 = vst [vmem:[%s3 + $0x80] sm:$0xf] %v1349
  %1448 = vst [vmem:[%s3 + $0x84] sm:$0xf] %v1350
  %1449 = vst [vmem:[%s3 + $0x88] sm:$0xf] %v1351
  %1450 = vst [vmem:[%s3 + $0x8c] sm:$0xf] %v1352
  %1451 = vst [vmem:[%s3 + $0x90] sm:$0xf] %v1353
  %1452 = vst [vmem:[%s3 + $0x94] sm:$0xf] %v1354
  %1453 = vst [vmem:[%s3 + $0x98] sm:$0xf] %v1355
  %1454 = vst [vmem:[%s3 + $0x9c] sm:$0xf] %v1356
  %1455 = vst [vmem:[%s3 + $0xa0] sm:$0xf] %v1357
  %1456 = vst [vmem:[%s3 + $0xa4] sm:$0xf] %v1358
  %1457 = vst [vmem:[%s3 + $0xa8] sm:$0xf] %v1359
  %1458 = vst [vmem:[%s3 + $0xac] sm:$0xf] %v1360
  %1459 = vst [vmem:[%s3 + $0xb0] sm:$0xf] %v1361
  %1460 = vst [vmem:[%s3 + $0xb4] sm:$0xf] %v1362
  %1461 = vst [vmem:[%s3 + $0xb8] sm:$0xf] %v1363
  %1462 = vst [vmem:[%s3 + $0xbc] sm:$0xf] %v1364
  %1463 = vst [vmem:[%s3 + $0xc0] sm:$0xf] %v1365
  // Predicated region
  $region14: #{lenet5_forward.2} parent=0 // pred_check
    _
  $region15: #{lenet5_forward.2} parent=0 // pred_check_branch
    %1465 = sbr.rel (0) target = $region17
  $region16: #{lenet5_forward.2} parent=0 // pred_region
    _
  $region17: #{lenet5_forward.2} parent=0 // pred_fallthru
    _
  // Predicated region
  $region18: #{lenet5_forward.2} parent=0 // pred_check
    _
  $region19: #{lenet5_forward.2} parent=0 // pred_check_branch
    %1467 = sbr.rel (0) target = $region21
  $region20: #{lenet5_forward.2} parent=0 // pred_region
    _
  $region21: #{lenet5_forward.2} parent=0 // pred_fallthru
    _

// kernel: lenet5_forward.3
$region0: #{lenet5_forward.3}
  #allocation0 [shape = 'u32[]', space=smem, size = 0x4, offset = 0x4, fixed_abs, tag = 'smem constant byte address 0x4 - core index']
  #allocation1 [shape = 'u32[144,128]{1,0:T(1,128)}', space=vmem, size = 0x12000, scoped, tag = 'internal scratch']
  #allocation2 [shape = 'bf16[25,128,128]{2,1,0:T(16,128)(2,1)}', space=vmem, size = 0xc8000, scoped, tag = 'scratch operand']
  #allocation3 [shape = 's32[1]{0}', space=sflag, size = 0x4, scoped, tag = 'scratch operand']
  #allocation6 [shape = 's32[]', space=sflag, size = 0x4, offset = 0, fixed_abs, tag = 'sflag constant byte address 0x0 - dummy sync flag']
  %s0 = inlined_call_operand.vmem [shape: bf16[56,256], index: 0, kind: input, shape index: {}]
  %s1 = inlined_call_operand.vmem [shape: bf16[256,512], index: 1, kind: input, shape index: {}]
  %s2 = inlined_call_operand.vmem [shape: f32[1,128], index: 2, kind: input, shape index: {}]
  %s3 = inlined_call_operand.vmem [shape: f32[3,128], index: 3, kind: input, shape index: {}]
  %s4 = inlined_call_operand.vmem [shape: bf16[2,128,128], index: 4, kind: input, shape index: {}]
  %s5 = inlined_call_operand.vmem [shape: bf16[25,128,128], index: 5, kind: input, shape index: {}]
  %s6 = inlined_call_operand.hbm [shape: f32[2,128], index: 6, kind: output, shape index: {}]
  %s7 = sld [smem:[#allocation0]]
  $region64: #{lenet5_forward.3} parent=0
    _
  %s9 = ssub.s32 1, %s7
  %s10 = scalar_select 0, %s9, %s7
  $region1: #{lenet5_forward.3} parent=0
    #allocation4 [shape = 'u8[1024]{0}', space=vmem, size = 0x400, scoped, tag = 'output window, operand 0, single buffered']
    #allocation5 [shape = 's32[1]{0}', space=sflag, size = 0x4, scoped, tag = 'scoped memory for lenet5_forward.3']
    %11 = vsyncpa [#allocation5], 0
    // Predicated region
    $region2: #{lenet5_forward.3} parent=1 // pred_check
      _
    $region3: #{lenet5_forward.3} parent=1 // pred_check_branch
      %13 = sbr.rel (0) target = $region5
    $region4: #{lenet5_forward.3} parent=1 // pred_region
      _
    $region5: #{lenet5_forward.3} parent=1 // pred_fallthru
      _
    // Predicated region
    $region6: #{lenet5_forward.3} parent=1 // pred_check
      _
    $region7: #{lenet5_forward.3} parent=1 // pred_check_branch
      %15 = sbr.rel (0) target = $region9
    $region8: #{lenet5_forward.3} parent=1 // pred_region
      _
    $region9: #{lenet5_forward.3} parent=1 // pred_fallthru
      _
    // Predicated region
    $region10: #{lenet5_forward.3} parent=1 // pred_check
      _
    $region11: #{lenet5_forward.3} parent=1 // pred_check_branch
      %17 = sbr.rel (0) target = $region13
    $region12: #{lenet5_forward.3} parent=1 // pred_region
      _
    $region13: #{lenet5_forward.3} parent=1 // pred_fallthru
      _
    // Predicated region
    $region14: #{lenet5_forward.3} parent=1 // pred_check
      _
    $region15: #{lenet5_forward.3} parent=1 // pred_check_branch
      %19 = sbr.rel (0) target = $region17
    $region16: #{lenet5_forward.3} parent=1 // pred_region
      _
    $region17: #{lenet5_forward.3} parent=1 // pred_fallthru
      _
    // Predicated region
    $region18: #{lenet5_forward.3} parent=1 // pred_check
      _
    $region19: #{lenet5_forward.3} parent=1 // pred_check_branch
      %21 = sbr.rel (0) target = $region21
    $region20: #{lenet5_forward.3} parent=1 // pred_region
      _
    $region21: #{lenet5_forward.3} parent=1 // pred_fallthru
      _
    %p24 = scmp.lt.u32.totalorder 1600, 8
    %p25 = pneg %p24
    // Predicated region
    $region22: #{lenet5_forward.3} parent=1 // pred_check
      _
    $region23: #{lenet5_forward.3} parent=1 // pred_check_branch
      %27 = sbr.rel (%p24) target = $region25
    $region24: #{lenet5_forward.3} parent=1 // pred_region
      %s42 = sand.u32 1600, 7
      %p43 = scmp.eq.s32.totalorder %s42, 0
      // Predicated region
      $region37: #{lenet5_forward.3} parent=24 // pred_check
        %p44 = pneg %p43
      $region38: #{lenet5_forward.3} parent=24 // pred_check_branch
        %46 = sbr.rel (%p44) target = $region40
      $region39: #{lenet5_forward.3} parent=24 // pred_region
        loop: start=0, step=1, limit=1
        $region41: #{lenet5_forward.3} parent=39 // loop_pre_header
          _
        $region42: #{lenet5_forward.3} parent=39 // loop_header
          %s48 = sphi 0, %s52
          %p49 = scmp.ge.s32.totalorder %s48, 1
          %s53 = sphi %s5, %s5
          %s54 = sphi [#allocation2], [#allocation2]
        $region43: #{lenet5_forward.3} parent=39 // loop_header_branch
          %51 = sbr.rel (%p49) target = $region47
        $region44: #{lenet5_forward.3} parent=39 // loop_body
          %v55 = vld [vmem:[%s53] sm:$0xff]
          %56 = vst [vmem:[%s54] sm:$0xff] %v55
          %v57 = vld [vmem:[%s53 + $0x8] sm:$0xff]
          %58 = vst [vmem:[%s54 + $0x8] sm:$0xff] %v57
          %v59 = vld [vmem:[%s53 + $0x10] sm:$0xff]
          %60 = vst [vmem:[%s54 + $0x10] sm:$0xff] %v59
          %v61 = vld [vmem:[%s53 + $0x18] sm:$0xff]
          %62 = vst [vmem:[%s54 + $0x18] sm:$0xff] %v61
          %v63 = vld [vmem:[%s53 + $0x20] sm:$0xff]
          %64 = vst [vmem:[%s54 + $0x20] sm:$0xff] %v63
          %v65 = vld [vmem:[%s53 + $0x28] sm:$0xff]
          %66 = vst [vmem:[%s54 + $0x28] sm:$0xff] %v65
          %v67 = vld [vmem:[%s53 + $0x30] sm:$0xff]
          %68 = vst [vmem:[%s54 + $0x30] sm:$0xff] %v67
          %v69 = vld [vmem:[%s53 + $0x38] sm:$0xff]
          %70 = vst [vmem:[%s54 + $0x38] sm:$0xff] %v69
          %v71 = vld [vmem:[%s53 + $0x40] sm:$0xff]
          %72 = vst [vmem:[%s54 + $0x40] sm:$0xff] %v71
          %v73 = vld [vmem:[%s53 + $0x48] sm:$0xff]
          %74 = vst [vmem:[%s54 + $0x48] sm:$0xff] %v73
          %v75 = vld [vmem:[%s53 + $0x50] sm:$0xff]
          %76 = vst [vmem:[%s54 + $0x50] sm:$0xff] %v75
          %v77 = vld [vmem:[%s53 + $0x58] sm:$0xff]
          %78 = vst [vmem:[%s54 + $0x58] sm:$0xff] %v77
          %v79 = vld [vmem:[%s53 + $0x60] sm:$0xff]
          %80 = vst [vmem:[%s54 + $0x60] sm:$0xff] %v79
          %v81 = vld [vmem:[%s53 + $0x68] sm:$0xff]
          %82 = vst [vmem:[%s54 + $0x68] sm:$0xff] %v81
          %v83 = vld [vmem:[%s53 + $0x70] sm:$0xff]
          %84 = vst [vmem:[%s54 + $0x70] sm:$0xff] %v83
          %v85 = vld [vmem:[%s53 + $0x78] sm:$0xff]
          %86 = vst [vmem:[%s54 + $0x78] sm:$0xff] %v85
          %v87 = vld [vmem:[%s53 + $0x80] sm:$0xff]
          %88 = vst [vmem:[%s54 + $0x80] sm:$0xff] %v87
          %v89 = vld [vmem:[%s53 + $0x88] sm:$0xff]
          %90 = vst [vmem:[%s54 + $0x88] sm:$0xff] %v89
          %v91 = vld [vmem:[%s53 + $0x90] sm:$0xff]
          %92 = vst [vmem:[%s54 + $0x90] sm:$0xff] %v91
          %v93 = vld [vmem:[%s53 + $0x98] sm:$0xff]
          %94 = vst [vmem:[%s54 + $0x98] sm:$0xff] %v93
          %v95 = vld [vmem:[%s53 + $0xa0] sm:$0xff]
          %96 = vst [vmem:[%s54 + $0xa0] sm:$0xff] %v95
          %v97 = vld [vmem:[%s53 + $0xa8] sm:$0xff]
          %98 = vst [vmem:[%s54 + $0xa8] sm:$0xff] %v97
          %v99 = vld [vmem:[%s53 + $0xb0] sm:$0xff]
          %100 = vst [vmem:[%s54 + $0xb0] sm:$0xff] %v99
          %v101 = vld [vmem:[%s53 + $0xb8] sm:$0xff]
          %102 = vst [vmem:[%s54 + $0xb8] sm:$0xff] %v101
          %v103 = vld [vmem:[%s53 + $0xc0] sm:$0xff]
          %104 = vst [vmem:[%s54 + $0xc0] sm:$0xff] %v103
          %v105 = vld [vmem:[%s53 + $0xc8] sm:$0xff]
          %106 = vst [vmem:[%s54 + $0xc8] sm:$0xff] %v105
          %v107 = vld [vmem:[%s53 + $0xd0] sm:$0xff]
          %108 = vst [vmem:[%s54 + $0xd0] sm:$0xff] %v107
          %v109 = vld [vmem:[%s53 + $0xd8] sm:$0xff]
          %110 = vst [vmem:[%s54 + $0xd8] sm:$0xff] %v109
          %v111 = vld [vmem:[%s53 + $0xe0] sm:$0xff]
          %112 = vst [vmem:[%s54 + $0xe0] sm:$0xff] %v111
          %v113 = vld [vmem:[%s53 + $0xe8] sm:$0xff]
          %114 = vst [vmem:[%s54 + $0xe8] sm:$0xff] %v113
          %v115 = vld [vmem:[%s53 + $0xf0] sm:$0xff]
          %116 = vst [vmem:[%s54 + $0xf0] sm:$0xff] %v115
          %v117 = vld [vmem:[%s53 + $0xf8] sm:$0xff]
          %118 = vst [vmem:[%s54 + $0xf8] sm:$0xff] %v117
          %v119 = vld [vmem:[%s53 + $0x100] sm:$0xff]
          %120 = vst [vmem:[%s54 + $0x100] sm:$0xff] %v119
          %v121 = vld [vmem:[%s53 + $0x108] sm:$0xff]
          %122 = vst [vmem:[%s54 + $0x108] sm:$0xff] %v121
          %v123 = vld [vmem:[%s53 + $0x110] sm:$0xff]
          %124 = vst [vmem:[%s54 + $0x110] sm:$0xff] %v123
          %v125 = vld [vmem:[%s53 + $0x118] sm:$0xff]
          %126 = vst [vmem:[%s54 + $0x118] sm:$0xff] %v125
          %v127 = vld [vmem:[%s53 + $0x120] sm:$0xff]
          %128 = vst [vmem:[%s54 + $0x120] sm:$0xff] %v127
          %v129 = vld [vmem:[%s53 + $0x128] sm:$0xff]
          %130 = vst [vmem:[%s54 + $0x128] sm:$0xff] %v129
          %v131 = vld [vmem:[%s53 + $0x130] sm:$0xff]
          %132 = vst [vmem:[%s54 + $0x130] sm:$0xff] %v131
          %v133 = vld [vmem:[%s53 + $0x138] sm:$0xff]
          %134 = vst [vmem:[%s54 + $0x138] sm:$0xff] %v133
          %v135 = vld [vmem:[%s53 + $0x140] sm:$0xff]
          %136 = vst [vmem:[%s54 + $0x140] sm:$0xff] %v135
          %v137 = vld [vmem:[%s53 + $0x148] sm:$0xff]
          %138 = vst [vmem:[%s54 + $0x148] sm:$0xff] %v137
          %v139 = vld [vmem:[%s53 + $0x150] sm:$0xff]
          %140 = vst [vmem:[%s54 + $0x150] sm:$0xff] %v139
          %v141 = vld [vmem:[%s53 + $0x158] sm:$0xff]
          %142 = vst [vmem:[%s54 + $0x158] sm:$0xff] %v141
          %v143 = vld [vmem:[%s53 + $0x160] sm:$0xff]
          %144 = vst [vmem:[%s54 + $0x160] sm:$0xff] %v143
          %v145 = vld [vmem:[%s53 + $0x168] sm:$0xff]
          %146 = vst [vmem:[%s54 + $0x168] sm:$0xff] %v145
          %v147 = vld [vmem:[%s53 + $0x170] sm:$0xff]
          %148 = vst [vmem:[%s54 + $0x170] sm:$0xff] %v147
          %v149 = vld [vmem:[%s53 + $0x178] sm:$0xff]
          %150 = vst [vmem:[%s54 + $0x178] sm:$0xff] %v149
          %v151 = vld [vmem:[%s53 + $0x180] sm:$0xff]
          %152 = vst [vmem:[%s54 + $0x180] sm:$0xff] %v151
          %v153 = vld [vmem:[%s53 + $0x188] sm:$0xff]
          %154 = vst [vmem:[%s54 + $0x188] sm:$0xff] %v153
          %v155 = vld [vmem:[%s53 + $0x190] sm:$0xff]
          %156 = vst [vmem:[%s54 + $0x190] sm:$0xff] %v155
          %v157 = vld [vmem:[%s53 + $0x198] sm:$0xff]
          %158 = vst [vmem:[%s54 + $0x198] sm:$0xff] %v157
          %v159 = vld [vmem:[%s53 + $0x1a0] sm:$0xff]
          %160 = vst [vmem:[%s54 + $0x1a0] sm:$0xff] %v159
          %v161 = vld [vmem:[%s53 + $0x1a8] sm:$0xff]
          %162 = vst [vmem:[%s54 + $0x1a8] sm:$0xff] %v161
          %v163 = vld [vmem:[%s53 + $0x1b0] sm:$0xff]
          %164 = vst [vmem:[%s54 + $0x1b0] sm:$0xff] %v163
          %v165 = vld [vmem:[%s53 + $0x1b8] sm:$0xff]
          %166 = vst [vmem:[%s54 + $0x1b8] sm:$0xff] %v165
          %v167 = vld [vmem:[%s53 + $0x1c0] sm:$0xff]
          %168 = vst [vmem:[%s54 + $0x1c0] sm:$0xff] %v167
          %v169 = vld [vmem:[%s53 + $0x1c8] sm:$0xff]
          %170 = vst [vmem:[%s54 + $0x1c8] sm:$0xff] %v169
          %v171 = vld [vmem:[%s53 + $0x1d0] sm:$0xff]
          %172 = vst [vmem:[%s54 + $0x1d0] sm:$0xff] %v171
          %v173 = vld [vmem:[%s53 + $0x1d8] sm:$0xff]
          %174 = vst [vmem:[%s54 + $0x1d8] sm:$0xff] %v173
          %v175 = vld [vmem:[%s53 + $0x1e0] sm:$0xff]
          %176 = vst [vmem:[%s54 + $0x1e0] sm:$0xff] %v175
          %v177 = vld [vmem:[%s53 + $0x1e8] sm:$0xff]
          %178 = vst [vmem:[%s54 + $0x1e8] sm:$0xff] %v177
          %v179 = vld [vmem:[%s53 + $0x1f0] sm:$0xff]
          %180 = vst [vmem:[%s54 + $0x1f0] sm:$0xff] %v179
          %v181 = vld [vmem:[%s53 + $0x1f8] sm:$0xff]
          %182 = vst [vmem:[%s54 + $0x1f8] sm:$0xff] %v181
          %v183 = vld [vmem:[%s53 + $0x200] sm:$0xff]
          %184 = vst [vmem:[%s54 + $0x200] sm:$0xff] %v183
          %v185 = vld [vmem:[%s53 + $0x208] sm:$0xff]
          %186 = vst [vmem:[%s54 + $0x208] sm:$0xff] %v185
          %v187 = vld [vmem:[%s53 + $0x210] sm:$0xff]
          %188 = vst [vmem:[%s54 + $0x210] sm:$0xff] %v187
          %v189 = vld [vmem:[%s53 + $0x218] sm:$0xff]
          %190 = vst [vmem:[%s54 + $0x218] sm:$0xff] %v189
          %v191 = vld [vmem:[%s53 + $0x220] sm:$0xff]
          %192 = vst [vmem:[%s54 + $0x220] sm:$0xff] %v191
          %v193 = vld [vmem:[%s53 + $0x228] sm:$0xff]
          %194 = vst [vmem:[%s54 + $0x228] sm:$0xff] %v193
          %v195 = vld [vmem:[%s53 + $0x230] sm:$0xff]
          %196 = vst [vmem:[%s54 + $0x230] sm:$0xff] %v195
          %v197 = vld [vmem:[%s53 + $0x238] sm:$0xff]
          %198 = vst [vmem:[%s54 + $0x238] sm:$0xff] %v197
          %v199 = vld [vmem:[%s53 + $0x240] sm:$0xff]
          %200 = vst [vmem:[%s54 + $0x240] sm:$0xff] %v199
          %v201 = vld [vmem:[%s53 + $0x248] sm:$0xff]
          %202 = vst [vmem:[%s54 + $0x248] sm:$0xff] %v201
          %v203 = vld [vmem:[%s53 + $0x250] sm:$0xff]
          %204 = vst [vmem:[%s54 + $0x250] sm:$0xff] %v203
          %v205 = vld [vmem:[%s53 + $0x258] sm:$0xff]
          %206 = vst [vmem:[%s54 + $0x258] sm:$0xff] %v205
          %v207 = vld [vmem:[%s53 + $0x260] sm:$0xff]
          %208 = vst [vmem:[%s54 + $0x260] sm:$0xff] %v207
          %v209 = vld [vmem:[%s53 + $0x268] sm:$0xff]
          %210 = vst [vmem:[%s54 + $0x268] sm:$0xff] %v209
          %v211 = vld [vmem:[%s53 + $0x270] sm:$0xff]
          %212 = vst [vmem:[%s54 + $0x270] sm:$0xff] %v211
          %v213 = vld [vmem:[%s53 + $0x278] sm:$0xff]
          %214 = vst [vmem:[%s54 + $0x278] sm:$0xff] %v213
          %v215 = vld [vmem:[%s53 + $0x280] sm:$0xff]
          %216 = vst [vmem:[%s54 + $0x280] sm:$0xff] %v215
          %v217 = vld [vmem:[%s53 + $0x288] sm:$0xff]
          %218 = vst [vmem:[%s54 + $0x288] sm:$0xff] %v217
          %v219 = vld [vmem:[%s53 + $0x290] sm:$0xff]
          %220 = vst [vmem:[%s54 + $0x290] sm:$0xff] %v219
          %v221 = vld [vmem:[%s53 + $0x298] sm:$0xff]
          %222 = vst [vmem:[%s54 + $0x298] sm:$0xff] %v221
          %v223 = vld [vmem:[%s53 + $0x2a0] sm:$0xff]
          %224 = vst [vmem:[%s54 + $0x2a0] sm:$0xff] %v223
          %v225 = vld [vmem:[%s53 + $0x2a8] sm:$0xff]
          %226 = vst [vmem:[%s54 + $0x2a8] sm:$0xff] %v225
          %v227 = vld [vmem:[%s53 + $0x2b0] sm:$0xff]
          %228 = vst [vmem:[%s54 + $0x2b0] sm:$0xff] %v227
          %v229 = vld [vmem:[%s53 + $0x2b8] sm:$0xff]
          %230 = vst [vmem:[%s54 + $0x2b8] sm:$0xff] %v229
          %v231 = vld [vmem:[%s53 + $0x2c0] sm:$0xff]
          %232 = vst [vmem:[%s54 + $0x2c0] sm:$0xff] %v231
          %v233 = vld [vmem:[%s53 + $0x2c8] sm:$0xff]
          %234 = vst [vmem:[%s54 + $0x2c8] sm:$0xff] %v233
          %v235 = vld [vmem:[%s53 + $0x2d0] sm:$0xff]
          %236 = vst [vmem:[%s54 + $0x2d0] sm:$0xff] %v235
          %v237 = vld [vmem:[%s53 + $0x2d8] sm:$0xff]
          %238 = vst [vmem:[%s54 + $0x2d8] sm:$0xff] %v237
          %v239 = vld [vmem:[%s53 + $0x2e0] sm:$0xff]
          %240 = vst [vmem:[%s54 + $0x2e0] sm:$0xff] %v239
          %v241 = vld [vmem:[%s53 + $0x2e8] sm:$0xff]
          %242 = vst [vmem:[%s54 + $0x2e8] sm:$0xff] %v241
          %v243 = vld [vmem:[%s53 + $0x2f0] sm:$0xff]
          %244 = vst [vmem:[%s54 + $0x2f0] sm:$0xff] %v243
          %v245 = vld [vmem:[%s53 + $0x2f8] sm:$0xff]
          %246 = vst [vmem:[%s54 + $0x2f8] sm:$0xff] %v245
          %v247 = vld [vmem:[%s53 + $0x300] sm:$0xff]
          %248 = vst [vmem:[%s54 + $0x300] sm:$0xff] %v247
          %v249 = vld [vmem:[%s53 + $0x308] sm:$0xff]
          %250 = vst [vmem:[%s54 + $0x308] sm:$0xff] %v249
          %v251 = vld [vmem:[%s53 + $0x310] sm:$0xff]
          %252 = vst [vmem:[%s54 + $0x310] sm:$0xff] %v251
          %v253 = vld [vmem:[%s53 + $0x318] sm:$0xff]
          %254 = vst [vmem:[%s54 + $0x318] sm:$0xff] %v253
          %v255 = vld [vmem:[%s53 + $0x320] sm:$0xff]
          %256 = vst [vmem:[%s54 + $0x320] sm:$0xff] %v255
          %v257 = vld [vmem:[%s53 + $0x328] sm:$0xff]
          %258 = vst [vmem:[%s54 + $0x328] sm:$0xff] %v257
          %v259 = vld [vmem:[%s53 + $0x330] sm:$0xff]
          %260 = vst [vmem:[%s54 + $0x330] sm:$0xff] %v259
          %v261 = vld [vmem:[%s53 + $0x338] sm:$0xff]
          %262 = vst [vmem:[%s54 + $0x338] sm:$0xff] %v261
          %v263 = vld [vmem:[%s53 + $0x340] sm:$0xff]
          %264 = vst [vmem:[%s54 + $0x340] sm:$0xff] %v263
          %v265 = vld [vmem:[%s53 + $0x348] sm:$0xff]
          %266 = vst [vmem:[%s54 + $0x348] sm:$0xff] %v265
          %v267 = vld [vmem:[%s53 + $0x350] sm:$0xff]
          %268 = vst [vmem:[%s54 + $0x350] sm:$0xff] %v267
          %v269 = vld [vmem:[%s53 + $0x358] sm:$0xff]
          %270 = vst [vmem:[%s54 + $0x358] sm:$0xff] %v269
          %v271 = vld [vmem:[%s53 + $0x360] sm:$0xff]
          %272 = vst [vmem:[%s54 + $0x360] sm:$0xff] %v271
          %v273 = vld [vmem:[%s53 + $0x368] sm:$0xff]
          %274 = vst [vmem:[%s54 + $0x368] sm:$0xff] %v273
          %v275 = vld [vmem:[%s53 + $0x370] sm:$0xff]
          %276 = vst [vmem:[%s54 + $0x370] sm:$0xff] %v275
          %v277 = vld [vmem:[%s53 + $0x378] sm:$0xff]
          %278 = vst [vmem:[%s54 + $0x378] sm:$0xff] %v277
          %v279 = vld [vmem:[%s53 + $0x380] sm:$0xff]
          %280 = vst [vmem:[%s54 + $0x380] sm:$0xff] %v279
          %v281 = vld [vmem:[%s53 + $0x388] sm:$0xff]
          %282 = vst [vmem:[%s54 + $0x388] sm:$0xff] %v281
          %v283 = vld [vmem:[%s53 + $0x390] sm:$0xff]
          %284 = vst [vmem:[%s54 + $0x390] sm:$0xff] %v283
          %v285 = vld [vmem:[%s53 + $0x398] sm:$0xff]
          %286 = vst [vmem:[%s54 + $0x398] sm:$0xff] %v285
          %v287 = vld [vmem:[%s53 + $0x3a0] sm:$0xff]
          %288 = vst [vmem:[%s54 + $0x3a0] sm:$0xff] %v287
          %v289 = vld [vmem:[%s53 + $0x3a8] sm:$0xff]
          %290 = vst [vmem:[%s54 + $0x3a8] sm:$0xff] %v289
          %v291 = vld [vmem:[%s53 + $0x3b0] sm:$0xff]
          %292 = vst [vmem:[%s54 + $0x3b0] sm:$0xff] %v291
          %v293 = vld [vmem:[%s53 + $0x3b8] sm:$0xff]
          %294 = vst [vmem:[%s54 + $0x3b8] sm:$0xff] %v293
          %v295 = vld [vmem:[%s53 + $0x3c0] sm:$0xff]
          %296 = vst [vmem:[%s54 + $0x3c0] sm:$0xff] %v295
          %v297 = vld [vmem:[%s53 + $0x3c8] sm:$0xff]
          %298 = vst [vmem:[%s54 + $0x3c8] sm:$0xff] %v297
          %v299 = vld [vmem:[%s53 + $0x3d0] sm:$0xff]
          %300 = vst [vmem:[%s54 + $0x3d0] sm:$0xff] %v299
          %v301 = vld [vmem:[%s53 + $0x3d8] sm:$0xff]
          %302 = vst [vmem:[%s54 + $0x3d8] sm:$0xff] %v301
          %v303 = vld [vmem:[%s53 + $0x3e0] sm:$0xff]
          %304 = vst [vmem:[%s54 + $0x3e0] sm:$0xff] %v303
          %v305 = vld [vmem:[%s53 + $0x3e8] sm:$0xff]
          %306 = vst [vmem:[%s54 + $0x3e8] sm:$0xff] %v305
          %v307 = vld [vmem:[%s53 + $0x3f0] sm:$0xff]
          %308 = vst [vmem:[%s54 + $0x3f0] sm:$0xff] %v307
          %v309 = vld [vmem:[%s53 + $0x3f8] sm:$0xff]
          %310 = vst [vmem:[%s54 + $0x3f8] sm:$0xff] %v309
          %v311 = vld [vmem:[%s53 + $0x400] sm:$0xff]
          %312 = vst [vmem:[%s54 + $0x400] sm:$0xff] %v311
          %v313 = vld [vmem:[%s53 + $0x408] sm:$0xff]
          %314 = vst [vmem:[%s54 + $0x408] sm:$0xff] %v313
          %v315 = vld [vmem:[%s53 + $0x410] sm:$0xff]
          %316 = vst [vmem:[%s54 + $0x410] sm:$0xff] %v315
          %v317 = vld [vmem:[%s53 + $0x418] sm:$0xff]
          %318 = vst [vmem:[%s54 + $0x418] sm:$0xff] %v317
          %v319 = vld [vmem:[%s53 + $0x420] sm:$0xff]
          %320 = vst [vmem:[%s54 + $0x420] sm:$0xff] %v319
          %v321 = vld [vmem:[%s53 + $0x428] sm:$0xff]
          %322 = vst [vmem:[%s54 + $0x428] sm:$0xff] %v321
          %v323 = vld [vmem:[%s53 + $0x430] sm:$0xff]
          %324 = vst [vmem:[%s54 + $0x430] sm:$0xff] %v323
          %v325 = vld [vmem:[%s53 + $0x438] sm:$0xff]
          %326 = vst [vmem:[%s54 + $0x438] sm:$0xff] %v325
          %v327 = vld [vmem:[%s53 + $0x440] sm:$0xff]
          %328 = vst [vmem:[%s54 + $0x440] sm:$0xff] %v327
          %v329 = vld [vmem:[%s53 + $0x448] sm:$0xff]
          %330 = vst [vmem:[%s54 + $0x448] sm:$0xff] %v329
          %v331 = vld [vmem:[%s53 + $0x450] sm:$0xff]
          %332 = vst [vmem:[%s54 + $0x450] sm:$0xff] %v331
          %v333 = vld [vmem:[%s53 + $0x458] sm:$0xff]
          %334 = vst [vmem:[%s54 + $0x458] sm:$0xff] %v333
          %v335 = vld [vmem:[%s53 + $0x460] sm:$0xff]
          %336 = vst [vmem:[%s54 + $0x460] sm:$0xff] %v335
          %v337 = vld [vmem:[%s53 + $0x468] sm:$0xff]
          %338 = vst [vmem:[%s54 + $0x468] sm:$0xff] %v337
          %v339 = vld [vmem:[%s53 + $0x470] sm:$0xff]
          %340 = vst [vmem:[%s54 + $0x470] sm:$0xff] %v339
          %v341 = vld [vmem:[%s53 + $0x478] sm:$0xff]
          %342 = vst [vmem:[%s54 + $0x478] sm:$0xff] %v341
          %v343 = vld [vmem:[%s53 + $0x480] sm:$0xff]
          %344 = vst [vmem:[%s54 + $0x480] sm:$0xff] %v343
          %v345 = vld [vmem:[%s53 + $0x488] sm:$0xff]
          %346 = vst [vmem:[%s54 + $0x488] sm:$0xff] %v345
          %v347 = vld [vmem:[%s53 + $0x490] sm:$0xff]
          %348 = vst [vmem:[%s54 + $0x490] sm:$0xff] %v347
          %v349 = vld [vmem:[%s53 + $0x498] sm:$0xff]
          %350 = vst [vmem:[%s54 + $0x498] sm:$0xff] %v349
          %v351 = vld [vmem:[%s53 + $0x4a0] sm:$0xff]
          %352 = vst [vmem:[%s54 + $0x4a0] sm:$0xff] %v351
          %v353 = vld [vmem:[%s53 + $0x4a8] sm:$0xff]
          %354 = vst [vmem:[%s54 + $0x4a8] sm:$0xff] %v353
          %v355 = vld [vmem:[%s53 + $0x4b0] sm:$0xff]
          %356 = vst [vmem:[%s54 + $0x4b0] sm:$0xff] %v355
          %v357 = vld [vmem:[%s53 + $0x4b8] sm:$0xff]
          %358 = vst [vmem:[%s54 + $0x4b8] sm:$0xff] %v357
          %v359 = vld [vmem:[%s53 + $0x4c0] sm:$0xff]
          %360 = vst [vmem:[%s54 + $0x4c0] sm:$0xff] %v359
          %v361 = vld [vmem:[%s53 + $0x4c8] sm:$0xff]
          %362 = vst [vmem:[%s54 + $0x4c8] sm:$0xff] %v361
          %v363 = vld [vmem:[%s53 + $0x4d0] sm:$0xff]
          %364 = vst [vmem:[%s54 + $0x4d0] sm:$0xff] %v363
          %v365 = vld [vmem:[%s53 + $0x4d8] sm:$0xff]
          %366 = vst [vmem:[%s54 + $0x4d8] sm:$0xff] %v365
          %v367 = vld [vmem:[%s53 + $0x4e0] sm:$0xff]
          %368 = vst [vmem:[%s54 + $0x4e0] sm:$0xff] %v367
          %v369 = vld [vmem:[%s53 + $0x4e8] sm:$0xff]
          %370 = vst [vmem:[%s54 + $0x4e8] sm:$0xff] %v369
          %v371 = vld [vmem:[%s53 + $0x4f0] sm:$0xff]
          %372 = vst [vmem:[%s54 + $0x4f0] sm:$0xff] %v371
          %v373 = vld [vmem:[%s53 + $0x4f8] sm:$0xff]
          %374 = vst [vmem:[%s54 + $0x4f8] sm:$0xff] %v373
          %v375 = vld [vmem:[%s53 + $0x500] sm:$0xff]
          %376 = vst [vmem:[%s54 + $0x500] sm:$0xff] %v375
          %v377 = vld [vmem:[%s53 + $0x508] sm:$0xff]
          %378 = vst [vmem:[%s54 + $0x508] sm:$0xff] %v377
          %v379 = vld [vmem:[%s53 + $0x510] sm:$0xff]
          %380 = vst [vmem:[%s54 + $0x510] sm:$0xff] %v379
          %v381 = vld [vmem:[%s53 + $0x518] sm:$0xff]
          %382 = vst [vmem:[%s54 + $0x518] sm:$0xff] %v381
          %v383 = vld [vmem:[%s53 + $0x520] sm:$0xff]
          %384 = vst [vmem:[%s54 + $0x520] sm:$0xff] %v383
          %v385 = vld [vmem:[%s53 + $0x528] sm:$0xff]
          %386 = vst [vmem:[%s54 + $0x528] sm:$0xff] %v385
          %v387 = vld [vmem:[%s53 + $0x530] sm:$0xff]
          %388 = vst [vmem:[%s54 + $0x530] sm:$0xff] %v387
          %v389 = vld [vmem:[%s53 + $0x538] sm:$0xff]
          %390 = vst [vmem:[%s54 + $0x538] sm:$0xff] %v389
          %v391 = vld [vmem:[%s53 + $0x540] sm:$0xff]
          %392 = vst [vmem:[%s54 + $0x540] sm:$0xff] %v391
          %v393 = vld [vmem:[%s53 + $0x548] sm:$0xff]
          %394 = vst [vmem:[%s54 + $0x548] sm:$0xff] %v393
          %v395 = vld [vmem:[%s53 + $0x550] sm:$0xff]
          %396 = vst [vmem:[%s54 + $0x550] sm:$0xff] %v395
          %v397 = vld [vmem:[%s53 + $0x558] sm:$0xff]
          %398 = vst [vmem:[%s54 + $0x558] sm:$0xff] %v397
          %v399 = vld [vmem:[%s53 + $0x560] sm:$0xff]
          %400 = vst [vmem:[%s54 + $0x560] sm:$0xff] %v399
          %v401 = vld [vmem:[%s53 + $0x568] sm:$0xff]
          %402 = vst [vmem:[%s54 + $0x568] sm:$0xff] %v401
          %v403 = vld [vmem:[%s53 + $0x570] sm:$0xff]
          %404 = vst [vmem:[%s54 + $0x570] sm:$0xff] %v403
          %v405 = vld [vmem:[%s53 + $0x578] sm:$0xff]
          %406 = vst [vmem:[%s54 + $0x578] sm:$0xff] %v405
          %v407 = vld [vmem:[%s53 + $0x580] sm:$0xff]
          %408 = vst [vmem:[%s54 + $0x580] sm:$0xff] %v407
          %v409 = vld [vmem:[%s53 + $0x588] sm:$0xff]
          %410 = vst [vmem:[%s54 + $0x588] sm:$0xff] %v409
          %v411 = vld [vmem:[%s53 + $0x590] sm:$0xff]
          %412 = vst [vmem:[%s54 + $0x590] sm:$0xff] %v411
          %v413 = vld [vmem:[%s53 + $0x598] sm:$0xff]
          %414 = vst [vmem:[%s54 + $0x598] sm:$0xff] %v413
          %v415 = vld [vmem:[%s53 + $0x5a0] sm:$0xff]
          %416 = vst [vmem:[%s54 + $0x5a0] sm:$0xff] %v415
          %v417 = vld [vmem:[%s53 + $0x5a8] sm:$0xff]
          %418 = vst [vmem:[%s54 + $0x5a8] sm:$0xff] %v417
          %v419 = vld [vmem:[%s53 + $0x5b0] sm:$0xff]
          %420 = vst [vmem:[%s54 + $0x5b0] sm:$0xff] %v419
          %v421 = vld [vmem:[%s53 + $0x5b8] sm:$0xff]
          %422 = vst [vmem:[%s54 + $0x5b8] sm:$0xff] %v421
          %v423 = vld [vmem:[%s53 + $0x5c0] sm:$0xff]
          %424 = vst [vmem:[%s54 + $0x5c0] sm:$0xff] %v423
          %v425 = vld [vmem:[%s53 + $0x5c8] sm:$0xff]
          %426 = vst [vmem:[%s54 + $0x5c8] sm:$0xff] %v425
          %v427 = vld [vmem:[%s53 + $0x5d0] sm:$0xff]
          %428 = vst [vmem:[%s54 + $0x5d0] sm:$0xff] %v427
          %v429 = vld [vmem:[%s53 + $0x5d8] sm:$0xff]
          %430 = vst [vmem:[%s54 + $0x5d8] sm:$0xff] %v429
          %v431 = vld [vmem:[%s53 + $0x5e0] sm:$0xff]
          %432 = vst [vmem:[%s54 + $0x5e0] sm:$0xff] %v431
          %v433 = vld [vmem:[%s53 + $0x5e8] sm:$0xff]
          %434 = vst [vmem:[%s54 + $0x5e8] sm:$0xff] %v433
          %v435 = vld [vmem:[%s53 + $0x5f0] sm:$0xff]
          %436 = vst [vmem:[%s54 + $0x5f0] sm:$0xff] %v435
          %v437 = vld [vmem:[%s53 + $0x5f8] sm:$0xff]
          %438 = vst [vmem:[%s54 + $0x5f8] sm:$0xff] %v437
          %v439 = vld [vmem:[%s53 + $0x600] sm:$0xff]
          %440 = vst [vmem:[%s54 + $0x600] sm:$0xff] %v439
          %v441 = vld [vmem:[%s53 + $0x608] sm:$0xff]
          %442 = vst [vmem:[%s54 + $0x608] sm:$0xff] %v441
          %v443 = vld [vmem:[%s53 + $0x610] sm:$0xff]
          %444 = vst [vmem:[%s54 + $0x610] sm:$0xff] %v443
          %v445 = vld [vmem:[%s53 + $0x618] sm:$0xff]
          %446 = vst [vmem:[%s54 + $0x618] sm:$0xff] %v445
          %v447 = vld [vmem:[%s53 + $0x620] sm:$0xff]
          %448 = vst [vmem:[%s54 + $0x620] sm:$0xff] %v447
          %v449 = vld [vmem:[%s53 + $0x628] sm:$0xff]
          %450 = vst [vmem:[%s54 + $0x628] sm:$0xff] %v449
          %v451 = vld [vmem:[%s53 + $0x630] sm:$0xff]
          %452 = vst [vmem:[%s54 + $0x630] sm:$0xff] %v451
          %v453 = vld [vmem:[%s53 + $0x638] sm:$0xff]
          %454 = vst [vmem:[%s54 + $0x638] sm:$0xff] %v453
        $region45: #{lenet5_forward.3} parent=39 // loop_footer
          %s52 = sadd.s32 1, %s48
        $region46: #{lenet5_forward.3} parent=39 // loop_footer_branch
          %47 = sbr.rel target = $region42
        $region47: #{lenet5_forward.3} parent=39 // loop_exit
          _
      $region40: #{lenet5_forward.3} parent=24 // pred_fallthru
        _
      %p455 = pneg %p43
      // Predicated region
      $region48: #{lenet5_forward.3} parent=24 // pred_check
        _
      $region49: #{lenet5_forward.3} parent=24 // pred_check_branch
        %457 = sbr.rel (%p43) target = $region51
      $region50: #{lenet5_forward.3} parent=24 // pred_region
        %s458 = sand.u32 1600, 7
      $region51: #{lenet5_forward.3} parent=24 // pred_fallthru
        _
    $region25: #{lenet5_forward.3} parent=1 // pred_fallthru
      _
    // Predicated region
    $region26: #{lenet5_forward.3} parent=1 // pred_check
      %p28 = pneg %p24
    $region27: #{lenet5_forward.3} parent=1 // pred_check_branch
      %30 = sbr.rel (%p28) target = $region29
    $region28: #{lenet5_forward.3} parent=1 // pred_region
      %s31 = sshllo.u32 0, 1600
      loop: start=0, step=1, limit=1
      $region30: #{lenet5_forward.3} parent=28 // loop_pre_header
        _
      $region31: #{lenet5_forward.3} parent=28 // loop_header
        %s33 = sphi 0, %s37
        %p34 = scmp.ge.s32.totalorder %s33, 1
        %s38 = sphi %s5, %s5
        %s39 = sphi [#allocation2], [#allocation2]
      $region32: #{lenet5_forward.3} parent=28 // loop_header_branch
        %36 = sbr.rel (%p34) target = $region36
      $region33: #{lenet5_forward.3} parent=28 // loop_body
        %v40 = vld [vmem:[%s38] sm:%s31]
        %41 = vst [vmem:[%s39] sm:%s31] %v40
      $region34: #{lenet5_forward.3} parent=28 // loop_footer
        %s37 = sadd.s32 1, %s33
      $region35: #{lenet5_forward.3} parent=28 // loop_footer_branch
        %32 = sbr.rel target = $region31
      $region36: #{lenet5_forward.3} parent=28 // loop_exit
        _
    $region29: #{lenet5_forward.3} parent=1 // pred_fallthru
      _
    // Predicated region
    $region52: #{lenet5_forward.3} parent=1 // pred_check
      _
    $region53: #{lenet5_forward.3} parent=1 // pred_check_branch
      %461 = sbr.rel (0) target = $region55
    $region54: #{lenet5_forward.3} parent=1 // pred_region
      %462 = vsyncadd [#allocation3], 25600
    $region55: #{lenet5_forward.3} parent=1 // pred_fallthru
      _
    %v463 = vld [vmem:[%s0] sm:$0xff]
    %v464 = vld [vmem:[%s0 + $0x8] sm:$0xff]
    %v465 = vld [vmem:[%s0 + $0x10] sm:$0xff]
    %v466 = vld [vmem:[%s0 + $0x18] sm:$0xff]
    %v467 = vld [vmem:[%s0 + $0x20] sm:$0xff]
    %v468 = vld [vmem:[%s0 + $0x28] sm:$0xff]
    %v469 = vld [vmem:[%s0 + $0x30] sm:$0xff]
    %v470 = vld [vmem:[%s1] sm:$0xff]
    %v471 = vld [vmem:[%s1 + $0x8] sm:$0xff]
    %v472 = vld [vmem:[%s1 + $0x10] sm:$0xff]
    %v473 = vld [vmem:[%s1 + $0x18] sm:$0xff]
    %v474 = vld [vmem:[%s1 + $0x20] sm:$0xff]
    %v475 = vld [vmem:[%s1 + $0x28] sm:$0xff]
    %v476 = vld [vmem:[%s1 + $0x30] sm:$0xff]
    %v477 = vld [vmem:[%s1 + $0x38] sm:$0xff]
    %v478 = vld [vmem:[%s1 + $0x40] sm:$0xff]
    %v479 = vld [vmem:[%s1 + $0x48] sm:$0xff]
    %v480 = vld [vmem:[%s1 + $0x50] sm:$0xff]
    %v481 = vld [vmem:[%s1 + $0x58] sm:$0xff]
    %v482 = vld [vmem:[%s1 + $0x60] sm:$0xff]
    %v483 = vld [vmem:[%s1 + $0x68] sm:$0xff]
    %v484 = vld [vmem:[%s1 + $0x70] sm:$0xff]
    %v485 = vld [vmem:[%s1 + $0x78] sm:$0xff]
    %v486 = vld [vmem:[%s1 + $0x80] sm:$0xff]
    %v487 = vld [vmem:[%s1 + $0x88] sm:$0xff]
    %v488 = vld [vmem:[%s1 + $0x90] sm:$0xff]
    %v489 = vld [vmem:[%s1 + $0x98] sm:$0xff]
    %v490 = vld [vmem:[%s1 + $0xa0] sm:$0xff]
    %v491 = vld [vmem:[%s1 + $0xa8] sm:$0xff]
    %v492 = vld [vmem:[%s1 + $0xb0] sm:$0xff]
    %v493 = vld [vmem:[%s1 + $0xb8] sm:$0xff]
    %v494 = vld [vmem:[%s1 + $0xc0] sm:$0xff]
    %v495 = vld [vmem:[%s1 + $0xc8] sm:$0xff]
    %v496 = vld [vmem:[%s1 + $0xd0] sm:$0xff]
    %v497 = vld [vmem:[%s1 + $0xd8] sm:$0xff]
    %v498 = vld [vmem:[%s1 + $0xe0] sm:$0xff]
    %v499 = vld [vmem:[%s1 + $0xe8] sm:$0xff]
    %v500 = vld [vmem:[%s1 + $0xf0] sm:$0xff]
    %v501 = vld [vmem:[%s1 + $0xf8] sm:$0xff]
    %v502 = vld [vmem:[%s1 + $0x100] sm:$0xff]
    %v503 = vld [vmem:[%s1 + $0x108] sm:$0xff]
    %v504 = vld [vmem:[%s1 + $0x110] sm:$0xff]
    %v505 = vld [vmem:[%s1 + $0x118] sm:$0xff]
    %v506 = vld [vmem:[%s1 + $0x120] sm:$0xff]
    %v507 = vld [vmem:[%s1 + $0x128] sm:$0xff]
    %v508 = vld [vmem:[%s1 + $0x130] sm:$0xff]
    %v509 = vld [vmem:[%s1 + $0x138] sm:$0xff]
    %v510 = vld [vmem:[%s1 + $0x140] sm:$0xff]
    %v511 = vld [vmem:[%s1 + $0x148] sm:$0xff]
    %v512 = vld [vmem:[%s1 + $0x150] sm:$0xff]
    %v513 = vld [vmem:[%s1 + $0x158] sm:$0xff]
    %v514 = vld [vmem:[%s1 + $0x160] sm:$0xff]
    %v515 = vld [vmem:[%s1 + $0x168] sm:$0xff]
    %v516 = vld [vmem:[%s1 + $0x170] sm:$0xff]
    %v517 = vld [vmem:[%s1 + $0x178] sm:$0xff]
    %v518 = vld [vmem:[%s1 + $0x180] sm:$0xff]
    %v519 = vld [vmem:[%s1 + $0x188] sm:$0xff]
    %v520 = vld [vmem:[%s1 + $0x190] sm:$0xff]
    %v521 = vld [vmem:[%s1 + $0x198] sm:$0xff]
    %v522 = vld [vmem:[%s1 + $0x1a0] sm:$0xff]
    %v523 = vld [vmem:[%s1 + $0x1a8] sm:$0xff]
    %v524 = vld [vmem:[%s1 + $0x1b0] sm:$0xff]
    %v525 = vld [vmem:[%s1 + $0x1b8] sm:$0xff]
    %v526 = vld [vmem:[%s1 + $0x1c0] sm:$0xff]
    %v527 = vld [vmem:[%s1 + $0x1c8] sm:$0xff]
    %v528 = vld [vmem:[%s1 + $0x1d0] sm:$0xff]
    %v529 = vld [vmem:[%s1 + $0x1d8] sm:$0xff]
    %v530 = vld [vmem:[%s1 + $0x1e0] sm:$0xff]
    %v531 = vld [vmem:[%s1 + $0x1e8] sm:$0xff]
    %v532 = vld [vmem:[%s1 + $0x1f0] sm:$0xff]
    %v533 = vld [vmem:[%s1 + $0x1f8] sm:$0xff]
    %v541 = vunpack.c.l.b16 %v463
    %v542 = vunpack.c.h.b16 %v463
    %v543 = vunpack.c.l.b16 %v464
    %v544 = vunpack.c.h.b16 %v464
    %v545 = vunpack.c.l.b16 %v465
    %v546 = vunpack.c.h.b16 %v465
    %v547 = vunpack.c.l.b16 %v466
    %v548 = vunpack.c.h.b16 %v466
    %v549 = vunpack.c.l.b16 %v467
    %v550 = vunpack.c.h.b16 %v467
    %v551 = vunpack.c.l.b16 %v468
    %v552 = vunpack.c.h.b16 %v468
    %v553 = vunpack.c.l.b16 %v469
    %v554 = vunpack.c.h.b16 %v469
    %v555 = vpack.c.b16 %v543, %v541
    %v556 = vpack.c.b16 %v544, %v542
    %v557 = vpack.c.b16 %v547, %v545
    %v558 = vpack.c.b16 %v548, %v546
    %v559 = vpack.c.b16 %v551, %v549
    %v560 = vpack.c.b16 %v552, %v550
    %v561 = vpack.c.b16 %v553, %v553
    %v562 = vpack.c.b16 %v554, %v554
    %v635 = vunpack.c.l.b16 %v470
    %v636 = vunpack.c.h.b16 %v470
    %v637 = vunpack.c.l.b16 %v471
    %v638 = vunpack.c.h.b16 %v471
    %v639 = vunpack.c.l.b16 %v472
    %v640 = vunpack.c.h.b16 %v472
    %v641 = vunpack.c.l.b16 %v473
    %v642 = vunpack.c.h.b16 %v473
    %v643 = vunpack.c.l.b16 %v474
    %v644 = vunpack.c.h.b16 %v474
    %v645 = vunpack.c.l.b16 %v475
    %v646 = vunpack.c.h.b16 %v475
    %v647 = vunpack.c.l.b16 %v476
    %v648 = vunpack.c.h.b16 %v476
    %v649 = vunpack.c.l.b16 %v477
    %v650 = vunpack.c.h.b16 %v477
    %v651 = vunpack.c.l.b16 %v478
    %v652 = vunpack.c.h.b16 %v478
    %v653 = vunpack.c.l.b16 %v479
    %v654 = vunpack.c.h.b16 %v479
    %v655 = vunpack.c.l.b16 %v480
    %v656 = vunpack.c.h.b16 %v480
    %v657 = vunpack.c.l.b16 %v481
    %v658 = vunpack.c.h.b16 %v481
    %v659 = vunpack.c.l.b16 %v482
    %v660 = vunpack.c.h.b16 %v482
    %v661 = vunpack.c.l.b16 %v483
    %v662 = vunpack.c.h.b16 %v483
    %v663 = vunpack.c.l.b16 %v484
    %v664 = vunpack.c.h.b16 %v484
    %v665 = vunpack.c.l.b16 %v485
    %v666 = vunpack.c.h.b16 %v485
    %v667 = vunpack.c.l.b16 %v486
    %v668 = vunpack.c.h.b16 %v486
    %v669 = vunpack.c.l.b16 %v487
    %v670 = vunpack.c.h.b16 %v487
    %v671 = vunpack.c.l.b16 %v488
    %v672 = vunpack.c.h.b16 %v488
    %v673 = vunpack.c.l.b16 %v489
    %v674 = vunpack.c.h.b16 %v489
    %v675 = vunpack.c.l.b16 %v490
    %v676 = vunpack.c.h.b16 %v490
    %v677 = vunpack.c.l.b16 %v491
    %v678 = vunpack.c.h.b16 %v491
    %v679 = vunpack.c.l.b16 %v492
    %v680 = vunpack.c.h.b16 %v492
    %v681 = vunpack.c.l.b16 %v493
    %v682 = vunpack.c.h.b16 %v493
    %v683 = vunpack.c.l.b16 %v494
    %v684 = vunpack.c.h.b16 %v494
    %v685 = vunpack.c.l.b16 %v495
    %v686 = vunpack.c.h.b16 %v495
    %v687 = vunpack.c.l.b16 %v496
    %v688 = vunpack.c.h.b16 %v496
    %v689 = vunpack.c.l.b16 %v497
    %v690 = vunpack.c.h.b16 %v497
    %v691 = vunpack.c.l.b16 %v498
    %v692 = vunpack.c.h.b16 %v498
    %v693 = vunpack.c.l.b16 %v499
    %v694 = vunpack.c.h.b16 %v499
    %v695 = vunpack.c.l.b16 %v500
    %v696 = vunpack.c.h.b16 %v500
    %v697 = vunpack.c.l.b16 %v501
    %v698 = vunpack.c.h.b16 %v501
    %v699 = vunpack.c.l.b16 %v502
    %v700 = vunpack.c.h.b16 %v502
    %v701 = vunpack.c.l.b16 %v503
    %v702 = vunpack.c.h.b16 %v503
    %v703 = vunpack.c.l.b16 %v504
    %v704 = vunpack.c.h.b16 %v504
    %v705 = vunpack.c.l.b16 %v505
    %v706 = vunpack.c.h.b16 %v505
    %v707 = vunpack.c.l.b16 %v506
    %v708 = vunpack.c.h.b16 %v506
    %v709 = vunpack.c.l.b16 %v507
    %v710 = vunpack.c.h.b16 %v507
    %v711 = vunpack.c.l.b16 %v508
    %v712 = vunpack.c.h.b16 %v508
    %v713 = vunpack.c.l.b16 %v509
    %v714 = vunpack.c.h.b16 %v509
    %v715 = vunpack.c.l.b16 %v510
    %v716 = vunpack.c.h.b16 %v510
    %v717 = vunpack.c.l.b16 %v511
    %v718 = vunpack.c.h.b16 %v511
    %v719 = vunpack.c.l.b16 %v512
    %v720 = vunpack.c.h.b16 %v512
    %v721 = vunpack.c.l.b16 %v513
    %v722 = vunpack.c.h.b16 %v513
    %v723 = vunpack.c.l.b16 %v514
    %v724 = vunpack.c.h.b16 %v514
    %v725 = vunpack.c.l.b16 %v515
    %v726 = vunpack.c.h.b16 %v515
    %v727 = vunpack.c.l.b16 %v516
    %v728 = vunpack.c.h.b16 %v516
    %v729 = vunpack.c.l.b16 %v517
    %v730 = vunpack.c.h.b16 %v517
    %v731 = vunpack.c.l.b16 %v518
    %v732 = vunpack.c.h.b16 %v518
    %v733 = vunpack.c.l.b16 %v519
    %v734 = vunpack.c.h.b16 %v519
    %v735 = vunpack.c.l.b16 %v520
    %v736 = vunpack.c.h.b16 %v520
    %v737 = vunpack.c.l.b16 %v521
    %v738 = vunpack.c.h.b16 %v521
    %v739 = vunpack.c.l.b16 %v522
    %v740 = vunpack.c.h.b16 %v522
    %v741 = vunpack.c.l.b16 %v523
    %v742 = vunpack.c.h.b16 %v523
    %v743 = vunpack.c.l.b16 %v524
    %v744 = vunpack.c.h.b16 %v524
    %v745 = vunpack.c.l.b16 %v525
    %v746 = vunpack.c.h.b16 %v525
    %v747 = vunpack.c.l.b16 %v526
    %v748 = vunpack.c.h.b16 %v526
    %v749 = vunpack.c.l.b16 %v527
    %v750 = vunpack.c.h.b16 %v527
    %v751 = vunpack.c.l.b16 %v528
    %v752 = vunpack.c.h.b16 %v528
    %v753 = vunpack.c.l.b16 %v529
    %v754 = vunpack.c.h.b16 %v529
    %v755 = vunpack.c.l.b16 %v530
    %v756 = vunpack.c.h.b16 %v530
    %v757 = vunpack.c.l.b16 %v531
    %v758 = vunpack.c.h.b16 %v531
    %v759 = vunpack.c.l.b16 %v532
    %v760 = vunpack.c.h.b16 %v532
    %v761 = vunpack.c.l.b16 %v533
    %v762 = vunpack.c.h.b16 %v533
    %v763 = vpack.c.b16 %v639, %v635
    %v764 = vpack.c.b16 %v640, %v636
    %v765 = vpack.c.b16 %v641, %v637
    %v766 = vpack.c.b16 %v642, %v638
    %v767 = vpack.c.b16 %v647, %v643
    %v768 = vpack.c.b16 %v648, %v644
    %v769 = vpack.c.b16 %v649, %v645
    %v770 = vpack.c.b16 %v650, %v646
    %v771 = vpack.c.b16 %v655, %v651
    %v772 = vpack.c.b16 %v656, %v652
    %v773 = vpack.c.b16 %v657, %v653
    %v774 = vpack.c.b16 %v658, %v654
    %v775 = vpack.c.b16 %v663, %v659
    %v776 = vpack.c.b16 %v664, %v660
    %v777 = vpack.c.b16 %v665, %v661
    %v778 = vpack.c.b16 %v666, %v662
    %v779 = vpack.c.b16 %v671, %v667
    %v780 = vpack.c.b16 %v672, %v668
    %v781 = vpack.c.b16 %v673, %v669
    %v782 = vpack.c.b16 %v674, %v670
    %v783 = vpack.c.b16 %v679, %v675
    %v784 = vpack.c.b16 %v680, %v676
    %v785 = vpack.c.b16 %v681, %v677
    %v786 = vpack.c.b16 %v682, %v678
    %v787 = vpack.c.b16 %v687, %v683
    %v788 = vpack.c.b16 %v688, %v684
    %v789 = vpack.c.b16 %v689, %v685
    %v790 = vpack.c.b16 %v690, %v686
    %v791 = vpack.c.b16 %v695, %v691
    %v792 = vpack.c.b16 %v696, %v692
    %v793 = vpack.c.b16 %v697, %v693
    %v794 = vpack.c.b16 %v698, %v694
    %v795 = vpack.c.b16 %v703, %v699
    %v796 = vpack.c.b16 %v704, %v700
    %v797 = vpack.c.b16 %v705, %v701
    %v798 = vpack.c.b16 %v706, %v702
    %v799 = vpack.c.b16 %v711, %v707
    %v800 = vpack.c.b16 %v712, %v708
    %v801 = vpack.c.b16 %v713, %v709
    %v802 = vpack.c.b16 %v714, %v710
    %v803 = vpack.c.b16 %v719, %v715
    %v804 = vpack.c.b16 %v720, %v716
    %v805 = vpack.c.b16 %v721, %v717
    %v806 = vpack.c.b16 %v722, %v718
    %v807 = vpack.c.b16 %v727, %v723
    %v808 = vpack.c.b16 %v728, %v724
    %v809 = vpack.c.b16 %v729, %v725
    %v810 = vpack.c.b16 %v730, %v726
    %v811 = vpack.c.b16 %v735, %v731
    %v812 = vpack.c.b16 %v736, %v732
    %v813 = vpack.c.b16 %v737, %v733
    %v814 = vpack.c.b16 %v738, %v734
    %v815 = vpack.c.b16 %v743, %v739
    %v816 = vpack.c.b16 %v744, %v740
    %v817 = vpack.c.b16 %v745, %v741
    %v818 = vpack.c.b16 %v746, %v742
    %v819 = vpack.c.b16 %v751, %v747
    %v820 = vpack.c.b16 %v752, %v748
    %v821 = vpack.c.b16 %v753, %v749
    %v822 = vpack.c.b16 %v754, %v750
    %v823 = vpack.c.b16 %v759, %v755
    %v824 = vpack.c.b16 %v760, %v756
    %v825 = vpack.c.b16 %v761, %v757
    %v826 = vpack.c.b16 %v762, %v758
    %891 = vmatprep.subr.bf16.mxu0 %v764
    %892 = vmatpush1.bf16.msra.mxu0 %v763
    %893 = vmatprep.subr.bf16.mxu0 %v768
    %894 = vmatpush1.bf16.msra.mxu0 %v767
    %895 = vmatprep.subr.bf16.mxu0 %v772
    %896 = vmatpush1.bf16.msra.mxu0 %v771
    %897 = vmatprep.subr.bf16.mxu0 %v776
    %898 = vmatpush1.bf16.msra.mxu0 %v775
    %899 = vmatprep.subr.bf16.mxu0 %v780
    %900 = vmatpush1.bf16.msra.mxu0 %v779
    %901 = vmatprep.subr.bf16.mxu0 %v784
    %902 = vmatpush1.bf16.msra.mxu0 %v783
    %903 = vmatprep.subr.bf16.mxu0 %v788
    %904 = vmatpush1.bf16.msra.mxu0 %v787
    %905 = vmatprep.subr.bf16.mxu0 %v792
    %906 = vmatpush1.bf16.msra.mxu0 %v791
    %907 = vmatprep.subr.bf16.mxu0 %v796
    %908 = vmatpush1.bf16.msra.mxu0 %v795
    %909 = vmatprep.subr.bf16.mxu0 %v800
    %910 = vmatpush1.bf16.msra.mxu0 %v799
    %911 = vmatprep.subr.bf16.mxu0 %v804
    %912 = vmatpush1.bf16.msra.mxu0 %v803
    %913 = vmatprep.subr.bf16.mxu0 %v808
    %914 = vmatpush1.bf16.msra.mxu0 %v807
    %915 = vmatprep.subr.bf16.mxu0 %v812
    %916 = vmatpush1.bf16.msra.mxu0 %v811
    %917 = vmatprep.subr.bf16.mxu0 %v816
    %918 = vmatpush1.bf16.msra.mxu0 %v815
    %919 = vmatprep.subr.bf16.mxu0 %v820
    %920 = vmatpush1.bf16.msra.mxu0 %v819
    %921 = vmatprep.subr.bf16.mxu0 %v824
    %922 = vmatpush1.bf16.msra.mxu0 %v823
    %923 = vmatprep.mubr.bf16.mxu0 %v556
    %924 = vmatmul.mubr.bf16.gmra.mrb[0].mxu0 %v555
    %v925 = vpop.f32.mrb[0].mxu0
    %v926 = vadd.f32 0.0, %v925
    %v927 = vpop.f32.mrb[0].mxu0
    %v928 = vadd.f32 0.0, %v927
    %v929 = vpop.f32.mrb[0].mxu0
    %v930 = vadd.f32 0.0, %v929
    %v931 = vpop.f32.mrb[0].mxu0
    %v932 = vadd.f32 0.0, %v931
    %933 = vmatprep.mubr.bf16.mxu0 %v558
    %934 = vmatmul.mubr.bf16.gmra.mrb[0].mxu0 %v557
    %v935 = vpop.f32.mrb[0].mxu0
    %v936 = vadd.f32 0.0, %v935
    %v937 = vpop.f32.mrb[0].mxu0
    %v938 = vadd.f32 0.0, %v937
    %v939 = vpop.f32.mrb[0].mxu0
    %v940 = vadd.f32 0.0, %v939
    %v941 = vpop.f32.mrb[0].mxu0
    %v942 = vadd.f32 0.0, %v941
    %943 = vmatprep.mubr.bf16.mxu0 %v560
    %944 = vmatmul.mubr.bf16.gmra.mrb[0].mxu0 %v559
    %v945 = vpop.f32.mrb[0].mxu0
    %v946 = vadd.f32 0.0, %v945
    %v947 = vpop.f32.mrb[0].mxu0
    %v948 = vadd.f32 0.0, %v947
    %v949 = vpop.f32.mrb[0].mxu0
    %v950 = vadd.f32 0.0, %v949
    %v951 = vpop.f32.mrb[0].mxu0
    %v952 = vadd.f32 0.0, %v951
    %953 = vmatprep.mubr.bf16.mxu0 %v562
    %954 = vmatmul.mubr.bf16.gmra.mrb[0].mxu0 %v561
    %v955 = vpop.f32.mrb[0].mxu0
    %v956 = vadd.f32 0.0, %v955
    %v957 = vpop.f32.mrb[0].mxu0
    %v958 = vadd.f32 0.0, %v957
    %v959 = vpop.f32.mrb[0].mxu0
    %v960 = vpop.f32.mrb[0].mxu0
    %961 = vdwg.mxu0
    %962 = vmatprep.subr.bf16.mxu0 %v766
    %963 = vmatpush1.bf16.msra.mxu0 %v765
    %964 = vmatprep.subr.bf16.mxu0 %v770
    %965 = vmatpush1.bf16.msra.mxu0 %v769
    %966 = vmatprep.subr.bf16.mxu0 %v774
    %967 = vmatpush1.bf16.msra.mxu0 %v773
    %968 = vmatprep.subr.bf16.mxu0 %v778
    %969 = vmatpush1.bf16.msra.mxu0 %v777
    %970 = vmatprep.subr.bf16.mxu0 %v782
    %971 = vmatpush1.bf16.msra.mxu0 %v781
    %972 = vmatprep.subr.bf16.mxu0 %v786
    %973 = vmatpush1.bf16.msra.mxu0 %v785
    %974 = vmatprep.subr.bf16.mxu0 %v790
    %975 = vmatpush1.bf16.msra.mxu0 %v789
    %976 = vmatprep.subr.bf16.mxu0 %v794
    %977 = vmatpush1.bf16.msra.mxu0 %v793
    %978 = vmatprep.subr.bf16.mxu0 %v798
    %979 = vmatpush1.bf16.msra.mxu0 %v797
    %980 = vmatprep.subr.bf16.mxu0 %v802
    %981 = vmatpush1.bf16.msra.mxu0 %v801
    %982 = vmatprep.subr.bf16.mxu0 %v806
    %983 = vmatpush1.bf16.msra.mxu0 %v805
    %984 = vmatprep.subr.bf16.mxu0 %v810
    %985 = vmatpush1.bf16.msra.mxu0 %v809
    %986 = vmatprep.subr.bf16.mxu0 %v814
    %987 = vmatpush1.bf16.msra.mxu0 %v813
    %988 = vmatprep.subr.bf16.mxu0 %v818
    %989 = vmatpush1.bf16.msra.mxu0 %v817
    %990 = vmatprep.subr.bf16.mxu0 %v822
    %991 = vmatpush1.bf16.msra.mxu0 %v821
    %992 = vmatprep.subr.bf16.mxu0 %v826
    %993 = vmatpush1.bf16.msra.mxu0 %v825
    %994 = vmatprep.mubr.bf16.mxu0 %v556
    %995 = vmatmul.mubr.bf16.gmra.mrb[0].mxu0 %v555
    %v996 = vpop.f32.mrb[0].mxu0
    %v997 = vadd.f32 0.0, %v996
    %v998 = vpop.f32.mrb[0].mxu0
    %v999 = vadd.f32 0.0, %v998
    %v1000 = vpop.f32.mrb[0].mxu0
    %v1001 = vadd.f32 0.0, %v1000
    %v1002 = vpop.f32.mrb[0].mxu0
    %v1003 = vadd.f32 0.0, %v1002
    %1004 = vmatprep.mubr.bf16.mxu0 %v558
    %1005 = vmatmul.mubr.bf16.gmra.mrb[0].mxu0 %v557
    %v1006 = vpop.f32.mrb[0].mxu0
    %v1007 = vadd.f32 0.0, %v1006
    %v1008 = vpop.f32.mrb[0].mxu0
    %v1009 = vadd.f32 0.0, %v1008
    %v1010 = vpop.f32.mrb[0].mxu0
    %v1011 = vadd.f32 0.0, %v1010
    %v1012 = vpop.f32.mrb[0].mxu0
    %v1013 = vadd.f32 0.0, %v1012
    %1014 = vmatprep.mubr.bf16.mxu0 %v560
    %1015 = vmatmul.mubr.bf16.gmra.mrb[0].mxu0 %v559
    %v1016 = vpop.f32.mrb[0].mxu0
    %v1017 = vadd.f32 0.0, %v1016
    %v1018 = vpop.f32.mrb[0].mxu0
    %v1019 = vadd.f32 0.0, %v1018
    %v1020 = vpop.f32.mrb[0].mxu0
    %v1021 = vadd.f32 0.0, %v1020
    %v1022 = vpop.f32.mrb[0].mxu0
    %v1023 = vadd.f32 0.0, %v1022
    %1024 = vmatprep.mubr.bf16.mxu0 %v562
    %1025 = vmatmul.mubr.bf16.gmra.mrb[0].mxu0 %v561
    %v1026 = vpop.f32.mrb[0].mxu0
    %v1027 = vadd.f32 0.0, %v1026
    %v1028 = vpop.f32.mrb[0].mxu0
    %v1029 = vadd.f32 0.0, %v1028
    %v1030 = vpop.f32.mrb[0].mxu0
    %v1031 = vpop.f32.mrb[0].mxu0
    %1032 = vdwg.mxu0
    %v1033 = vmax.f32 %v926, %v928
    %v1034 = vmax.f32 %v930, %v932
    %v1035 = vmax.f32 %v936, %v938
    %v1036 = vmax.f32 %v940, %v942
    %v1037 = vmax.f32 %v946, %v948
    %v1038 = vmax.f32 %v950, %v952
    %v1039 = vmax.f32 %v956, %v958
    %v1040 = vmax.f32 %v997, %v999
    %v1041 = vmax.f32 %v1001, %v1003
    %v1042 = vmax.f32 %v1007, %v1009
    %v1043 = vmax.f32 %v1011, %v1013
    %v1044 = vmax.f32 %v1017, %v1019
    %v1045 = vmax.f32 %v1021, %v1023
    %v1046 = vmax.f32 %v1027, %v1029
    %v1047 = vmax.f32 %v1033, %v1040
    %v1048 = vmax.f32 %v1034, %v1041
    %v1049 = vmax.f32 %v1035, %v1042
    %v1050 = vmax.f32 %v1036, %v1043
    %v1051 = vmax.f32 %v1037, %v1044
    %v1052 = vmax.f32 %v1038, %v1045
    %v1053 = vmax.f32 %v1039, %v1046
    %v1054 = vld [vmem:[%s2] sm:$0x1]
    %v1056 = vlaneseq
    %v1057 = vshrl.u32 %v1056, 7
    %v1058 = vsub.s32 0, %v1057
    %v1059 = vrot.slane %v1054, %v1058
    %v1061 = vadd.f32 %v1047, %v1059
    %v1062 = vadd.f32 %v1048, %v1059
    %v1063 = vadd.f32 %v1049, %v1059
    %v1064 = vadd.f32 %v1050, %v1059
    %v1065 = vadd.f32 %v1051, %v1059
    %v1066 = vadd.f32 %v1052, %v1059
    %v1067 = vadd.f32 %v1053, %v1059
    %v1068 = vmax.f32 %v1061, 0.0
    %v1069 = vmax.f32 %v1062, 0.0
    %v1070 = vmax.f32 %v1063, 0.0
    %v1071 = vmax.f32 %v1064, 0.0
    %v1072 = vmax.f32 %v1065, 0.0
    %v1073 = vmax.f32 %v1066, 0.0
    %v1074 = vmax.f32 %v1067, 0.0
    %s1075 = smul.u32 4, 25
    %s1076 = smul.u32 %s1075, 16
    %s1077 = smul.u32 %s1076, 1
    %s1078 = sshll.u32 %s1077, 4
    %1079 = dma.done [#allocation3], %s1078
    %v1080 = vpack.c.bf16 %v1068, %v1068
    %v1081 = vld [vmem:[#allocation2] sm:$0xff]
    %v1082 = vld [vmem:[#allocation2 + $0x8] sm:$0xff]
    %v1083 = vld [vmem:[#allocation2 + $0x10] sm:$0xff]
    %v1084 = vld [vmem:[#allocation2 + $0x18] sm:$0xff]
    %v1085 = vld [vmem:[#allocation2 + $0x20] sm:$0xff]
    %v1086 = vld [vmem:[#allocation2 + $0x28] sm:$0xff]
    %v1087 = vld [vmem:[#allocation2 + $0x30] sm:$0xff]
    %v1088 = vld [vmem:[#allocation2 + $0x38] sm:$0xff]
    %s1089 = scalar_lea.vmem [#allocation2], 64
    %v1090 = vld [vmem:[%s1089] sm:$0xff]
    %v1091 = vld [vmem:[%s1089 + $0x8] sm:$0xff]
    %v1092 = vld [vmem:[%s1089 + $0x10] sm:$0xff]
    %v1093 = vld [vmem:[%s1089 + $0x18] sm:$0xff]
    %v1094 = vld [vmem:[%s1089 + $0x20] sm:$0xff]
    %v1095 = vld [vmem:[%s1089 + $0x28] sm:$0xff]
    %v1096 = vld [vmem:[%s1089 + $0x30] sm:$0xff]
    %v1097 = vld [vmem:[%s1089 + $0x38] sm:$0xff]
    %v1099 = vrot.slane %v1080, 1
    %1101 = vmatprep.subr.bf16.mxu0 0
    %1102 = vmatpush1.bf16.msra.mxu0 %v1090
    %1103 = vmatprep.subr.bf16.mxu0 0
    %1104 = vmatpush1.bf16.msra.mxu0 %v1091
    %1105 = vmatprep.subr.bf16.mxu0 0
    %1106 = vmatpush1.bf16.msra.mxu0 %v1092
    %1107 = vmatprep.subr.bf16.mxu0 0
    %1108 = vmatpush1.bf16.msra.mxu0 %v1093
    %1109 = vmatprep.subr.bf16.mxu0 0
    %1110 = vmatpush1.bf16.msra.mxu0 %v1094
    %1111 = vmatprep.subr.bf16.mxu0 0
    %1112 = vmatpush1.bf16.msra.mxu0 %v1095
    %1113 = vmatprep.subr.bf16.mxu0 0
    %1114 = vmatpush1.bf16.msra.mxu0 %v1096
    %1115 = vmatprep.subr.bf16.mxu0 0
    %1116 = vmatpush1.bf16.msra.mxu0 %v1097
    %1117 = vmatprep.subr.bf16.mxu0 0
    %1118 = vmatpush1.bf16.msra.mxu0 0
    %1119 = vmatprep.subr.bf16.mxu0 0
    %1120 = vmatpush1.bf16.msra.mxu0 0
    %1121 = vmatprep.subr.bf16.mxu0 0
    %1122 = vmatpush1.bf16.msra.mxu0 0
    %1123 = vmatprep.subr.bf16.mxu0 0
    %1124 = vmatpush1.bf16.msra.mxu0 0
    %1125 = vmatprep.subr.bf16.mxu0 0
    %1126 = vmatpush1.bf16.msra.mxu0 0
    %1127 = vmatprep.subr.bf16.mxu0 0
    %1128 = vmatpush1.bf16.msra.mxu0 0
    %1129 = vmatprep.subr.bf16.mxu0 0
    %1130 = vmatpush1.bf16.msra.mxu0 0
    %1131 = vmatprep.subr.bf16.mxu0 0
    %1132 = vmatpush1.bf16.msra.mxu0 0
    %1133 = vmatprep.mubr.bf16.mxu0 0
    %1134 = vmatmul.mubr.bf16.gmra.mrb[0].mxu0 %v1099
    %v1135 = vpop.f32.mrb[0].mxu0
    %v1136 = vadd.f32 0.0, %v1135
    %v1137 = vpop.f32.mrb[0].mxu0
    %v1138 = vpop.f32.mrb[0].mxu0
    %v1139 = vpop.f32.mrb[0].mxu0
    %1140 = vdwg.mxu0
    %1141 = vmatprep.subr.bf16.mxu0 0
    %1142 = vmatpush1.bf16.msra.mxu0 %v1081
    %1143 = vmatprep.subr.bf16.mxu0 0
    %1144 = vmatpush1.bf16.msra.mxu0 %v1082
    %1145 = vmatprep.subr.bf16.mxu0 0
    %1146 = vmatpush1.bf16.msra.mxu0 %v1083
    %1147 = vmatprep.subr.bf16.mxu0 0
    %1148 = vmatpush1.bf16.msra.mxu0 %v1084
    %1149 = vmatprep.subr.bf16.mxu0 0
    %1150 = vmatpush1.bf16.msra.mxu0 %v1085
    %1151 = vmatprep.subr.bf16.mxu0 0
    %1152 = vmatpush1.bf16.msra.mxu0 %v1086
    %1153 = vmatprep.subr.bf16.mxu0 0
    %1154 = vmatpush1.bf16.msra.mxu0 %v1087
    %1155 = vmatprep.subr.bf16.mxu0 0
    %1156 = vmatpush1.bf16.msra.mxu0 %v1088
    %1157 = vmatprep.subr.bf16.mxu0 0
    %1158 = vmatpush1.bf16.msra.mxu0 0
    %1159 = vmatprep.subr.bf16.mxu0 0
    %1160 = vmatpush1.bf16.msra.mxu0 0
    %1161 = vmatprep.subr.bf16.mxu0 0
    %1162 = vmatpush1.bf16.msra.mxu0 0
    %1163 = vmatprep.subr.bf16.mxu0 0
    %1164 = vmatpush1.bf16.msra.mxu0 0
    %1165 = vmatprep.subr.bf16.mxu0 0
    %1166 = vmatpush1.bf16.msra.mxu0 0
    %1167 = vmatprep.subr.bf16.mxu0 0
    %1168 = vmatpush1.bf16.msra.mxu0 0
    %1169 = vmatprep.subr.bf16.mxu0 0
    %1170 = vmatpush1.bf16.msra.mxu0 0
    %1171 = vmatprep.subr.bf16.mxu0 0
    %1172 = vmatpush1.bf16.msra.mxu0 0
    %1173 = vmatprep.mubr.bf16.mxu0 0
    %1174 = vmatmul.mubr.bf16.gmra.mrb[0].mxu0 %v1080
    %v1175 = vpop.f32.mrb[0].mxu0
    %v1176 = vadd.f32 %v1136, %v1175
    %v1177 = vpop.f32.mrb[0].mxu0
    %v1178 = vpop.f32.mrb[0].mxu0
    %v1179 = vpop.f32.mrb[0].mxu0
    %1180 = vdwg.mxu0
    %s1181 = scalar_lea.vmem [#allocation2], 128
    %v1182 = vld [vmem:[%s1181] sm:$0xff]
    %v1183 = vld [vmem:[%s1181 + $0x8] sm:$0xff]
    %v1184 = vld [vmem:[%s1181 + $0x10] sm:$0xff]
    %v1185 = vld [vmem:[%s1181 + $0x18] sm:$0xff]
    %v1186 = vld [vmem:[%s1181 + $0x20] sm:$0xff]
    %v1187 = vld [vmem:[%s1181 + $0x28] sm:$0xff]
    %v1188 = vld [vmem:[%s1181 + $0x30] sm:$0xff]
    %v1189 = vld [vmem:[%s1181 + $0x38] sm:$0xff]
    %v1190 = vrot.slane %v1080, 2
    %1192 = vmatprep.subr.bf16.mxu0 0
    %1193 = vmatpush1.bf16.msra.mxu0 %v1182
    %1194 = vmatprep.subr.bf16.mxu0 0
    %1195 = vmatpush1.bf16.msra.mxu0 %v1183
    %1196 = vmatprep.subr.bf16.mxu0 0
    %1197 = vmatpush1.bf16.msra.mxu0 %v1184
    %1198 = vmatprep.subr.bf16.mxu0 0
    %1199 = vmatpush1.bf16.msra.mxu0 %v1185
    %1200 = vmatprep.subr.bf16.mxu0 0
    %1201 = vmatpush1.bf16.msra.mxu0 %v1186
    %1202 = vmatprep.subr.bf16.mxu0 0
    %1203 = vmatpush1.bf16.msra.mxu0 %v1187
    %1204 = vmatprep.subr.bf16.mxu0 0
    %1205 = vmatpush1.bf16.msra.mxu0 %v1188
    %1206 = vmatprep.subr.bf16.mxu0 0
    %1207 = vmatpush1.bf16.msra.mxu0 %v1189
    %1208 = vmatprep.subr.bf16.mxu0 0
    %1209 = vmatpush1.bf16.msra.mxu0 0
    %1210 = vmatprep.subr.bf16.mxu0 0
    %1211 = vmatpush1.bf16.msra.mxu0 0
    %1212 = vmatprep.subr.bf16.mxu0 0
    %1213 = vmatpush1.bf16.msra.mxu0 0
    %1214 = vmatprep.subr.bf16.mxu0 0
    %1215 = vmatpush1.bf16.msra.mxu0 0
    %1216 = vmatprep.subr.bf16.mxu0 0
    %1217 = vmatpush1.bf16.msra.mxu0 0
    %1218 = vmatprep.subr.bf16.mxu0 0
    %1219 = vmatpush1.bf16.msra.mxu0 0
    %1220 = vmatprep.subr.bf16.mxu0 0
    %1221 = vmatpush1.bf16.msra.mxu0 0
    %1222 = vmatprep.subr.bf16.mxu0 0
    %1223 = vmatpush1.bf16.msra.mxu0 0
    %1224 = vmatprep.mubr.bf16.mxu0 0
    %1225 = vmatmul.mubr.bf16.gmra.mrb[0].mxu0 %v1190
    %v1226 = vpop.f32.mrb[0].mxu0
    %v1227 = vadd.f32 0.0, %v1226
    %v1228 = vpop.f32.mrb[0].mxu0
    %v1229 = vpop.f32.mrb[0].mxu0
    %v1230 = vpop.f32.mrb[0].mxu0
    %1231 = vdwg.mxu0
    %v1232 = vadd.f32 %v1176, %v1227
    %s1233 = scalar_lea.vmem [#allocation2], 192
    %v1234 = vld [vmem:[%s1233] sm:$0xff]
    %v1235 = vld [vmem:[%s1233 + $0x8] sm:$0xff]
    %v1236 = vld [vmem:[%s1233 + $0x10] sm:$0xff]
    %v1237 = vld [vmem:[%s1233 + $0x18] sm:$0xff]
    %v1238 = vld [vmem:[%s1233 + $0x20] sm:$0xff]
    %v1239 = vld [vmem:[%s1233 + $0x28] sm:$0xff]
    %v1240 = vld [vmem:[%s1233 + $0x30] sm:$0xff]
    %v1241 = vld [vmem:[%s1233 + $0x38] sm:$0xff]
    %v1242 = vrot.slane %v1080, 3
    %1244 = vmatprep.subr.bf16.mxu0 0
    %1245 = vmatpush1.bf16.msra.mxu0 %v1234
    %1246 = vmatprep.subr.bf16.mxu0 0
    %1247 = vmatpush1.bf16.msra.mxu0 %v1235
    %1248 = vmatprep.subr.bf16.mxu0 0
    %1249 = vmatpush1.bf16.msra.mxu0 %v1236
    %1250 = vmatprep.subr.bf16.mxu0 0
    %1251 = vmatpush1.bf16.msra.mxu0 %v1237
    %1252 = vmatprep.subr.bf16.mxu0 0
    %1253 = vmatpush1.bf16.msra.mxu0 %v1238
    %1254 = vmatprep.subr.bf16.mxu0 0
    %1255 = vmatpush1.bf16.msra.mxu0 %v1239
    %1256 = vmatprep.subr.bf16.mxu0 0
    %1257 = vmatpush1.bf16.msra.mxu0 %v1240
    %1258 = vmatprep.subr.bf16.mxu0 0
    %1259 = vmatpush1.bf16.msra.mxu0 %v1241
    %1260 = vmatprep.subr.bf16.mxu0 0
    %1261 = vmatpush1.bf16.msra.mxu0 0
    %1262 = vmatprep.subr.bf16.mxu0 0
    %1263 = vmatpush1.bf16.msra.mxu0 0
    %1264 = vmatprep.subr.bf16.mxu0 0
    %1265 = vmatpush1.bf16.msra.mxu0 0
    %1266 = vmatprep.subr.bf16.mxu0 0
    %1267 = vmatpush1.bf16.msra.mxu0 0
    %1268 = vmatprep.subr.bf16.mxu0 0
    %1269 = vmatpush1.bf16.msra.mxu0 0
    %1270 = vmatprep.subr.bf16.mxu0 0
    %1271 = vmatpush1.bf16.msra.mxu0 0
    %1272 = vmatprep.subr.bf16.mxu0 0
    %1273 = vmatpush1.bf16.msra.mxu0 0
    %1274 = vmatprep.subr.bf16.mxu0 0
    %1275 = vmatpush1.bf16.msra.mxu0 0
    %1276 = vmatprep.mubr.bf16.mxu0 0
    %1277 = vmatmul.mubr.bf16.gmra.mrb[0].mxu0 %v1242
    %v1278 = vpop.f32.mrb[0].mxu0
    %v1279 = vadd.f32 0.0, %v1278
    %v1280 = vpop.f32.mrb[0].mxu0
    %v1281 = vpop.f32.mrb[0].mxu0
    %v1282 = vpop.f32.mrb[0].mxu0
    %1283 = vdwg.mxu0
    %v1284 = vadd.f32 %v1232, %v1279
    %v1285 = vpack.c.bf16 %v1069, %v1069
    %s1286 = scalar_lea.vmem [#allocation2], 256
    %v1287 = vld [vmem:[%s1286] sm:$0xff]
    %v1288 = vld [vmem:[%s1286 + $0x8] sm:$0xff]
    %v1289 = vld [vmem:[%s1286 + $0x10] sm:$0xff]
    %v1290 = vld [vmem:[%s1286 + $0x18] sm:$0xff]
    %v1291 = vld [vmem:[%s1286 + $0x20] sm:$0xff]
    %v1292 = vld [vmem:[%s1286 + $0x28] sm:$0xff]
    %v1293 = vld [vmem:[%s1286 + $0x30] sm:$0xff]
    %v1294 = vld [vmem:[%s1286 + $0x38] sm:$0xff]
    %1295 = vmatprep.subr.bf16.mxu0 0
    %1296 = vmatpush1.bf16.msra.mxu0 %v1287
    %1297 = vmatprep.subr.bf16.mxu0 0
    %1298 = vmatpush1.bf16.msra.mxu0 %v1288
    %1299 = vmatprep.subr.bf16.mxu0 0
    %1300 = vmatpush1.bf16.msra.mxu0 %v1289
    %1301 = vmatprep.subr.bf16.mxu0 0
    %1302 = vmatpush1.bf16.msra.mxu0 %v1290
    %1303 = vmatprep.subr.bf16.mxu0 0
    %1304 = vmatpush1.bf16.msra.mxu0 %v1291
    %1305 = vmatprep.subr.bf16.mxu0 0
    %1306 = vmatpush1.bf16.msra.mxu0 %v1292
    %1307 = vmatprep.subr.bf16.mxu0 0
    %1308 = vmatpush1.bf16.msra.mxu0 %v1293
    %1309 = vmatprep.subr.bf16.mxu0 0
    %1310 = vmatpush1.bf16.msra.mxu0 %v1294
    %1311 = vmatprep.subr.bf16.mxu0 0
    %1312 = vmatpush1.bf16.msra.mxu0 0
    %1313 = vmatprep.subr.bf16.mxu0 0
    %1314 = vmatpush1.bf16.msra.mxu0 0
    %1315 = vmatprep.subr.bf16.mxu0 0
    %1316 = vmatpush1.bf16.msra.mxu0 0
    %1317 = vmatprep.subr.bf16.mxu0 0
    %1318 = vmatpush1.bf16.msra.mxu0 0
    %1319 = vmatprep.subr.bf16.mxu0 0
    %1320 = vmatpush1.bf16.msra.mxu0 0
    %1321 = vmatprep.subr.bf16.mxu0 0
    %1322 = vmatpush1.bf16.msra.mxu0 0
    %1323 = vmatprep.subr.bf16.mxu0 0
    %1324 = vmatpush1.bf16.msra.mxu0 0
    %1325 = vmatprep.subr.bf16.mxu0 0
    %1326 = vmatpush1.bf16.msra.mxu0 0
    %1327 = vmatprep.mubr.bf16.mxu0 0
    %1328 = vmatmul.mubr.bf16.gmra.mrb[0].mxu0 %v1285
    %v1329 = vpop.f32.mrb[0].mxu0
    %v1330 = vadd.f32 0.0, %v1329
    %v1331 = vpop.f32.mrb[0].mxu0
    %v1332 = vpop.f32.mrb[0].mxu0
    %v1333 = vpop.f32.mrb[0].mxu0
    %1334 = vdwg.mxu0
    %v1335 = vadd.f32 %v1284, %v1330
    %s1336 = scalar_lea.vmem [#allocation2], 320
    %v1337 = vld [vmem:[%s1336] sm:$0xff]
    %v1338 = vld [vmem:[%s1336 + $0x8] sm:$0xff]
    %v1339 = vld [vmem:[%s1336 + $0x10] sm:$0xff]
    %v1340 = vld [vmem:[%s1336 + $0x18] sm:$0xff]
    %v1341 = vld [vmem:[%s1336 + $0x20] sm:$0xff]
    %v1342 = vld [vmem:[%s1336 + $0x28] sm:$0xff]
    %v1343 = vld [vmem:[%s1336 + $0x30] sm:$0xff]
    %v1344 = vld [vmem:[%s1336 + $0x38] sm:$0xff]
    %v1346 = vrot.slane %v1285, 1
    %1348 = vmatprep.subr.bf16.mxu0 0
    %1349 = vmatpush1.bf16.msra.mxu0 %v1337
    %1350 = vmatprep.subr.bf16.mxu0 0
    %1351 = vmatpush1.bf16.msra.mxu0 %v1338
    %1352 = vmatprep.subr.bf16.mxu0 0
    %1353 = vmatpush1.bf16.msra.mxu0 %v1339
    %1354 = vmatprep.subr.bf16.mxu0 0
    %1355 = vmatpush1.bf16.msra.mxu0 %v1340
    %1356 = vmatprep.subr.bf16.mxu0 0
    %1357 = vmatpush1.bf16.msra.mxu0 %v1341
    %1358 = vmatprep.subr.bf16.mxu0 0
    %1359 = vmatpush1.bf16.msra.mxu0 %v1342
    %1360 = vmatprep.subr.bf16.mxu0 0
    %1361 = vmatpush1.bf16.msra.mxu0 %v1343
    %1362 = vmatprep.subr.bf16.mxu0 0
    %1363 = vmatpush1.bf16.msra.mxu0 %v1344
    %1364 = vmatprep.subr.bf16.mxu0 0
    %1365 = vmatpush1.bf16.msra.mxu0 0
    %1366 = vmatprep.subr.bf16.mxu0 0
    %1367 = vmatpush1.bf16.msra.mxu0 0
    %1368 = vmatprep.subr.bf16.mxu0 0
    %1369 = vmatpush1.bf16.msra.mxu0 0
    %1370 = vmatprep.subr.bf16.mxu0 0
    %1371 = vmatpush1.bf16.msra.mxu0 0
    %1372 = vmatprep.subr.bf16.mxu0 0
    %1373 = vmatpush1.bf16.msra.mxu0 0
    %1374 = vmatprep.subr.bf16.mxu0 0
    %1375 = vmatpush1.bf16.msra.mxu0 0
    %1376 = vmatprep.subr.bf16.mxu0 0
    %1377 = vmatpush1.bf16.msra.mxu0 0
    %1378 = vmatprep.subr.bf16.mxu0 0
    %1379 = vmatpush1.bf16.msra.mxu0 0
    %1380 = vmatprep.mubr.bf16.mxu0 0
    %1381 = vmatmul.mubr.bf16.gmra.mrb[0].mxu0 %v1346
    %v1382 = vpop.f32.mrb[0].mxu0
    %v1383 = vadd.f32 0.0, %v1382
    %v1384 = vpop.f32.mrb[0].mxu0
    %v1385 = vpop.f32.mrb[0].mxu0
    %v1386 = vpop.f32.mrb[0].mxu0
    %1387 = vdwg.mxu0
    %v1388 = vadd.f32 %v1335, %v1383
    %s1389 = scalar_lea.vmem [#allocation2], 384
    %v1390 = vld [vmem:[%s1389] sm:$0xff]
    %v1391 = vld [vmem:[%s1389 + $0x8] sm:$0xff]
    %v1392 = vld [vmem:[%s1389 + $0x10] sm:$0xff]
    %v1393 = vld [vmem:[%s1389 + $0x18] sm:$0xff]
    %v1394 = vld [vmem:[%s1389 + $0x20] sm:$0xff]
    %v1395 = vld [vmem:[%s1389 + $0x28] sm:$0xff]
    %v1396 = vld [vmem:[%s1389 + $0x30] sm:$0xff]
    %v1397 = vld [vmem:[%s1389 + $0x38] sm:$0xff]
    %v1398 = vrot.slane %v1285, 2
    %1400 = vmatprep.subr.bf16.mxu0 0
    %1401 = vmatpush1.bf16.msra.mxu0 %v1390
    %1402 = vmatprep.subr.bf16.mxu0 0
    %1403 = vmatpush1.bf16.msra.mxu0 %v1391
    %1404 = vmatprep.subr.bf16.mxu0 0
    %1405 = vmatpush1.bf16.msra.mxu0 %v1392
    %1406 = vmatprep.subr.bf16.mxu0 0
    %1407 = vmatpush1.bf16.msra.mxu0 %v1393
    %1408 = vmatprep.subr.bf16.mxu0 0
    %1409 = vmatpush1.bf16.msra.mxu0 %v1394
    %1410 = vmatprep.subr.bf16.mxu0 0
    %1411 = vmatpush1.bf16.msra.mxu0 %v1395
    %1412 = vmatprep.subr.bf16.mxu0 0
    %1413 = vmatpush1.bf16.msra.mxu0 %v1396
    %1414 = vmatprep.subr.bf16.mxu0 0
    %1415 = vmatpush1.bf16.msra.mxu0 %v1397
    %1416 = vmatprep.subr.bf16.mxu0 0
    %1417 = vmatpush1.bf16.msra.mxu0 0
    %1418 = vmatprep.subr.bf16.mxu0 0
    %1419 = vmatpush1.bf16.msra.mxu0 0
    %1420 = vmatprep.subr.bf16.mxu0 0
    %1421 = vmatpush1.bf16.msra.mxu0 0
    %1422 = vmatprep.subr.bf16.mxu0 0
    %1423 = vmatpush1.bf16.msra.mxu0 0
    %1424 = vmatprep.subr.bf16.mxu0 0
    %1425 = vmatpush1.bf16.msra.mxu0 0
    %1426 = vmatprep.subr.bf16.mxu0 0
    %1427 = vmatpush1.bf16.msra.mxu0 0
    %1428 = vmatprep.subr.bf16.mxu0 0
    %1429 = vmatpush1.bf16.msra.mxu0 0
    %1430 = vmatprep.subr.bf16.mxu0 0
    %1431 = vmatpush1.bf16.msra.mxu0 0
    %1432 = vmatprep.mubr.bf16.mxu0 0
    %1433 = vmatmul.mubr.bf16.gmra.mrb[0].mxu0 %v1398
    %v1434 = vpop.f32.mrb[0].mxu0
    %v1435 = vadd.f32 0.0, %v1434
    %v1436 = vpop.f32.mrb[0].mxu0
    %v1437 = vpop.f32.mrb[0].mxu0
    %v1438 = vpop.f32.mrb[0].mxu0
    %1439 = vdwg.mxu0
    %v1440 = vadd.f32 %v1388, %v1435
    %s1441 = scalar_lea.vmem [#allocation2], 448
    %v1442 = vld [vmem:[%s1441] sm:$0xff]
    %v1443 = vld [vmem:[%s1441 + $0x8] sm:$0xff]
    %v1444 = vld [vmem:[%s1441 + $0x10] sm:$0xff]
    %v1445 = vld [vmem:[%s1441 + $0x18] sm:$0xff]
    %v1446 = vld [vmem:[%s1441 + $0x20] sm:$0xff]
    %v1447 = vld [vmem:[%s1441 + $0x28] sm:$0xff]
    %v1448 = vld [vmem:[%s1441 + $0x30] sm:$0xff]
    %v1449 = vld [vmem:[%s1441 + $0x38] sm:$0xff]
    %v1450 = vrot.slane %v1285, 3
    %1452 = vmatprep.subr.bf16.mxu0 0
    %1453 = vmatpush1.bf16.msra.mxu0 %v1442
    %1454 = vmatprep.subr.bf16.mxu0 0
    %1455 = vmatpush1.bf16.msra.mxu0 %v1443
    %1456 = vmatprep.subr.bf16.mxu0 0
    %1457 = vmatpush1.bf16.msra.mxu0 %v1444
    %1458 = vmatprep.subr.bf16.mxu0 0
    %1459 = vmatpush1.bf16.msra.mxu0 %v1445
    %1460 = vmatprep.subr.bf16.mxu0 0
    %1461 = vmatpush1.bf16.msra.mxu0 %v1446
    %1462 = vmatprep.subr.bf16.mxu0 0
    %1463 = vmatpush1.bf16.msra.mxu0 %v1447
    %1464 = vmatprep.subr.bf16.mxu0 0
    %1465 = vmatpush1.bf16.msra.mxu0 %v1448
    %1466 = vmatprep.subr.bf16.mxu0 0
    %1467 = vmatpush1.bf16.msra.mxu0 %v1449
    %1468 = vmatprep.subr.bf16.mxu0 0
    %1469 = vmatpush1.bf16.msra.mxu0 0
    %1470 = vmatprep.subr.bf16.mxu0 0
    %1471 = vmatpush1.bf16.msra.mxu0 0
    %1472 = vmatprep.subr.bf16.mxu0 0
    %1473 = vmatpush1.bf16.msra.mxu0 0
    %1474 = vmatprep.subr.bf16.mxu0 0
    %1475 = vmatpush1.bf16.msra.mxu0 0
    %1476 = vmatprep.subr.bf16.mxu0 0
    %1477 = vmatpush1.bf16.msra.mxu0 0
    %1478 = vmatprep.subr.bf16.mxu0 0
    %1479 = vmatpush1.bf16.msra.mxu0 0
    %1480 = vmatprep.subr.bf16.mxu0 0
    %1481 = vmatpush1.bf16.msra.mxu0 0
    %1482 = vmatprep.subr.bf16.mxu0 0
    %1483 = vmatpush1.bf16.msra.mxu0 0
    %1484 = vmatprep.mubr.bf16.mxu0 0
    %1485 = vmatmul.mubr.bf16.gmra.mrb[0].mxu0 %v1450
    %v1486 = vpop.f32.mrb[0].mxu0
    %v1487 = vadd.f32 0.0, %v1486
    %v1488 = vpop.f32.mrb[0].mxu0
    %v1489 = vpop.f32.mrb[0].mxu0
    %v1490 = vpop.f32.mrb[0].mxu0
    %1491 = vdwg.mxu0
    %v1492 = vadd.f32 %v1440, %v1487
    %v1493 = vpack.c.bf16 %v1070, %v1070
    %s1494 = scalar_lea.vmem [#allocation2], 512
    %v1495 = vld [vmem:[%s1494] sm:$0xff]
    %v1496 = vld [vmem:[%s1494 + $0x8] sm:$0xff]
    %v1497 = vld [vmem:[%s1494 + $0x10] sm:$0xff]
    %v1498 = vld [vmem:[%s1494 + $0x18] sm:$0xff]
    %v1499 = vld [vmem:[%s1494 + $0x20] sm:$0xff]
    %v1500 = vld [vmem:[%s1494 + $0x28] sm:$0xff]
    %v1501 = vld [vmem:[%s1494 + $0x30] sm:$0xff]
    %v1502 = vld [vmem:[%s1494 + $0x38] sm:$0xff]
    %1503 = vmatprep.subr.bf16.mxu0 0
    %1504 = vmatpush1.bf16.msra.mxu0 %v1495
    %1505 = vmatprep.subr.bf16.mxu0 0
    %1506 = vmatpush1.bf16.msra.mxu0 %v1496
    %1507 = vmatprep.subr.bf16.mxu0 0
    %1508 = vmatpush1.bf16.msra.mxu0 %v1497
    %1509 = vmatprep.subr.bf16.mxu0 0
    %1510 = vmatpush1.bf16.msra.mxu0 %v1498
    %1511 = vmatprep.subr.bf16.mxu0 0
    %1512 = vmatpush1.bf16.msra.mxu0 %v1499
    %1513 = vmatprep.subr.bf16.mxu0 0
    %1514 = vmatpush1.bf16.msra.mxu0 %v1500
    %1515 = vmatprep.subr.bf16.mxu0 0
    %1516 = vmatpush1.bf16.msra.mxu0 %v1501
    %1517 = vmatprep.subr.bf16.mxu0 0
    %1518 = vmatpush1.bf16.msra.mxu0 %v1502
    %1519 = vmatprep.subr.bf16.mxu0 0
    %1520 = vmatpush1.bf16.msra.mxu0 0
    %1521 = vmatprep.subr.bf16.mxu0 0
    %1522 = vmatpush1.bf16.msra.mxu0 0
    %1523 = vmatprep.subr.bf16.mxu0 0
    %1524 = vmatpush1.bf16.msra.mxu0 0
    %1525 = vmatprep.subr.bf16.mxu0 0
    %1526 = vmatpush1.bf16.msra.mxu0 0
    %1527 = vmatprep.subr.bf16.mxu0 0
    %1528 = vmatpush1.bf16.msra.mxu0 0
    %1529 = vmatprep.subr.bf16.mxu0 0
    %1530 = vmatpush1.bf16.msra.mxu0 0
    %1531 = vmatprep.subr.bf16.mxu0 0
    %1532 = vmatpush1.bf16.msra.mxu0 0
    %1533 = vmatprep.subr.bf16.mxu0 0
    %1534 = vmatpush1.bf16.msra.mxu0 0
    %1535 = vmatprep.mubr.bf16.mxu0 0
    %1536 = vmatmul.mubr.bf16.gmra.mrb[0].mxu0 %v1493
    %v1537 = vpop.f32.mrb[0].mxu0
    %v1538 = vadd.f32 0.0, %v1537
    %v1539 = vpop.f32.mrb[0].mxu0
    %v1540 = vpop.f32.mrb[0].mxu0
    %v1541 = vpop.f32.mrb[0].mxu0
    %1542 = vdwg.mxu0
    %v1543 = vadd.f32 %v1492, %v1538
    %s1544 = scalar_lea.vmem [#allocation2], 576
    %v1545 = vld [vmem:[%s1544] sm:$0xff]
    %v1546 = vld [vmem:[%s1544 + $0x8] sm:$0xff]
    %v1547 = vld [vmem:[%s1544 + $0x10] sm:$0xff]
    %v1548 = vld [vmem:[%s1544 + $0x18] sm:$0xff]
    %v1549 = vld [vmem:[%s1544 + $0x20] sm:$0xff]
    %v1550 = vld [vmem:[%s1544 + $0x28] sm:$0xff]
    %v1551 = vld [vmem:[%s1544 + $0x30] sm:$0xff]
    %v1552 = vld [vmem:[%s1544 + $0x38] sm:$0xff]
    %v1554 = vrot.slane %v1493, 1
    %1556 = vmatprep.subr.bf16.mxu0 0
    %1557 = vmatpush1.bf16.msra.mxu0 %v1545
    %1558 = vmatprep.subr.bf16.mxu0 0
    %1559 = vmatpush1.bf16.msra.mxu0 %v1546
    %1560 = vmatprep.subr.bf16.mxu0 0
    %1561 = vmatpush1.bf16.msra.mxu0 %v1547
    %1562 = vmatprep.subr.bf16.mxu0 0
    %1563 = vmatpush1.bf16.msra.mxu0 %v1548
    %1564 = vmatprep.subr.bf16.mxu0 0
    %1565 = vmatpush1.bf16.msra.mxu0 %v1549
    %1566 = vmatprep.subr.bf16.mxu0 0
    %1567 = vmatpush1.bf16.msra.mxu0 %v1550
    %1568 = vmatprep.subr.bf16.mxu0 0
    %1569 = vmatpush1.bf16.msra.mxu0 %v1551
    %1570 = vmatprep.subr.bf16.mxu0 0
    %1571 = vmatpush1.bf16.msra.mxu0 %v1552
    %1572 = vmatprep.subr.bf16.mxu0 0
    %1573 = vmatpush1.bf16.msra.mxu0 0
    %1574 = vmatprep.subr.bf16.mxu0 0
    %1575 = vmatpush1.bf16.msra.mxu0 0
    %1576 = vmatprep.subr.bf16.mxu0 0
    %1577 = vmatpush1.bf16.msra.mxu0 0
    %1578 = vmatprep.subr.bf16.mxu0 0
    %1579 = vmatpush1.bf16.msra.mxu0 0
    %1580 = vmatprep.subr.bf16.mxu0 0
    %1581 = vmatpush1.bf16.msra.mxu0 0
    %1582 = vmatprep.subr.bf16.mxu0 0
    %1583 = vmatpush1.bf16.msra.mxu0 0
    %1584 = vmatprep.subr.bf16.mxu0 0
    %1585 = vmatpush1.bf16.msra.mxu0 0
    %1586 = vmatprep.subr.bf16.mxu0 0
    %1587 = vmatpush1.bf16.msra.mxu0 0
    %1588 = vmatprep.mubr.bf16.mxu0 0
    %1589 = vmatmul.mubr.bf16.gmra.mrb[0].mxu0 %v1554
    %v1590 = vpop.f32.mrb[0].mxu0
    %v1591 = vadd.f32 0.0, %v1590
    %v1592 = vpop.f32.mrb[0].mxu0
    %v1593 = vpop.f32.mrb[0].mxu0
    %v1594 = vpop.f32.mrb[0].mxu0
    %1595 = vdwg.mxu0
    %v1596 = vadd.f32 %v1543, %v1591
    %s1597 = scalar_lea.vmem [#allocation2], 640
    %v1598 = vld [vmem:[%s1597] sm:$0xff]
    %v1599 = vld [vmem:[%s1597 + $0x8] sm:$0xff]
    %v1600 = vld [vmem:[%s1597 + $0x10] sm:$0xff]
    %v1601 = vld [vmem:[%s1597 + $0x18] sm:$0xff]
    %v1602 = vld [vmem:[%s1597 + $0x20] sm:$0xff]
    %v1603 = vld [vmem:[%s1597 + $0x28] sm:$0xff]
    %v1604 = vld [vmem:[%s1597 + $0x30] sm:$0xff]
    %v1605 = vld [vmem:[%s1597 + $0x38] sm:$0xff]
    %v1606 = vrot.slane %v1493, 2
    %1608 = vmatprep.subr.bf16.mxu0 0
    %1609 = vmatpush1.bf16.msra.mxu0 %v1598
    %1610 = vmatprep.subr.bf16.mxu0 0
    %1611 = vmatpush1.bf16.msra.mxu0 %v1599
    %1612 = vmatprep.subr.bf16.mxu0 0
    %1613 = vmatpush1.bf16.msra.mxu0 %v1600
    %1614 = vmatprep.subr.bf16.mxu0 0
    %1615 = vmatpush1.bf16.msra.mxu0 %v1601
    %1616 = vmatprep.subr.bf16.mxu0 0
    %1617 = vmatpush1.bf16.msra.mxu0 %v1602
    %1618 = vmatprep.subr.bf16.mxu0 0
    %1619 = vmatpush1.bf16.msra.mxu0 %v1603
    %1620 = vmatprep.subr.bf16.mxu0 0
    %1621 = vmatpush1.bf16.msra.mxu0 %v1604
    %1622 = vmatprep.subr.bf16.mxu0 0
    %1623 = vmatpush1.bf16.msra.mxu0 %v1605
    %1624 = vmatprep.subr.bf16.mxu0 0
    %1625 = vmatpush1.bf16.msra.mxu0 0
    %1626 = vmatprep.subr.bf16.mxu0 0
    %1627 = vmatpush1.bf16.msra.mxu0 0
    %1628 = vmatprep.subr.bf16.mxu0 0
    %1629 = vmatpush1.bf16.msra.mxu0 0
    %1630 = vmatprep.subr.bf16.mxu0 0
    %1631 = vmatpush1.bf16.msra.mxu0 0
    %1632 = vmatprep.subr.bf16.mxu0 0
    %1633 = vmatpush1.bf16.msra.mxu0 0
    %1634 = vmatprep.subr.bf16.mxu0 0
    %1635 = vmatpush1.bf16.msra.mxu0 0
    %1636 = vmatprep.subr.bf16.mxu0 0
    %1637 = vmatpush1.bf16.msra.mxu0 0
    %1638 = vmatprep.subr.bf16.mxu0 0
    %1639 = vmatpush1.bf16.msra.mxu0 0
    %1640 = vmatprep.mubr.bf16.mxu0 0
    %1641 = vmatmul.mubr.bf16.gmra.mrb[0].mxu0 %v1606
    %v1642 = vpop.f32.mrb[0].mxu0
    %v1643 = vadd.f32 0.0, %v1642
    %v1644 = vpop.f32.mrb[0].mxu0
    %v1645 = vpop.f32.mrb[0].mxu0
    %v1646 = vpop.f32.mrb[0].mxu0
    %1647 = vdwg.mxu0
    %v1648 = vadd.f32 %v1596, %v1643
    %s1649 = scalar_lea.vmem [#allocation2], 704
    %v1650 = vld [vmem:[%s1649] sm:$0xff]
    %v1651 = vld [vmem:[%s1649 + $0x8] sm:$0xff]
    %v1652 = vld [vmem:[%s1649 + $0x10] sm:$0xff]
    %v1653 = vld [vmem:[%s1649 + $0x18] sm:$0xff]
    %v1654 = vld [vmem:[%s1649 + $0x20] sm:$0xff]
    %v1655 = vld [vmem:[%s1649 + $0x28] sm:$0xff]
    %v1656 = vld [vmem:[%s1649 + $0x30] sm:$0xff]
    %v1657 = vld [vmem:[%s1649 + $0x38] sm:$0xff]
    %v1658 = vrot.slane %v1493, 3
    %1660 = vmatprep.subr.bf16.mxu0 0
    %1661 = vmatpush1.bf16.msra.mxu0 %v1650
    %1662 = vmatprep.subr.bf16.mxu0 0
    %1663 = vmatpush1.bf16.msra.mxu0 %v1651
    %1664 = vmatprep.subr.bf16.mxu0 0
    %1665 = vmatpush1.bf16.msra.mxu0 %v1652
    %1666 = vmatprep.subr.bf16.mxu0 0
    %1667 = vmatpush1.bf16.msra.mxu0 %v1653
    %1668 = vmatprep.subr.bf16.mxu0 0
    %1669 = vmatpush1.bf16.msra.mxu0 %v1654
    %1670 = vmatprep.subr.bf16.mxu0 0
    %1671 = vmatpush1.bf16.msra.mxu0 %v1655
    %1672 = vmatprep.subr.bf16.mxu0 0
    %1673 = vmatpush1.bf16.msra.mxu0 %v1656
    %1674 = vmatprep.subr.bf16.mxu0 0
    %1675 = vmatpush1.bf16.msra.mxu0 %v1657
    %1676 = vmatprep.subr.bf16.mxu0 0
    %1677 = vmatpush1.bf16.msra.mxu0 0
    %1678 = vmatprep.subr.bf16.mxu0 0
    %1679 = vmatpush1.bf16.msra.mxu0 0
    %1680 = vmatprep.subr.bf16.mxu0 0
    %1681 = vmatpush1.bf16.msra.mxu0 0
    %1682 = vmatprep.subr.bf16.mxu0 0
    %1683 = vmatpush1.bf16.msra.mxu0 0
    %1684 = vmatprep.subr.bf16.mxu0 0
    %1685 = vmatpush1.bf16.msra.mxu0 0
    %1686 = vmatprep.subr.bf16.mxu0 0
    %1687 = vmatpush1.bf16.msra.mxu0 0
    %1688 = vmatprep.subr.bf16.mxu0 0
    %1689 = vmatpush1.bf16.msra.mxu0 0
    %1690 = vmatprep.subr.bf16.mxu0 0
    %1691 = vmatpush1.bf16.msra.mxu0 0
    %1692 = vmatprep.mubr.bf16.mxu0 0
    %1693 = vmatmul.mubr.bf16.gmra.mrb[0].mxu0 %v1658
    %v1694 = vpop.f32.mrb[0].mxu0
    %v1695 = vadd.f32 0.0, %v1694
    %v1696 = vpop.f32.mrb[0].mxu0
    %v1697 = vpop.f32.mrb[0].mxu0
    %v1698 = vpop.f32.mrb[0].mxu0
    %1699 = vdwg.mxu0
    %v1700 = vadd.f32 %v1648, %v1695
    %v1701 = vpack.c.bf16 %v1071, %v1071
    %s1702 = scalar_lea.vmem [#allocation2], 768
    %v1703 = vld [vmem:[%s1702] sm:$0xff]
    %v1704 = vld [vmem:[%s1702 + $0x8] sm:$0xff]
    %v1705 = vld [vmem:[%s1702 + $0x10] sm:$0xff]
    %v1706 = vld [vmem:[%s1702 + $0x18] sm:$0xff]
    %v1707 = vld [vmem:[%s1702 + $0x20] sm:$0xff]
    %v1708 = vld [vmem:[%s1702 + $0x28] sm:$0xff]
    %v1709 = vld [vmem:[%s1702 + $0x30] sm:$0xff]
    %v1710 = vld [vmem:[%s1702 + $0x38] sm:$0xff]
    %1711 = vmatprep.subr.bf16.mxu0 0
    %1712 = vmatpush1.bf16.msra.mxu0 %v1703
    %1713 = vmatprep.subr.bf16.mxu0 0
    %1714 = vmatpush1.bf16.msra.mxu0 %v1704
    %1715 = vmatprep.subr.bf16.mxu0 0
    %1716 = vmatpush1.bf16.msra.mxu0 %v1705
    %1717 = vmatprep.subr.bf16.mxu0 0
    %1718 = vmatpush1.bf16.msra.mxu0 %v1706
    %1719 = vmatprep.subr.bf16.mxu0 0
    %1720 = vmatpush1.bf16.msra.mxu0 %v1707
    %1721 = vmatprep.subr.bf16.mxu0 0
    %1722 = vmatpush1.bf16.msra.mxu0 %v1708
    %1723 = vmatprep.subr.bf16.mxu0 0
    %1724 = vmatpush1.bf16.msra.mxu0 %v1709
    %1725 = vmatprep.subr.bf16.mxu0 0
    %1726 = vmatpush1.bf16.msra.mxu0 %v1710
    %1727 = vmatprep.subr.bf16.mxu0 0
    %1728 = vmatpush1.bf16.msra.mxu0 0
    %1729 = vmatprep.subr.bf16.mxu0 0
    %1730 = vmatpush1.bf16.msra.mxu0 0
    %1731 = vmatprep.subr.bf16.mxu0 0
    %1732 = vmatpush1.bf16.msra.mxu0 0
    %1733 = vmatprep.subr.bf16.mxu0 0
    %1734 = vmatpush1.bf16.msra.mxu0 0
    %1735 = vmatprep.subr.bf16.mxu0 0
    %1736 = vmatpush1.bf16.msra.mxu0 0
    %1737 = vmatprep.subr.bf16.mxu0 0
    %1738 = vmatpush1.bf16.msra.mxu0 0
    %1739 = vmatprep.subr.bf16.mxu0 0
    %1740 = vmatpush1.bf16.msra.mxu0 0
    %1741 = vmatprep.subr.bf16.mxu0 0
    %1742 = vmatpush1.bf16.msra.mxu0 0
    %1743 = vmatprep.mubr.bf16.mxu0 0
    %1744 = vmatmul.mubr.bf16.gmra.mrb[0].mxu0 %v1701
    %v1745 = vpop.f32.mrb[0].mxu0
    %v1746 = vadd.f32 0.0, %v1745
    %v1747 = vpop.f32.mrb[0].mxu0
    %v1748 = vpop.f32.mrb[0].mxu0
    %v1749 = vpop.f32.mrb[0].mxu0
    %1750 = vdwg.mxu0
    %v1751 = vadd.f32 %v1700, %v1746
    %s1752 = scalar_lea.vmem [#allocation2], 832
    %v1753 = vld [vmem:[%s1752] sm:$0xff]
    %v1754 = vld [vmem:[%s1752 + $0x8] sm:$0xff]
    %v1755 = vld [vmem:[%s1752 + $0x10] sm:$0xff]
    %v1756 = vld [vmem:[%s1752 + $0x18] sm:$0xff]
    %v1757 = vld [vmem:[%s1752 + $0x20] sm:$0xff]
    %v1758 = vld [vmem:[%s1752 + $0x28] sm:$0xff]
    %v1759 = vld [vmem:[%s1752 + $0x30] sm:$0xff]
    %v1760 = vld [vmem:[%s1752 + $0x38] sm:$0xff]
    %v1762 = vrot.slane %v1701, 1
    %1764 = vmatprep.subr.bf16.mxu0 0
    %1765 = vmatpush1.bf16.msra.mxu0 %v1753
    %1766 = vmatprep.subr.bf16.mxu0 0
    %1767 = vmatpush1.bf16.msra.mxu0 %v1754
    %1768 = vmatprep.subr.bf16.mxu0 0
    %1769 = vmatpush1.bf16.msra.mxu0 %v1755
    %1770 = vmatprep.subr.bf16.mxu0 0
    %1771 = vmatpush1.bf16.msra.mxu0 %v1756
    %1772 = vmatprep.subr.bf16.mxu0 0
    %1773 = vmatpush1.bf16.msra.mxu0 %v1757
    %1774 = vmatprep.subr.bf16.mxu0 0
    %1775 = vmatpush1.bf16.msra.mxu0 %v1758
    %1776 = vmatprep.subr.bf16.mxu0 0
    %1777 = vmatpush1.bf16.msra.mxu0 %v1759
    %1778 = vmatprep.subr.bf16.mxu0 0
    %1779 = vmatpush1.bf16.msra.mxu0 %v1760
    %1780 = vmatprep.subr.bf16.mxu0 0
    %1781 = vmatpush1.bf16.msra.mxu0 0
    %1782 = vmatprep.subr.bf16.mxu0 0
    %1783 = vmatpush1.bf16.msra.mxu0 0
    %1784 = vmatprep.subr.bf16.mxu0 0
    %1785 = vmatpush1.bf16.msra.mxu0 0
    %1786 = vmatprep.subr.bf16.mxu0 0
    %1787 = vmatpush1.bf16.msra.mxu0 0
    %1788 = vmatprep.subr.bf16.mxu0 0
    %1789 = vmatpush1.bf16.msra.mxu0 0
    %1790 = vmatprep.subr.bf16.mxu0 0
    %1791 = vmatpush1.bf16.msra.mxu0 0
    %1792 = vmatprep.subr.bf16.mxu0 0
    %1793 = vmatpush1.bf16.msra.mxu0 0
    %1794 = vmatprep.subr.bf16.mxu0 0
    %1795 = vmatpush1.bf16.msra.mxu0 0
    %1796 = vmatprep.mubr.bf16.mxu0 0
    %1797 = vmatmul.mubr.bf16.gmra.mrb[0].mxu0 %v1762
    %v1798 = vpop.f32.mrb[0].mxu0
    %v1799 = vadd.f32 0.0, %v1798
    %v1800 = vpop.f32.mrb[0].mxu0
    %v1801 = vpop.f32.mrb[0].mxu0
    %v1802 = vpop.f32.mrb[0].mxu0
    %1803 = vdwg.mxu0
    %v1804 = vadd.f32 %v1751, %v1799
    %s1805 = scalar_lea.vmem [#allocation2], 896
    %v1806 = vld [vmem:[%s1805] sm:$0xff]
    %v1807 = vld [vmem:[%s1805 + $0x8] sm:$0xff]
    %v1808 = vld [vmem:[%s1805 + $0x10] sm:$0xff]
    %v1809 = vld [vmem:[%s1805 + $0x18] sm:$0xff]
    %v1810 = vld [vmem:[%s1805 + $0x20] sm:$0xff]
    %v1811 = vld [vmem:[%s1805 + $0x28] sm:$0xff]
    %v1812 = vld [vmem:[%s1805 + $0x30] sm:$0xff]
    %v1813 = vld [vmem:[%s1805 + $0x38] sm:$0xff]
    %v1814 = vrot.slane %v1701, 2
    %1816 = vmatprep.subr.bf16.mxu0 0
    %1817 = vmatpush1.bf16.msra.mxu0 %v1806
    %1818 = vmatprep.subr.bf16.mxu0 0
    %1819 = vmatpush1.bf16.msra.mxu0 %v1807
    %1820 = vmatprep.subr.bf16.mxu0 0
    %1821 = vmatpush1.bf16.msra.mxu0 %v1808
    %1822 = vmatprep.subr.bf16.mxu0 0
    %1823 = vmatpush1.bf16.msra.mxu0 %v1809
    %1824 = vmatprep.subr.bf16.mxu0 0
    %1825 = vmatpush1.bf16.msra.mxu0 %v1810
    %1826 = vmatprep.subr.bf16.mxu0 0
    %1827 = vmatpush1.bf16.msra.mxu0 %v1811
    %1828 = vmatprep.subr.bf16.mxu0 0
    %1829 = vmatpush1.bf16.msra.mxu0 %v1812
    %1830 = vmatprep.subr.bf16.mxu0 0
    %1831 = vmatpush1.bf16.msra.mxu0 %v1813
    %1832 = vmatprep.subr.bf16.mxu0 0
    %1833 = vmatpush1.bf16.msra.mxu0 0
    %1834 = vmatprep.subr.bf16.mxu0 0
    %1835 = vmatpush1.bf16.msra.mxu0 0
    %1836 = vmatprep.subr.bf16.mxu0 0
    %1837 = vmatpush1.bf16.msra.mxu0 0
    %1838 = vmatprep.subr.bf16.mxu0 0
    %1839 = vmatpush1.bf16.msra.mxu0 0
    %1840 = vmatprep.subr.bf16.mxu0 0
    %1841 = vmatpush1.bf16.msra.mxu0 0
    %1842 = vmatprep.subr.bf16.mxu0 0
    %1843 = vmatpush1.bf16.msra.mxu0 0
    %1844 = vmatprep.subr.bf16.mxu0 0
    %1845 = vmatpush1.bf16.msra.mxu0 0
    %1846 = vmatprep.subr.bf16.mxu0 0
    %1847 = vmatpush1.bf16.msra.mxu0 0
    %1848 = vmatprep.mubr.bf16.mxu0 0
    %1849 = vmatmul.mubr.bf16.gmra.mrb[0].mxu0 %v1814
    %v1850 = vpop.f32.mrb[0].mxu0
    %v1851 = vadd.f32 0.0, %v1850
    %v1852 = vpop.f32.mrb[0].mxu0
    %v1853 = vpop.f32.mrb[0].mxu0
    %v1854 = vpop.f32.mrb[0].mxu0
    %1855 = vdwg.mxu0
    %v1856 = vadd.f32 %v1804, %v1851
    %s1857 = scalar_lea.vmem [#allocation2], 960
    %v1858 = vld [vmem:[%s1857] sm:$0xff]
    %v1859 = vld [vmem:[%s1857 + $0x8] sm:$0xff]
    %v1860 = vld [vmem:[%s1857 + $0x10] sm:$0xff]
    %v1861 = vld [vmem:[%s1857 + $0x18] sm:$0xff]
    %v1862 = vld [vmem:[%s1857 + $0x20] sm:$0xff]
    %v1863 = vld [vmem:[%s1857 + $0x28] sm:$0xff]
    %v1864 = vld [vmem:[%s1857 + $0x30] sm:$0xff]
    %v1865 = vld [vmem:[%s1857 + $0x38] sm:$0xff]
    %v1866 = vrot.slane %v1701, 3
    %1868 = vmatprep.subr.bf16.mxu0 0
    %1869 = vmatpush1.bf16.msra.mxu0 %v1858
    %1870 = vmatprep.subr.bf16.mxu0 0
    %1871 = vmatpush1.bf16.msra.mxu0 %v1859
    %1872 = vmatprep.subr.bf16.mxu0 0
    %1873 = vmatpush1.bf16.msra.mxu0 %v1860
    %1874 = vmatprep.subr.bf16.mxu0 0
    %1875 = vmatpush1.bf16.msra.mxu0 %v1861
    %1876 = vmatprep.subr.bf16.mxu0 0
    %1877 = vmatpush1.bf16.msra.mxu0 %v1862
    %1878 = vmatprep.subr.bf16.mxu0 0
    %1879 = vmatpush1.bf16.msra.mxu0 %v1863
    %1880 = vmatprep.subr.bf16.mxu0 0
    %1881 = vmatpush1.bf16.msra.mxu0 %v1864
    %1882 = vmatprep.subr.bf16.mxu0 0
    %1883 = vmatpush1.bf16.msra.mxu0 %v1865
    %1884 = vmatprep.subr.bf16.mxu0 0
    %1885 = vmatpush1.bf16.msra.mxu0 0
    %1886 = vmatprep.subr.bf16.mxu0 0
    %1887 = vmatpush1.bf16.msra.mxu0 0
    %1888 = vmatprep.subr.bf16.mxu0 0
    %1889 = vmatpush1.bf16.msra.mxu0 0
    %1890 = vmatprep.subr.bf16.mxu0 0
    %1891 = vmatpush1.bf16.msra.mxu0 0
    %1892 = vmatprep.subr.bf16.mxu0 0
    %1893 = vmatpush1.bf16.msra.mxu0 0
    %1894 = vmatprep.subr.bf16.mxu0 0
    %1895 = vmatpush1.bf16.msra.mxu0 0
    %1896 = vmatprep.subr.bf16.mxu0 0
    %1897 = vmatpush1.bf16.msra.mxu0 0
    %1898 = vmatprep.subr.bf16.mxu0 0
    %1899 = vmatpush1.bf16.msra.mxu0 0
    %1900 = vmatprep.mubr.bf16.mxu0 0
    %1901 = vmatmul.mubr.bf16.gmra.mrb[0].mxu0 %v1866
    %v1902 = vpop.f32.mrb[0].mxu0
    %v1903 = vadd.f32 0.0, %v1902
    %v1904 = vpop.f32.mrb[0].mxu0
    %v1905 = vpop.f32.mrb[0].mxu0
    %v1906 = vpop.f32.mrb[0].mxu0
    %1907 = vdwg.mxu0
    %v1908 = vadd.f32 %v1856, %v1903
    %v1909 = vpack.c.bf16 %v1072, %v1072
    %s1910 = scalar_lea.vmem [#allocation2], 1024
    %v1911 = vld [vmem:[%s1910] sm:$0xff]
    %v1912 = vld [vmem:[%s1910 + $0x8] sm:$0xff]
    %v1913 = vld [vmem:[%s1910 + $0x10] sm:$0xff]
    %v1914 = vld [vmem:[%s1910 + $0x18] sm:$0xff]
    %v1915 = vld [vmem:[%s1910 + $0x20] sm:$0xff]
    %v1916 = vld [vmem:[%s1910 + $0x28] sm:$0xff]
    %v1917 = vld [vmem:[%s1910 + $0x30] sm:$0xff]
    %v1918 = vld [vmem:[%s1910 + $0x38] sm:$0xff]
    %1919 = vmatprep.subr.bf16.mxu0 0
    %1920 = vmatpush1.bf16.msra.mxu0 %v1911
    %1921 = vmatprep.subr.bf16.mxu0 0
    %1922 = vmatpush1.bf16.msra.mxu0 %v1912
    %1923 = vmatprep.subr.bf16.mxu0 0
    %1924 = vmatpush1.bf16.msra.mxu0 %v1913
    %1925 = vmatprep.subr.bf16.mxu0 0
    %1926 = vmatpush1.bf16.msra.mxu0 %v1914
    %1927 = vmatprep.subr.bf16.mxu0 0
    %1928 = vmatpush1.bf16.msra.mxu0 %v1915
    %1929 = vmatprep.subr.bf16.mxu0 0
    %1930 = vmatpush1.bf16.msra.mxu0 %v1916
    %1931 = vmatprep.subr.bf16.mxu0 0
    %1932 = vmatpush1.bf16.msra.mxu0 %v1917
    %1933 = vmatprep.subr.bf16.mxu0 0
    %1934 = vmatpush1.bf16.msra.mxu0 %v1918
    %1935 = vmatprep.subr.bf16.mxu0 0
    %1936 = vmatpush1.bf16.msra.mxu0 0
    %1937 = vmatprep.subr.bf16.mxu0 0
    %1938 = vmatpush1.bf16.msra.mxu0 0
    %1939 = vmatprep.subr.bf16.mxu0 0
    %1940 = vmatpush1.bf16.msra.mxu0 0
    %1941 = vmatprep.subr.bf16.mxu0 0
    %1942 = vmatpush1.bf16.msra.mxu0 0
    %1943 = vmatprep.subr.bf16.mxu0 0
    %1944 = vmatpush1.bf16.msra.mxu0 0
    %1945 = vmatprep.subr.bf16.mxu0 0
    %1946 = vmatpush1.bf16.msra.mxu0 0
    %1947 = vmatprep.subr.bf16.mxu0 0
    %1948 = vmatpush1.bf16.msra.mxu0 0
    %1949 = vmatprep.subr.bf16.mxu0 0
    %1950 = vmatpush1.bf16.msra.mxu0 0
    %1951 = vmatprep.mubr.bf16.mxu0 0
    %1952 = vmatmul.mubr.bf16.gmra.mrb[0].mxu0 %v1909
    %v1953 = vpop.f32.mrb[0].mxu0
    %v1954 = vadd.f32 0.0, %v1953
    %v1955 = vpop.f32.mrb[0].mxu0
    %v1956 = vpop.f32.mrb[0].mxu0
    %v1957 = vpop.f32.mrb[0].mxu0
    %1958 = vdwg.mxu0
    %v1959 = vadd.f32 %v1908, %v1954
    %s1960 = scalar_lea.vmem [#allocation2], 1088
    %v1961 = vld [vmem:[%s1960] sm:$0xff]
    %v1962 = vld [vmem:[%s1960 + $0x8] sm:$0xff]
    %v1963 = vld [vmem:[%s1960 + $0x10] sm:$0xff]
    %v1964 = vld [vmem:[%s1960 + $0x18] sm:$0xff]
    %v1965 = vld [vmem:[%s1960 + $0x20] sm:$0xff]
    %v1966 = vld [vmem:[%s1960 + $0x28] sm:$0xff]
    %v1967 = vld [vmem:[%s1960 + $0x30] sm:$0xff]
    %v1968 = vld [vmem:[%s1960 + $0x38] sm:$0xff]
    %v1970 = vrot.slane %v1909, 1
    %1972 = vmatprep.subr.bf16.mxu0 0
    %1973 = vmatpush1.bf16.msra.mxu0 %v1961
    %1974 = vmatprep.subr.bf16.mxu0 0
    %1975 = vmatpush1.bf16.msra.mxu0 %v1962
    %1976 = vmatprep.subr.bf16.mxu0 0
    %1977 = vmatpush1.bf16.msra.mxu0 %v1963
    %1978 = vmatprep.subr.bf16.mxu0 0
    %1979 = vmatpush1.bf16.msra.mxu0 %v1964
    %1980 = vmatprep.subr.bf16.mxu0 0
    %1981 = vmatpush1.bf16.msra.mxu0 %v1965
    %1982 = vmatprep.subr.bf16.mxu0 0
    %1983 = vmatpush1.bf16.msra.mxu0 %v1966
    %1984 = vmatprep.subr.bf16.mxu0 0
    %1985 = vmatpush1.bf16.msra.mxu0 %v1967
    %1986 = vmatprep.subr.bf16.mxu0 0
    %1987 = vmatpush1.bf16.msra.mxu0 %v1968
    %1988 = vmatprep.subr.bf16.mxu0 0
    %1989 = vmatpush1.bf16.msra.mxu0 0
    %1990 = vmatprep.subr.bf16.mxu0 0
    %1991 = vmatpush1.bf16.msra.mxu0 0
    %1992 = vmatprep.subr.bf16.mxu0 0
    %1993 = vmatpush1.bf16.msra.mxu0 0
    %1994 = vmatprep.subr.bf16.mxu0 0
    %1995 = vmatpush1.bf16.msra.mxu0 0
    %1996 = vmatprep.subr.bf16.mxu0 0
    %1997 = vmatpush1.bf16.msra.mxu0 0
    %1998 = vmatprep.subr.bf16.mxu0 0
    %1999 = vmatpush1.bf16.msra.mxu0 0
    %2000 = vmatprep.subr.bf16.mxu0 0
    %2001 = vmatpush1.bf16.msra.mxu0 0
    %2002 = vmatprep.subr.bf16.mxu0 0
    %2003 = vmatpush1.bf16.msra.mxu0 0
    %2004 = vmatprep.mubr.bf16.mxu0 0
    %2005 = vmatmul.mubr.bf16.gmra.mrb[0].mxu0 %v1970
    %v2006 = vpop.f32.mrb[0].mxu0
    %v2007 = vadd.f32 0.0, %v2006
    %v2008 = vpop.f32.mrb[0].mxu0
    %v2009 = vpop.f32.mrb[0].mxu0
    %v2010 = vpop.f32.mrb[0].mxu0
    %2011 = vdwg.mxu0
    %v2012 = vadd.f32 %v1959, %v2007
    %s2013 = scalar_lea.vmem [#allocation2], 1152
    %v2014 = vld [vmem:[%s2013] sm:$0xff]
    %v2015 = vld [vmem:[%s2013 + $0x8] sm:$0xff]
    %v2016 = vld [vmem:[%s2013 + $0x10] sm:$0xff]
    %v2017 = vld [vmem:[%s2013 + $0x18] sm:$0xff]
    %v2018 = vld [vmem:[%s2013 + $0x20] sm:$0xff]
    %v2019 = vld [vmem:[%s2013 + $0x28] sm:$0xff]
    %v2020 = vld [vmem:[%s2013 + $0x30] sm:$0xff]
    %v2021 = vld [vmem:[%s2013 + $0x38] sm:$0xff]
    %v2022 = vrot.slane %v1909, 2
    %2024 = vmatprep.subr.bf16.mxu0 0
    %2025 = vmatpush1.bf16.msra.mxu0 %v2014
    %2026 = vmatprep.subr.bf16.mxu0 0
    %2027 = vmatpush1.bf16.msra.mxu0 %v2015
    %2028 = vmatprep.subr.bf16.mxu0 0
    %2029 = vmatpush1.bf16.msra.mxu0 %v2016
    %2030 = vmatprep.subr.bf16.mxu0 0
    %2031 = vmatpush1.bf16.msra.mxu0 %v2017
    %2032 = vmatprep.subr.bf16.mxu0 0
    %2033 = vmatpush1.bf16.msra.mxu0 %v2018
    %2034 = vmatprep.subr.bf16.mxu0 0
    %2035 = vmatpush1.bf16.msra.mxu0 %v2019
    %2036 = vmatprep.subr.bf16.mxu0 0
    %2037 = vmatpush1.bf16.msra.mxu0 %v2020
    %2038 = vmatprep.subr.bf16.mxu0 0
    %2039 = vmatpush1.bf16.msra.mxu0 %v2021
    %2040 = vmatprep.subr.bf16.mxu0 0
    %2041 = vmatpush1.bf16.msra.mxu0 0
    %2042 = vmatprep.subr.bf16.mxu0 0
    %2043 = vmatpush1.bf16.msra.mxu0 0
    %2044 = vmatprep.subr.bf16.mxu0 0
    %2045 = vmatpush1.bf16.msra.mxu0 0
    %2046 = vmatprep.subr.bf16.mxu0 0
    %2047 = vmatpush1.bf16.msra.mxu0 0
    %2048 = vmatprep.subr.bf16.mxu0 0
    %2049 = vmatpush1.bf16.msra.mxu0 0
    %2050 = vmatprep.subr.bf16.mxu0 0
    %2051 = vmatpush1.bf16.msra.mxu0 0
    %2052 = vmatprep.subr.bf16.mxu0 0
    %2053 = vmatpush1.bf16.msra.mxu0 0
    %2054 = vmatprep.subr.bf16.mxu0 0
    %2055 = vmatpush1.bf16.msra.mxu0 0
    %2056 = vmatprep.mubr.bf16.mxu0 0
    %2057 = vmatmul.mubr.bf16.gmra.mrb[0].mxu0 %v2022
    %v2058 = vpop.f32.mrb[0].mxu0
    %v2059 = vadd.f32 0.0, %v2058
    %v2060 = vpop.f32.mrb[0].mxu0
    %v2061 = vpop.f32.mrb[0].mxu0
    %v2062 = vpop.f32.mrb[0].mxu0
    %2063 = vdwg.mxu0
    %v2064 = vadd.f32 %v2012, %v2059
    %s2065 = scalar_lea.vmem [#allocation2], 1216
    %v2066 = vld [vmem:[%s2065] sm:$0xff]
    %v2067 = vld [vmem:[%s2065 + $0x8] sm:$0xff]
    %v2068 = vld [vmem:[%s2065 + $0x10] sm:$0xff]
    %v2069 = vld [vmem:[%s2065 + $0x18] sm:$0xff]
    %v2070 = vld [vmem:[%s2065 + $0x20] sm:$0xff]
    %v2071 = vld [vmem:[%s2065 + $0x28] sm:$0xff]
    %v2072 = vld [vmem:[%s2065 + $0x30] sm:$0xff]
    %v2073 = vld [vmem:[%s2065 + $0x38] sm:$0xff]
    %v2074 = vrot.slane %v1909, 3
    %2076 = vmatprep.subr.bf16.mxu0 0
    %2077 = vmatpush1.bf16.msra.mxu0 %v2066
    %2078 = vmatprep.subr.bf16.mxu0 0
    %2079 = vmatpush1.bf16.msra.mxu0 %v2067
    %2080 = vmatprep.subr.bf16.mxu0 0
    %2081 = vmatpush1.bf16.msra.mxu0 %v2068
    %2082 = vmatprep.subr.bf16.mxu0 0
    %2083 = vmatpush1.bf16.msra.mxu0 %v2069
    %2084 = vmatprep.subr.bf16.mxu0 0
    %2085 = vmatpush1.bf16.msra.mxu0 %v2070
    %2086 = vmatprep.subr.bf16.mxu0 0
    %2087 = vmatpush1.bf16.msra.mxu0 %v2071
    %2088 = vmatprep.subr.bf16.mxu0 0
    %2089 = vmatpush1.bf16.msra.mxu0 %v2072
    %2090 = vmatprep.subr.bf16.mxu0 0
    %2091 = vmatpush1.bf16.msra.mxu0 %v2073
    %2092 = vmatprep.subr.bf16.mxu0 0
    %2093 = vmatpush1.bf16.msra.mxu0 0
    %2094 = vmatprep.subr.bf16.mxu0 0
    %2095 = vmatpush1.bf16.msra.mxu0 0
    %2096 = vmatprep.subr.bf16.mxu0 0
    %2097 = vmatpush1.bf16.msra.mxu0 0
    %2098 = vmatprep.subr.bf16.mxu0 0
    %2099 = vmatpush1.bf16.msra.mxu0 0
    %2100 = vmatprep.subr.bf16.mxu0 0
    %2101 = vmatpush1.bf16.msra.mxu0 0
    %2102 = vmatprep.subr.bf16.mxu0 0
    %2103 = vmatpush1.bf16.msra.mxu0 0
    %2104 = vmatprep.subr.bf16.mxu0 0
    %2105 = vmatpush1.bf16.msra.mxu0 0
    %2106 = vmatprep.subr.bf16.mxu0 0
    %2107 = vmatpush1.bf16.msra.mxu0 0
    %2108 = vmatprep.mubr.bf16.mxu0 0
    %2109 = vmatmul.mubr.bf16.gmra.mrb[0].mxu0 %v2074
    %v2110 = vpop.f32.mrb[0].mxu0
    %v2111 = vadd.f32 0.0, %v2110
    %v2112 = vpop.f32.mrb[0].mxu0
    %v2113 = vpop.f32.mrb[0].mxu0
    %v2114 = vpop.f32.mrb[0].mxu0
    %2115 = vdwg.mxu0
    %v2116 = vadd.f32 %v2064, %v2111
    %v2117 = vpack.c.bf16 %v1073, %v1073
    %s2118 = scalar_lea.vmem [#allocation2], 1280
    %v2119 = vld [vmem:[%s2118] sm:$0xff]
    %v2120 = vld [vmem:[%s2118 + $0x8] sm:$0xff]
    %v2121 = vld [vmem:[%s2118 + $0x10] sm:$0xff]
    %v2122 = vld [vmem:[%s2118 + $0x18] sm:$0xff]
    %v2123 = vld [vmem:[%s2118 + $0x20] sm:$0xff]
    %v2124 = vld [vmem:[%s2118 + $0x28] sm:$0xff]
    %v2125 = vld [vmem:[%s2118 + $0x30] sm:$0xff]
    %v2126 = vld [vmem:[%s2118 + $0x38] sm:$0xff]
    %2127 = vmatprep.subr.bf16.mxu0 0
    %2128 = vmatpush1.bf16.msra.mxu0 %v2119
    %2129 = vmatprep.subr.bf16.mxu0 0
    %2130 = vmatpush1.bf16.msra.mxu0 %v2120
    %2131 = vmatprep.subr.bf16.mxu0 0
    %2132 = vmatpush1.bf16.msra.mxu0 %v2121
    %2133 = vmatprep.subr.bf16.mxu0 0
    %2134 = vmatpush1.bf16.msra.mxu0 %v2122
    %2135 = vmatprep.subr.bf16.mxu0 0
    %2136 = vmatpush1.bf16.msra.mxu0 %v2123
    %2137 = vmatprep.subr.bf16.mxu0 0
    %2138 = vmatpush1.bf16.msra.mxu0 %v2124
    %2139 = vmatprep.subr.bf16.mxu0 0
    %2140 = vmatpush1.bf16.msra.mxu0 %v2125
    %2141 = vmatprep.subr.bf16.mxu0 0
    %2142 = vmatpush1.bf16.msra.mxu0 %v2126
    %2143 = vmatprep.subr.bf16.mxu0 0
    %2144 = vmatpush1.bf16.msra.mxu0 0
    %2145 = vmatprep.subr.bf16.mxu0 0
    %2146 = vmatpush1.bf16.msra.mxu0 0
    %2147 = vmatprep.subr.bf16.mxu0 0
    %2148 = vmatpush1.bf16.msra.mxu0 0
    %2149 = vmatprep.subr.bf16.mxu0 0
    %2150 = vmatpush1.bf16.msra.mxu0 0
    %2151 = vmatprep.subr.bf16.mxu0 0
    %2152 = vmatpush1.bf16.msra.mxu0 0
    %2153 = vmatprep.subr.bf16.mxu0 0
    %2154 = vmatpush1.bf16.msra.mxu0 0
    %2155 = vmatprep.subr.bf16.mxu0 0
    %2156 = vmatpush1.bf16.msra.mxu0 0
    %2157 = vmatprep.subr.bf16.mxu0 0
    %2158 = vmatpush1.bf16.msra.mxu0 0
    %2159 = vmatprep.mubr.bf16.mxu0 0
    %2160 = vmatmul.mubr.bf16.gmra.mrb[0].mxu0 %v2117
    %v2161 = vpop.f32.mrb[0].mxu0
    %v2162 = vadd.f32 0.0, %v2161
    %v2163 = vpop.f32.mrb[0].mxu0
    %v2164 = vpop.f32.mrb[0].mxu0
    %v2165 = vpop.f32.mrb[0].mxu0
    %2166 = vdwg.mxu0
    %v2167 = vadd.f32 %v2116, %v2162
    %s2168 = scalar_lea.vmem [#allocation2], 1344
    %v2169 = vld [vmem:[%s2168] sm:$0xff]
    %v2170 = vld [vmem:[%s2168 + $0x8] sm:$0xff]
    %v2171 = vld [vmem:[%s2168 + $0x10] sm:$0xff]
    %v2172 = vld [vmem:[%s2168 + $0x18] sm:$0xff]
    %v2173 = vld [vmem:[%s2168 + $0x20] sm:$0xff]
    %v2174 = vld [vmem:[%s2168 + $0x28] sm:$0xff]
    %v2175 = vld [vmem:[%s2168 + $0x30] sm:$0xff]
    %v2176 = vld [vmem:[%s2168 + $0x38] sm:$0xff]
    %v2178 = vrot.slane %v2117, 1
    %2180 = vmatprep.subr.bf16.mxu0 0
    %2181 = vmatpush1.bf16.msra.mxu0 %v2169
    %2182 = vmatprep.subr.bf16.mxu0 0
    %2183 = vmatpush1.bf16.msra.mxu0 %v2170
    %2184 = vmatprep.subr.bf16.mxu0 0
    %2185 = vmatpush1.bf16.msra.mxu0 %v2171
    %2186 = vmatprep.subr.bf16.mxu0 0
    %2187 = vmatpush1.bf16.msra.mxu0 %v2172
    %2188 = vmatprep.subr.bf16.mxu0 0
    %2189 = vmatpush1.bf16.msra.mxu0 %v2173
    %2190 = vmatprep.subr.bf16.mxu0 0
    %2191 = vmatpush1.bf16.msra.mxu0 %v2174
    %2192 = vmatprep.subr.bf16.mxu0 0
    %2193 = vmatpush1.bf16.msra.mxu0 %v2175
    %2194 = vmatprep.subr.bf16.mxu0 0
    %2195 = vmatpush1.bf16.msra.mxu0 %v2176
    %2196 = vmatprep.subr.bf16.mxu0 0
    %2197 = vmatpush1.bf16.msra.mxu0 0
    %2198 = vmatprep.subr.bf16.mxu0 0
    %2199 = vmatpush1.bf16.msra.mxu0 0
    %2200 = vmatprep.subr.bf16.mxu0 0
    %2201 = vmatpush1.bf16.msra.mxu0 0
    %2202 = vmatprep.subr.bf16.mxu0 0
    %2203 = vmatpush1.bf16.msra.mxu0 0
    %2204 = vmatprep.subr.bf16.mxu0 0
    %2205 = vmatpush1.bf16.msra.mxu0 0
    %2206 = vmatprep.subr.bf16.mxu0 0
    %2207 = vmatpush1.bf16.msra.mxu0 0
    %2208 = vmatprep.subr.bf16.mxu0 0
    %2209 = vmatpush1.bf16.msra.mxu0 0
    %2210 = vmatprep.subr.bf16.mxu0 0
    %2211 = vmatpush1.bf16.msra.mxu0 0
    %2212 = vmatprep.mubr.bf16.mxu0 0
    %2213 = vmatmul.mubr.bf16.gmra.mrb[0].mxu0 %v2178
    %v2214 = vpop.f32.mrb[0].mxu0
    %v2215 = vadd.f32 0.0, %v2214
    %v2216 = vpop.f32.mrb[0].mxu0
    %v2217 = vpop.f32.mrb[0].mxu0
    %v2218 = vpop.f32.mrb[0].mxu0
    %2219 = vdwg.mxu0
    %v2220 = vadd.f32 %v2167, %v2215
    %s2221 = scalar_lea.vmem [#allocation2], 1408
    %v2222 = vld [vmem:[%s2221] sm:$0xff]
    %v2223 = vld [vmem:[%s2221 + $0x8] sm:$0xff]
    %v2224 = vld [vmem:[%s2221 + $0x10] sm:$0xff]
    %v2225 = vld [vmem:[%s2221 + $0x18] sm:$0xff]
    %v2226 = vld [vmem:[%s2221 + $0x20] sm:$0xff]
    %v2227 = vld [vmem:[%s2221 + $0x28] sm:$0xff]
    %v2228 = vld [vmem:[%s2221 + $0x30] sm:$0xff]
    %v2229 = vld [vmem:[%s2221 + $0x38] sm:$0xff]
    %v2230 = vrot.slane %v2117, 2
    %2232 = vmatprep.subr.bf16.mxu0 0
    %2233 = vmatpush1.bf16.msra.mxu0 %v2222
    %2234 = vmatprep.subr.bf16.mxu0 0
    %2235 = vmatpush1.bf16.msra.mxu0 %v2223
    %2236 = vmatprep.subr.bf16.mxu0 0
    %2237 = vmatpush1.bf16.msra.mxu0 %v2224
    %2238 = vmatprep.subr.bf16.mxu0 0
    %2239 = vmatpush1.bf16.msra.mxu0 %v2225
    %2240 = vmatprep.subr.bf16.mxu0 0
    %2241 = vmatpush1.bf16.msra.mxu0 %v2226
    %2242 = vmatprep.subr.bf16.mxu0 0
    %2243 = vmatpush1.bf16.msra.mxu0 %v2227
    %2244 = vmatprep.subr.bf16.mxu0 0
    %2245 = vmatpush1.bf16.msra.mxu0 %v2228
    %2246 = vmatprep.subr.bf16.mxu0 0
    %2247 = vmatpush1.bf16.msra.mxu0 %v2229
    %2248 = vmatprep.subr.bf16.mxu0 0
    %2249 = vmatpush1.bf16.msra.mxu0 0
    %2250 = vmatprep.subr.bf16.mxu0 0
    %2251 = vmatpush1.bf16.msra.mxu0 0
    %2252 = vmatprep.subr.bf16.mxu0 0
    %2253 = vmatpush1.bf16.msra.mxu0 0
    %2254 = vmatprep.subr.bf16.mxu0 0
    %2255 = vmatpush1.bf16.msra.mxu0 0
    %2256 = vmatprep.subr.bf16.mxu0 0
    %2257 = vmatpush1.bf16.msra.mxu0 0
    %2258 = vmatprep.subr.bf16.mxu0 0
    %2259 = vmatpush1.bf16.msra.mxu0 0
    %2260 = vmatprep.subr.bf16.mxu0 0
    %2261 = vmatpush1.bf16.msra.mxu0 0
    %2262 = vmatprep.subr.bf16.mxu0 0
    %2263 = vmatpush1.bf16.msra.mxu0 0
    %2264 = vmatprep.mubr.bf16.mxu0 0
    %2265 = vmatmul.mubr.bf16.gmra.mrb[0].mxu0 %v2230
    %v2266 = vpop.f32.mrb[0].mxu0
    %v2267 = vadd.f32 0.0, %v2266
    %v2268 = vpop.f32.mrb[0].mxu0
    %v2269 = vpop.f32.mrb[0].mxu0
    %v2270 = vpop.f32.mrb[0].mxu0
    %2271 = vdwg.mxu0
    %v2272 = vadd.f32 %v2220, %v2267
    %s2273 = scalar_lea.vmem [#allocation2], 1472
    %v2274 = vld [vmem:[%s2273] sm:$0xff]
    %v2275 = vld [vmem:[%s2273 + $0x8] sm:$0xff]
    %v2276 = vld [vmem:[%s2273 + $0x10] sm:$0xff]
    %v2277 = vld [vmem:[%s2273 + $0x18] sm:$0xff]
    %v2278 = vld [vmem:[%s2273 + $0x20] sm:$0xff]
    %v2279 = vld [vmem:[%s2273 + $0x28] sm:$0xff]
    %v2280 = vld [vmem:[%s2273 + $0x30] sm:$0xff]
    %v2281 = vld [vmem:[%s2273 + $0x38] sm:$0xff]
    %v2282 = vrot.slane %v2117, 3
    %2284 = vmatprep.subr.bf16.mxu0 0
    %2285 = vmatpush1.bf16.msra.mxu0 %v2274
    %2286 = vmatprep.subr.bf16.mxu0 0
    %2287 = vmatpush1.bf16.msra.mxu0 %v2275
    %2288 = vmatprep.subr.bf16.mxu0 0
    %2289 = vmatpush1.bf16.msra.mxu0 %v2276
    %2290 = vmatprep.subr.bf16.mxu0 0
    %2291 = vmatpush1.bf16.msra.mxu0 %v2277
    %2292 = vmatprep.subr.bf16.mxu0 0
    %2293 = vmatpush1.bf16.msra.mxu0 %v2278
    %2294 = vmatprep.subr.bf16.mxu0 0
    %2295 = vmatpush1.bf16.msra.mxu0 %v2279
    %2296 = vmatprep.subr.bf16.mxu0 0
    %2297 = vmatpush1.bf16.msra.mxu0 %v2280
    %2298 = vmatprep.subr.bf16.mxu0 0
    %2299 = vmatpush1.bf16.msra.mxu0 %v2281
    %2300 = vmatprep.subr.bf16.mxu0 0
    %2301 = vmatpush1.bf16.msra.mxu0 0
    %2302 = vmatprep.subr.bf16.mxu0 0
    %2303 = vmatpush1.bf16.msra.mxu0 0
    %2304 = vmatprep.subr.bf16.mxu0 0
    %2305 = vmatpush1.bf16.msra.mxu0 0
    %2306 = vmatprep.subr.bf16.mxu0 0
    %2307 = vmatpush1.bf16.msra.mxu0 0
    %2308 = vmatprep.subr.bf16.mxu0 0
    %2309 = vmatpush1.bf16.msra.mxu0 0
    %2310 = vmatprep.subr.bf16.mxu0 0
    %2311 = vmatpush1.bf16.msra.mxu0 0
    %2312 = vmatprep.subr.bf16.mxu0 0
    %2313 = vmatpush1.bf16.msra.mxu0 0
    %2314 = vmatprep.subr.bf16.mxu0 0
    %2315 = vmatpush1.bf16.msra.mxu0 0
    %2316 = vmatprep.mubr.bf16.mxu0 0
    %2317 = vmatmul.mubr.bf16.gmra.mrb[0].mxu0 %v2282
    %v2318 = vpop.f32.mrb[0].mxu0
    %v2319 = vadd.f32 0.0, %v2318
    %v2320 = vpop.f32.mrb[0].mxu0
    %v2321 = vpop.f32.mrb[0].mxu0
    %v2322 = vpop.f32.mrb[0].mxu0
    %2323 = vdwg.mxu0
    %v2324 = vadd.f32 %v2272, %v2319
    %v2325 = vpack.c.bf16 %v1074, %v1074
    %s2326 = scalar_lea.vmem [#allocation2], 1536
    %v2327 = vld [vmem:[%s2326] sm:$0xff]
    %v2328 = vld [vmem:[%s2326 + $0x8] sm:$0xff]
    %v2329 = vld [vmem:[%s2326 + $0x10] sm:$0xff]
    %v2330 = vld [vmem:[%s2326 + $0x18] sm:$0xff]
    %v2331 = vld [vmem:[%s2326 + $0x20] sm:$0xff]
    %v2332 = vld [vmem:[%s2326 + $0x28] sm:$0xff]
    %v2333 = vld [vmem:[%s2326 + $0x30] sm:$0xff]
    %v2334 = vld [vmem:[%s2326 + $0x38] sm:$0xff]
    %2335 = vmatprep.subr.bf16.mxu0 0
    %2336 = vmatpush1.bf16.msra.mxu0 %v2327
    %2337 = vmatprep.subr.bf16.mxu0 0
    %2338 = vmatpush1.bf16.msra.mxu0 %v2328
    %2339 = vmatprep.subr.bf16.mxu0 0
    %2340 = vmatpush1.bf16.msra.mxu0 %v2329
    %2341 = vmatprep.subr.bf16.mxu0 0
    %2342 = vmatpush1.bf16.msra.mxu0 %v2330
    %2343 = vmatprep.subr.bf16.mxu0 0
    %2344 = vmatpush1.bf16.msra.mxu0 %v2331
    %2345 = vmatprep.subr.bf16.mxu0 0
    %2346 = vmatpush1.bf16.msra.mxu0 %v2332
    %2347 = vmatprep.subr.bf16.mxu0 0
    %2348 = vmatpush1.bf16.msra.mxu0 %v2333
    %2349 = vmatprep.subr.bf16.mxu0 0
    %2350 = vmatpush1.bf16.msra.mxu0 %v2334
    %2351 = vmatprep.subr.bf16.mxu0 0
    %2352 = vmatpush1.bf16.msra.mxu0 0
    %2353 = vmatprep.subr.bf16.mxu0 0
    %2354 = vmatpush1.bf16.msra.mxu0 0
    %2355 = vmatprep.subr.bf16.mxu0 0
    %2356 = vmatpush1.bf16.msra.mxu0 0
    %2357 = vmatprep.subr.bf16.mxu0 0
    %2358 = vmatpush1.bf16.msra.mxu0 0
    %2359 = vmatprep.subr.bf16.mxu0 0
    %2360 = vmatpush1.bf16.msra.mxu0 0
    %2361 = vmatprep.subr.bf16.mxu0 0
    %2362 = vmatpush1.bf16.msra.mxu0 0
    %2363 = vmatprep.subr.bf16.mxu0 0
    %2364 = vmatpush1.bf16.msra.mxu0 0
    %2365 = vmatprep.subr.bf16.mxu0 0
    %2366 = vmatpush1.bf16.msra.mxu0 0
    %2367 = vmatprep.mubr.bf16.mxu0 0
    %2368 = vmatmul.mubr.bf16.gmra.mrb[0].mxu0 %v2325
    %v2369 = vpop.f32.mrb[0].mxu0
    %v2370 = vadd.f32 0.0, %v2369
    %v2371 = vpop.f32.mrb[0].mxu0
    %v2372 = vpop.f32.mrb[0].mxu0
    %v2373 = vpop.f32.mrb[0].mxu0
    %2374 = vdwg.mxu0
    %v2375 = vadd.f32 %v2324, %v2370
    %v2376 = vld [vmem:[%s3] sm:$0x1]
    %v2377 = vlaneseq
    %v2378 = vshrl.u32 %v2377, 7
    %v2379 = vsub.s32 0, %v2378
    %v2380 = vrot.slane %v2376, %v2379
    %v2381 = vadd.f32 %v2375, %v2380
    %v2382 = vmax.f32 %v2381, 0.0
    %v2383 = vpack.c.bf16 %v2382, %v2382
    %v2384 = vld [vmem:[%s4] sm:$0xf]
    %v2385 = vld [vmem:[%s4 + $0x4] sm:$0xf]
    %v2386 = vld [vmem:[%s4 + $0x8] sm:$0xf]
    %v2387 = vld [vmem:[%s4 + $0xc] sm:$0xf]
    %v2388 = vld [vmem:[%s4 + $0x10] sm:$0xf]
    %v2389 = vld [vmem:[%s4 + $0x14] sm:$0xf]
    %v2390 = vld [vmem:[%s4 + $0x18] sm:$0xf]
    %v2391 = vld [vmem:[%s4 + $0x1c] sm:$0xf]
    %v2392 = vld [vmem:[%s4 + $0x20] sm:$0xf]
    %v2393 = vld [vmem:[%s4 + $0x24] sm:$0xf]
    %v2394 = vld [vmem:[%s4 + $0x28] sm:$0xf]
    %v2395 = vld [vmem:[%s4 + $0x2c] sm:$0xf]
    %v2396 = vld [vmem:[%s4 + $0x30] sm:$0xf]
    %v2397 = vld [vmem:[%s4 + $0x34] sm:$0xf]
    %v2398 = vld [vmem:[%s4 + $0x38] sm:$0xf]
    %v2399 = vld [vmem:[%s4 + $0x3c] sm:$0xf]
    %v2400 = vld [vmem:[%s3 + $0x1] sm:$0x1]
    %v2401 = vlaneseq
    %v2402 = vshrl.u32 %v2401, 7
    %v2403 = vsub.s32 0, %v2402
    %v2404 = vrot.slane %v2400, %v2403
    %v2421 = vunpack.c.l.b16 %v2384
    %v2422 = vunpack.c.l.b16 %v2385
    %v2423 = vunpack.c.l.b16 %v2386
    %v2424 = vunpack.c.l.b16 %v2387
    %v2425 = vunpack.c.l.b16 %v2388
    %v2426 = vunpack.c.l.b16 %v2389
    %v2427 = vunpack.c.l.b16 %v2390
    %v2428 = vunpack.c.l.b16 %v2391
    %v2429 = vunpack.c.l.b16 %v2392
    %v2430 = vunpack.c.l.b16 %v2393
    %v2431 = vunpack.c.l.b16 %v2394
    %v2432 = vunpack.c.l.b16 %v2395
    %v2433 = vunpack.c.l.b16 %v2396
    %v2434 = vunpack.c.l.b16 %v2397
    %v2435 = vunpack.c.l.b16 %v2398
    %v2436 = vunpack.c.l.b16 %v2399
    %v2437 = vpack.c.b16 %v2422, %v2421
    %v2438 = vpack.c.b16 %v2424, %v2423
    %v2439 = vpack.c.b16 %v2426, %v2425
    %v2440 = vpack.c.b16 %v2428, %v2427
    %v2441 = vpack.c.b16 %v2430, %v2429
    %v2442 = vpack.c.b16 %v2432, %v2431
    %v2443 = vpack.c.b16 %v2434, %v2433
    %v2444 = vpack.c.b16 %v2436, %v2435
    %2453 = vmatprep.subr.bf16.mxu0 0
    %2454 = vmatpush1.bf16.msra.mxu0 %v2437
    %2455 = vmatprep.subr.bf16.mxu0 0
    %2456 = vmatpush1.bf16.msra.mxu0 %v2438
    %2457 = vmatprep.subr.bf16.mxu0 0
    %2458 = vmatpush1.bf16.msra.mxu0 %v2439
    %2459 = vmatprep.subr.bf16.mxu0 0
    %2460 = vmatpush1.bf16.msra.mxu0 %v2440
    %2461 = vmatprep.subr.bf16.mxu0 0
    %2462 = vmatpush1.bf16.msra.mxu0 %v2441
    %2463 = vmatprep.subr.bf16.mxu0 0
    %2464 = vmatpush1.bf16.msra.mxu0 %v2442
    %2465 = vmatprep.subr.bf16.mxu0 0
    %2466 = vmatpush1.bf16.msra.mxu0 %v2443
    %2467 = vmatprep.subr.bf16.mxu0 0
    %2468 = vmatpush1.bf16.msra.mxu0 %v2444
    %2469 = vmatprep.subr.bf16.mxu0 0
    %2470 = vmatpush1.bf16.msra.mxu0 0
    %2471 = vmatprep.subr.bf16.mxu0 0
    %2472 = vmatpush1.bf16.msra.mxu0 0
    %2473 = vmatprep.subr.bf16.mxu0 0
    %2474 = vmatpush1.bf16.msra.mxu0 0
    %2475 = vmatprep.subr.bf16.mxu0 0
    %2476 = vmatpush1.bf16.msra.mxu0 0
    %2477 = vmatprep.subr.bf16.mxu0 0
    %2478 = vmatpush1.bf16.msra.mxu0 0
    %2479 = vmatprep.subr.bf16.mxu0 0
    %2480 = vmatpush1.bf16.msra.mxu0 0
    %2481 = vmatprep.subr.bf16.mxu0 0
    %2482 = vmatpush1.bf16.msra.mxu0 0
    %2483 = vmatprep.subr.bf16.mxu0 0
    %2484 = vmatpush1.bf16.msra.mxu0 0
    %2485 = vmatprep.mubr.bf16.mxu0 0
    %2486 = vmatmul.mubr.bf16.gmra.mrb[0].mxu0 %v2383
    %v2487 = vpop.f32.mrb[0].mxu0
    %v2488 = vadd.f32 %v2404, %v2487
    %v2489 = vpop.f32.mrb[0].mxu0
    %v2490 = vpop.f32.mrb[0].mxu0
    %v2491 = vpop.f32.mrb[0].mxu0
    %2492 = vdwg.mxu0
    %v2493 = vmax.f32 %v2488, 0.0
    %v2494 = vpack.c.bf16 %v2493, %v2493
    %s2495 = scalar_lea.vmem %s4, 64
    %v2496 = vld [vmem:[%s2495] sm:$0xf]
    %v2497 = vld [vmem:[%s2495 + $0x4] sm:$0xf]
    %v2498 = vld [vmem:[%s2495 + $0x8] sm:$0xf]
    %v2499 = vld [vmem:[%s2495 + $0xc] sm:$0xf]
    %v2500 = vld [vmem:[%s2495 + $0x10] sm:$0xf]
    %v2501 = vld [vmem:[%s2495 + $0x14] sm:$0xf]
    %v2502 = vld [vmem:[%s2495 + $0x18] sm:$0xf]
    %v2503 = vld [vmem:[%s2495 + $0x1c] sm:$0xf]
    %v2504 = vld [vmem:[%s2495 + $0x20] sm:$0xf]
    %v2505 = vld [vmem:[%s2495 + $0x24] sm:$0xf]
    %v2506 = vld [vmem:[%s2495 + $0x28] sm:$0xf]
    %v2507 = vld [vmem:[%s2495 + $0x2c] sm:$0xf]
    %v2508 = vld [vmem:[%s2495 + $0x30] sm:$0xf]
    %v2509 = vld [vmem:[%s2495 + $0x34] sm:$0xf]
    %v2510 = vld [vmem:[%s2495 + $0x38] sm:$0xf]
    %v2511 = vld [vmem:[%s2495 + $0x3c] sm:$0xf]
    %v2512 = vld [vmem:[%s3 + $0x2] sm:$0x1]
    %v2513 = vlaneseq
    %v2514 = vshrl.u32 %v2513, 7
    %v2515 = vsub.s32 0, %v2514
    %v2516 = vrot.slane %v2512, %v2515
    %v2533 = vunpack.c.l.b16 %v2496
    %v2534 = vunpack.c.l.b16 %v2497
    %v2535 = vunpack.c.l.b16 %v2498
    %v2536 = vunpack.c.l.b16 %v2499
    %v2537 = vunpack.c.l.b16 %v2500
    %v2538 = vunpack.c.l.b16 %v2501
    %v2539 = vunpack.c.l.b16 %v2502
    %v2540 = vunpack.c.l.b16 %v2503
    %v2541 = vunpack.c.l.b16 %v2504
    %v2542 = vunpack.c.l.b16 %v2505
    %v2543 = vunpack.c.l.b16 %v2506
    %v2544 = vunpack.c.l.b16 %v2507
    %v2545 = vunpack.c.l.b16 %v2508
    %v2546 = vunpack.c.l.b16 %v2509
    %v2547 = vunpack.c.l.b16 %v2510
    %v2548 = vunpack.c.l.b16 %v2511
    %v2549 = vpack.c.b16 %v2534, %v2533
    %v2550 = vpack.c.b16 %v2536, %v2535
    %v2551 = vpack.c.b16 %v2538, %v2537
    %v2552 = vpack.c.b16 %v2540, %v2539
    %v2553 = vpack.c.b16 %v2542, %v2541
    %v2554 = vpack.c.b16 %v2544, %v2543
    %v2555 = vpack.c.b16 %v2546, %v2545
    %v2556 = vpack.c.b16 %v2548, %v2547
    %2565 = vmatprep.subr.bf16.mxu0 0
    %2566 = vmatpush1.bf16.msra.mxu0 %v2549
    %2567 = vmatprep.subr.bf16.mxu0 0
    %2568 = vmatpush1.bf16.msra.mxu0 %v2550
    %2569 = vmatprep.subr.bf16.mxu0 0
    %2570 = vmatpush1.bf16.msra.mxu0 %v2551
    %2571 = vmatprep.subr.bf16.mxu0 0
    %2572 = vmatpush1.bf16.msra.mxu0 %v2552
    %2573 = vmatprep.subr.bf16.mxu0 0
    %2574 = vmatpush1.bf16.msra.mxu0 %v2553
    %2575 = vmatprep.subr.bf16.mxu0 0
    %2576 = vmatpush1.bf16.msra.mxu0 %v2554
    %2577 = vmatprep.subr.bf16.mxu0 0
    %2578 = vmatpush1.bf16.msra.mxu0 %v2555
    %2579 = vmatprep.subr.bf16.mxu0 0
    %2580 = vmatpush1.bf16.msra.mxu0 %v2556
    %2581 = vmatprep.subr.bf16.mxu0 0
    %2582 = vmatpush1.bf16.msra.mxu0 0
    %2583 = vmatprep.subr.bf16.mxu0 0
    %2584 = vmatpush1.bf16.msra.mxu0 0
    %2585 = vmatprep.subr.bf16.mxu0 0
    %2586 = vmatpush1.bf16.msra.mxu0 0
    %2587 = vmatprep.subr.bf16.mxu0 0
    %2588 = vmatpush1.bf16.msra.mxu0 0
    %2589 = vmatprep.subr.bf16.mxu0 0
    %2590 = vmatpush1.bf16.msra.mxu0 0
    %2591 = vmatprep.subr.bf16.mxu0 0
    %2592 = vmatpush1.bf16.msra.mxu0 0
    %2593 = vmatprep.subr.bf16.mxu0 0
    %2594 = vmatpush1.bf16.msra.mxu0 0
    %2595 = vmatprep.subr.bf16.mxu0 0
    %2596 = vmatpush1.bf16.msra.mxu0 0
    %2597 = vmatprep.mubr.bf16.mxu0 0
    %2598 = vmatmul.mubr.bf16.gmra.mrb[0].mxu0 %v2494
    %v2599 = vpop.f32.mrb[0].mxu0
    %v2600 = vadd.f32 %v2516, %v2599
    %v2601 = vpop.f32.mrb[0].mxu0
    %v2602 = vpop.f32.mrb[0].mxu0
    %v2603 = vpop.f32.mrb[0].mxu0
    %2604 = vdwg.mxu0
    %2605 = vst [vmem:[#allocation4] sm:$0x3] %v2600
    // Predicated region
    $region56: #{lenet5_forward.3} parent=1 // pred_check
      _
    $region57: #{lenet5_forward.3} parent=1 // pred_check_branch
      %2607 = sbr.rel (0) target = $region59
    $region58: #{lenet5_forward.3} parent=1 // pred_region
      %s2609 = ssub.s32 32, 32
      %2610 = vsyncadd [#allocation5], %s2609
      %s2612 = sshll.u32 [#allocation4], 4
      %s2613 = int_to_ptr.vmem [resolvable:$true] %s2612
      %2615 = dma.vmem_to_hbm [thread:$0]  %s2613, 32, %s6, [#allocation5]
    $region59: #{lenet5_forward.3} parent=1 // pred_fallthru
      _
    // Predicated region
    $region60: #{lenet5_forward.3} parent=1 // pred_check
      _
    $region61: #{lenet5_forward.3} parent=1 // pred_check_branch
      %2617 = sbr.rel (0) target = $region63
    $region62: #{lenet5_forward.3} parent=1 // pred_region
      %2618 = dma.done [#allocation5], 32
    $region63: #{lenet5_forward.3} parent=1 // pred_fallthru
      _
    %2619 = vsyncpa [#allocation5], 1
  %2620 = vsyncmov [#allocation3]
  %s2621 = vpop.sfrf %2620
  %p2622 = scmp.eq.s32.totalorder %s2621, 0
  %p2623 = pneg %p2622
  %2625 = shalt.err (%p2623)

</llo_original>
